<compile_context>
chip_gen: v5e
topology: v5e:2x2
jax: 0.10.0
libtpu: 0.0.40
codegen_flags: <defaults>
</compile_context>

<pallas_src>
import functools

import jax
import jax.numpy as jnp
from jax.experimental import pallas as pl
from jax.experimental.pallas import tpu as pltpu

BN_EPS = 1e-5  # PyTorch BatchNorm2d default eps


# ----------------------------- Pallas kernels ------------------------------ #

def _make_deconv_bn_relu_kernel(total_m):
    """Fused ConvTranspose-GEMM + BatchNorm(train-mode batch stats) + ReLU.

    Grid is (phase, m_tile), phase outermost:
      phase 0: GEMM tile -> accumulate per-channel sum / sum-of-squares into
               persistent VMEM scratch (o_ref not written; its writeback is
               dead data that phase 1 overwrites).
      phase 1: GEMM tile again -> normalize with finalized stats, scale,
               shift, ReLU, store (lane-dense, Cpad = multiple of 128).
    """
    inv_n = 1.0 / float(total_m)

    def kernel(p_ref, w_ref, g_ref, b_ref, o_ref, sum_ref, ssq_ref):
        phase = pl.program_id(0)
        m_idx = pl.program_id(1)

        # bf16 x bf16 -> f32 accumulation on the MXU.
        y = jnp.dot(p_ref[...], w_ref[...], preferred_element_type=jnp.float32)

        @pl.when(jnp.logical_and(phase == 0, m_idx == 0))
        def _():
            sum_ref[...] = jnp.zeros_like(sum_ref)
            ssq_ref[...] = jnp.zeros_like(ssq_ref)

        @pl.when(phase == 0)
        def _():
            # Accumulate batch statistics across all M tiles (scratch persists
            # across grid iterations).
            sum_ref[...] += jnp.sum(y, axis=0, keepdims=True)
            ssq_ref[...] += jnp.sum(y * y, axis=0, keepdims=True)

        @pl.when(phase == 1)
        def _():
            mean = sum_ref[...] * inv_n
            var = jnp.maximum(ssq_ref[...] * inv_n - mean * mean, 0.0)  # biased
            inv_std = jax.lax.rsqrt(var + BN_EPS)
            y_hat = (y - mean) * inv_std
            o_ref[...] = jnp.maximum(
                y_hat * g_ref[...] + b_ref[...], 0.0).astype(o_ref.dtype)

    return kernel


def _deconv_tanh_kernel(p_ref, w_ref, o_ref):
    y = jnp.dot(p_ref[...], w_ref[...], preferred_element_type=jnp.float32)
    o_ref[...] = jnp.tanh(y)


# ------------------------------ JAX glue ----------------------------------- #

def _round_up(x, m):
    return ((x + m - 1) // m) * m


def _choose_tm(m, target=256):
    """Largest row-tile <= target that divides M and is a multiple of 8."""
    if m <= target or m % 8 != 0:
        return m
    tm = target - target % 8
    while tm > 8 and m % tm != 0:
        tm -= 8
    return tm if m % tm == 0 else m


def _im2col_deconv_nhwc(x, K, stride, pad):
    """ConvTranspose2d as: zero-insert upsample -> border pad -> tap gather.

    x: (B, H, W, Cin) NHWC.  Returns (patches (B*OH*OW, K*K*Cin), OH, OW).
    Patch-column order is (kh, kw, ci), matching _deconv_weight_matrix rows.
    """
    B, H, W, Cin = x.shape
    OH = (H - 1) * stride - 2 * pad + K
    OW = (W - 1) * stride - 2 * pad + K
    if stride > 1:
        up_h = (H - 1) * stride + 1
        up_w = (W - 1) * stride + 1
        x_up = jnp.zeros((B, up_h, up_w, Cin), x.dtype)
        x_up = x_up.at[:, ::stride, ::stride, :].set(x)
    else:
        x_up = x
    p = K - 1 - pad
    x_pad = jnp.pad(x_up, ((0, 0), (p, p), (p, p), (0, 0)))
    cols = [x_pad[:, kh:kh + OH, kw:kw + OW, :]
            for kh in range(K) for kw in range(K)]
    patches = jnp.stack(cols, axis=3)                     # (B, OH, OW, K*K, Cin)
    return patches.reshape(B * OH * OW, K * K * Cin), OH, OW


def _deconv_weight_matrix(w):
    """PyTorch ConvTranspose2d weight (Cin, Cout, K, K) -> (K*K*Cin, Cout) GEMM
    matrix with spatial flip (transposed conv == conv with flipped kernel);
    rows ordered (kh, kw, ci) to match _im2col_deconv_nhwc columns."""
    Cin, Cout, K, _ = w.shape
    w_flip = w[:, :, ::-1, ::-1]
    return w_flip.transpose(2, 3, 0, 1).reshape(K * K * Cin, Cout)


_MOSAIC_SEQ = pltpu.CompilerParams(
    dimension_semantics=("arbitrary", "arbitrary"),   # cross-tile BN stats
    vmem_limit_bytes=32 * 1024 * 1024,
)
_MOSAIC_PAR = pltpu.CompilerParams(
    dimension_semantics=("parallel",),                # megacore-friendly
    vmem_limit_bytes=32 * 1024 * 1024,
)


def deconv_bn_relu(h, w_pad, g_pad, b_pad, cout, K, stride, pad):
    """Fused ConvTranspose2d(bias=False) + BatchNorm2d + ReLU.  NHWC -> NHWC."""
    B = h.shape[0]
    patches, OH, OW = _im2col_deconv_nhwc(h, K, stride, pad)   # bf16 (M, Kdim)
    M, Kdim = patches.shape
    cpad = w_pad.shape[1]
    tm = _choose_tm(M)
    n_m = M // tm

    out = pl.pallas_call(
        _make_deconv_bn_relu_kernel(M),
        out_shape=jax.ShapeDtypeStruct((M, cpad), jnp.bfloat16),
        grid_spec=pltpu.PrefetchScalarGridSpec(
            num_scalar_prefetch=0,
            grid=(2, n_m),                            # (phase, m_tile)
            in_specs=[
                pl.BlockSpec((tm, Kdim), lambda ph, m: (m, 0)),
                pl.BlockSpec((Kdim, cpad), lambda ph, m: (0, 0)),
                pl.BlockSpec((1, cpad), lambda ph, m: (0, 0)),
                pl.BlockSpec((1, cpad), lambda ph, m: (0, 0)),
            ],
            out_specs=pl.BlockSpec((tm, cpad), lambda ph, m: (m, 0)),
            scratch_shapes=[pltpu.VMEM((1, cpad), jnp.float32),
                            pltpu.VMEM((1, cpad), jnp.float32)],
        ),
        compiler_params=_MOSAIC_SEQ,
    )(patches, w_pad, g_pad, b_pad)
    return out.reshape(B, OH, OW, cpad)[..., :cout]   # NHWC, real channels


def deconv_tanh(h, w_pad, cout, K, stride, pad):
    """Fused ConvTranspose2d(bias=False) + Tanh.  NHWC bf16 -> NHWC f32."""
    B = h.shape[0]
    patches, OH, OW = _im2col_deconv_nhwc(h, K, stride, pad)
    M, Kdim = patches.shape
    cpad = w_pad.shape[1]
    tm = _choose_tm(M)
    n_m = M // tm

    out = pl.pallas_call(
        _deconv_tanh_kernel,
        out_shape=jax.ShapeDtypeStruct((M, cpad), jnp.float32),
        grid_spec=pltpu.PrefetchScalarGridSpec(
            num_scalar_prefetch=0,
            grid=(n_m,),
            in_specs=[pl.BlockSpec((tm, Kdim), lambda m: (m, 0)),
                      pl.BlockSpec((Kdim, cpad), lambda m: (0, 0))],
            out_specs=pl.BlockSpec((tm, cpad), lambda m: (m, 0)),
        ),
        compiler_params=_MOSAIC_PAR,
    )(patches, w_pad)
    return out.reshape(B, OH, OW, cpad)[..., :cout]


# ---------------------------- Generator module ----------------------------- #

def init_generator_params(key, nz, ndim, nclasses, ngf):
    """Random parameters matching the PyTorch module's layer shapes."""
    c_in = nz + ndim + nclasses + 1
    layer_dims = [
        (c_in,    ngf * 8, 2),   # 1x1   -> 2x2   (k=2, s=1, p=0)
        (ngf * 8, ngf * 4, 4),   # 2x2   -> 4x4   (k=4, s=2, p=1)
        (ngf * 4, ngf * 2, 4),   # 4x4   -> 8x8
        (ngf * 2, ngf,     4),   # 8x8   -> 16x16
        (ngf,     3,       4),   # 16x16 -> 32x32
    ]
    params = []
    for i, (ci, co, k) in enumerate(layer_dims):
        key, wk, gk, bk = jax.random.split(key, 4)
        w = 0.02 * jax.random.normal(wk, (ci, co, k, k), jnp.float32)
        if i < 4:
            gamma = 1.0 + 0.1 * jax.random.normal(gk, (co,), jnp.float32)
            beta = 0.1 * jax.random.normal(bk, (co,), jnp.float32)
            params.append((w, gamma, beta))
        else:
            params.append((w,))
    return params


def prepare_params(params):
    """One-time preprocessing (hoisted out of the forward path): GEMM weight
    matrices, Cout zero-padded to a multiple of 128 (lane-dense output), MXU
    operands cast to bf16, gamma/beta padded to the same width (f32)."""
    prepared = []
    for layer in params:
        w = layer[0]
        w_mat = _deconv_weight_matrix(w)
        kdim, cout = w_mat.shape
        cpad = _round_up(cout, 128)
        w_pad = jnp.zeros((kdim, cpad), jnp.float32).at[:, :cout].set(w_mat)
        w_pad = w_pad.astype(jnp.bfloat16)
        if len(layer) == 3:
            _, gamma, beta = layer
            g_pad = jnp.ones((1, cpad), jnp.float32).at[0, :cout].set(gamma)
            b_pad = jnp.zeros((1, cpad), jnp.float32).at[0, :cout].set(beta)
            prepared.append((w_pad, g_pad, b_pad))
        else:
            prepared.append((w_pad,))
    return prepared


def generator_forward(params, x, noise_key, *, nz, ndim, nclasses, ngf):
    """Mirrors Generator.forward: reshape input, sample noise, concat, run the
    ConvTranspose stack.  (The original forward calls self.main; the Sequential
    is defined as self.block in __init__ — that stack is what we run.)"""
    B = x.shape[0]
    x = x.reshape(B, ndim + nclasses + 1)
    noise = jax.random.normal(noise_key, (B, nz), jnp.float32)
    h = jnp.concatenate([x, noise], axis=1)            # channel order [input, noise]
    h = h.reshape(B, 1, 1, nz + ndim + nclasses + 1).astype(jnp.bfloat16)  # NHWC

    conv_cfg = [(2, 1, 0), (4, 2, 1), (4, 2, 1), (4, 2, 1), (4, 2, 1)]
    couts = (ngf * 8, ngf * 4, ngf * 2, ngf, 3)
    for i in range(4):
        w_pad, g_pad, b_pad = params[i]
        k, s, p = conv_cfg[i]
        h = deconv_bn_relu(h, w_pad, g_pad, b_pad, couts[i], k, s, p)
    (w_last,) = params[4]
    k, s, p = conv_cfg[4]
    out = deconv_tanh(h, w_last, couts[4], k, s, p)     # (B, 32, 32, 3) NHWC f32
    return out.transpose(0, 3, 1, 2)                    # NCHW, values in (-1, 1)


# --------------------------------- main ------------------------------------ #

if __name__ == "__main__":
    ndim, nz, ngf, nclasses = 4, 8, 8, 3
    B = 2

    key = jax.random.PRNGKey(0)
    kp, kx, kn = jax.random.split(key, 3)

    raw_params = init_generator_params(kp, nz, ndim, nclasses, ngf)
    params = prepare_params(raw_params)          # one-time weight preprocessing
    x = jax.random.normal(kx, (B, ndim + nclasses + 1), jnp.float32)

    fwd = jax.jit(functools.partial(
        generator_forward, nz=nz, ndim=ndim, nclasses=nclasses, ngf=ngf))
    out = jax.block_until_ready(fwd(params, x, kn))

    assert out.shape == (B, 3, 32, 32), out.shape
    assert bool(jnp.all(jnp.isfinite(out)))
    assert bool(jnp.all(jnp.abs(out) <= 1.0 + 1e-6))
    print("KERNEL_OK")
</pallas_src>

<mosaic_0001>
module attributes {stable_mosaic.version = 11 : i64} {
  func.func @kernel(%arg0: i32, %arg1: i32, %arg2: memref<8x64xbf16, #tpu.memory_space<vmem>>, %arg3: memref<64x128xbf16, #tpu.memory_space<vmem>>, %arg4: memref<1x128xf32, #tpu.memory_space<vmem>>, %arg5: memref<1x128xf32, #tpu.memory_space<vmem>>, %arg6: memref<8x128xbf16, #tpu.memory_space<vmem>>, %arg7: memref<1x128xf32, #tpu.memory_space<vmem>>, %arg8: memref<1x128xf32, #tpu.memory_space<vmem>>) attributes {dimension_semantics = [#tpu.dimension_semantics<arbitrary>, #tpu.dimension_semantics<arbitrary>], iteration_bounds = array<i64: 2, 1>, scalar_prefetch = 0 : i64, scratch_operands = 2 : i64, tpu.core_type = #tpu.core_type<tc>, window_params = [{transform_indices = @transform_0, window_bounds = array<i64: 8, 64>}, {pipeline_mode = #tpu.pipeline_mode<synchronous>, transform_indices = @transform_1, window_bounds = array<i64: 64, 128>}, {pipeline_mode = #tpu.pipeline_mode<synchronous>, transform_indices = @transform_2, window_bounds = array<i64: 1, 128>}, {pipeline_mode = #tpu.pipeline_mode<synchronous>, transform_indices = @transform_3, window_bounds = array<i64: 1, 128>}, {transform_indices = @transform_4, window_bounds = array<i64: 8, 128>}]} {
    %c0 = arith.constant 0 : index
    %c0_0 = arith.constant 0 : index
    %0 = vector.load %arg2[%c0, %c0_0] : memref<8x64xbf16, #tpu.memory_space<vmem>>, vector<8x64xbf16>
    %c0_1 = arith.constant 0 : index
    %c0_2 = arith.constant 0 : index
    %1 = vector.load %arg3[%c0_1, %c0_2] : memref<64x128xbf16, #tpu.memory_space<vmem>>, vector<64x128xbf16>
    %cst = arith.constant dense<0.000000e+00> : vector<8x128xf32>
    %2 = tpu.matmul %0, %1, %cst {dimension_numbers = #tpu.dot_dimension_numbers<[1], [0], [0], [1], [0, 0, 1, 1], [], []>} : vector<8x64xbf16>, vector<64x128xbf16>, vector<8x128xf32> -> vector<8x128xf32>
    %c0_i32 = arith.constant 0 : i32
    %3 = arith.cmpi eq, %arg0, %c0_i32 : i32
    %c0_i32_3 = arith.constant 0 : i32
    %4 = arith.cmpi eq, %arg1, %c0_i32_3 : i32
    %5 = arith.andi %3, %4 : i1
    %6 = arith.extui %5 : i1 to i32
    %c0_i32_4 = arith.constant 0 : i32
    %7 = arith.cmpi ne, %6, %c0_i32_4 : i32
    scf.if %7 {
      %cst_8 = arith.constant 0.000000e+00 : f32
      %14 = vector.broadcast %cst_8 : f32 to vector<1x128xf32>
      %c0_9 = arith.constant 0 : index
      %c0_10 = arith.constant 0 : index
      %15 = vector.load %arg7[%c0_9, %c0_10] : memref<1x128xf32, #tpu.memory_space<vmem>>, vector<1x128xf32>
      tpu.vector_store %arg7[%c0_9, %c0_10], %14 {strides = array<i32>} : memref<1x128xf32, #tpu.memory_space<vmem>>, vector<1x128xf32>,
      %cst_11 = arith.constant 0.000000e+00 : f32
      %16 = vector.broadcast %cst_11 : f32 to vector<1x128xf32>
      %c0_12 = arith.constant 0 : index
      %c0_13 = arith.constant 0 : index
      %17 = vector.load %arg8[%c0_12, %c0_13] : memref<1x128xf32, #tpu.memory_space<vmem>>, vector<1x128xf32>
      tpu.vector_store %arg8[%c0_12, %c0_13], %16 {strides = array<i32>} : memref<1x128xf32, #tpu.memory_space<vmem>>, vector<1x128xf32>,
    } else {
    }
    %c0_i32_5 = arith.constant 0 : i32
    %8 = arith.cmpi eq, %arg0, %c0_i32_5 : i32
    %9 = arith.extui %8 : i1 to i32
    %c0_i32_6 = arith.constant 0 : i32
    %10 = arith.cmpi ne, %9, %c0_i32_6 : i32
    scf.if %10 {
      %c0_8 = arith.constant 0 : index
      %c0_9 = arith.constant 0 : index
      %14 = vector.load %arg7[%c0_8, %c0_9] : memref<1x128xf32, #tpu.memory_space<vmem>>, vector<1x128xf32>
      %cst_10 = arith.constant dense<0.000000e+00> : vector<128xf32>
      %15 = vector.multi_reduction <add>, %2, %cst_10 [0] : vector<8x128xf32> to vector<128xf32>
      %16 = vector.shape_cast %15 : vector<128xf32> to vector<1x128xf32>
      %17 = arith.addf %14, %16 : vector<1x128xf32>
      %c0_11 = arith.constant 0 : index
      %c0_12 = arith.constant 0 : index
      %18 = vector.load %arg7[%c0_11, %c0_12] : memref<1x128xf32, #tpu.memory_space<vmem>>, vector<1x128xf32>
      tpu.vector_store %arg7[%c0_11, %c0_12], %17 {strides = array<i32>} : memref<1x128xf32, #tpu.memory_space<vmem>>, vector<1x128xf32>,
      %c0_13 = arith.constant 0 : index
      %c0_14 = arith.constant 0 : index
      %19 = vector.load %arg8[%c0_13, %c0_14] : memref<1x128xf32, #tpu.memory_space<vmem>>, vector<1x128xf32>
      %20 = arith.mulf %2, %2 : vector<8x128xf32>
      %cst_15 = arith.constant dense<0.000000e+00> : vector<128xf32>
      %21 = vector.multi_reduction <add>, %20, %cst_15 [0] : vector<8x128xf32> to vector<128xf32>
      %22 = vector.shape_cast %21 : vector<128xf32> to vector<1x128xf32>
      %23 = arith.addf %19, %22 : vector<1x128xf32>
      %c0_16 = arith.constant 0 : index
      %c0_17 = arith.constant 0 : index
      %24 = vector.load %arg8[%c0_16, %c0_17] : memref<1x128xf32, #tpu.memory_space<vmem>>, vector<1x128xf32>
      tpu.vector_store %arg8[%c0_16, %c0_17], %23 {strides = array<i32>} : memref<1x128xf32, #tpu.memory_space<vmem>>, vector<1x128xf32>,
    } else {
    }
    %c1_i32 = arith.constant 1 : i32
    %11 = arith.cmpi eq, %arg0, %c1_i32 : i32
    %12 = arith.extui %11 : i1 to i32
    %c0_i32_7 = arith.constant 0 : i32
    %13 = arith.cmpi ne, %12, %c0_i32_7 : i32
    scf.if %13 {
      %c0_8 = arith.constant 0 : index
      %c0_9 = arith.constant 0 : index
      %14 = vector.load %arg7[%c0_8, %c0_9] : memref<1x128xf32, #tpu.memory_space<vmem>>, vector<1x128xf32>
      %cst_10 = arith.constant 1.250000e-01 : f32
      %15 = vector.broadcast %cst_10 : f32 to vector<1x128xf32>
      %16 = arith.mulf %14, %15 : vector<1x128xf32>
      %c0_11 = arith.constant 0 : index
      %c0_12 = arith.constant 0 : index
      %17 = vector.load %arg8[%c0_11, %c0_12] : memref<1x128xf32, #tpu.memory_space<vmem>>, vector<1x128xf32>
      %cst_13 = arith.constant 1.250000e-01 : f32
      %18 = vector.broadcast %cst_13 : f32 to vector<1x128xf32>
      %19 = arith.mulf %17, %18 : vector<1x128xf32>
      %20 = arith.mulf %16, %16 : vector<1x128xf32>
      %21 = arith.subf %19, %20 : vector<1x128xf32>
      %cst_14 = arith.constant 0.000000e+00 : f32
      %22 = vector.broadcast %cst_14 : f32 to vector<1x128xf32>
      %23 = arith.maximumf %21, %22 : vector<1x128xf32>
      %cst_15 = arith.constant 9.99999974E-6 : f32
      %24 = vector.broadcast %cst_15 : f32 to vector<1x128xf32>
      %25 = arith.addf %23, %24 : vector<1x128xf32>
      %26 = math.rsqrt %25 : vector<1x128xf32>
      %27 = vector.broadcast %16 : vector<1x128xf32> to vector<8x128xf32>
      %28 = arith.subf %2, %27 : vector<8x128xf32>
      %29 = vector.broadcast %26 : vector<1x128xf32> to vector<8x128xf32>
      %30 = arith.mulf %28, %29 : vector<8x128xf32>
      %c0_16 = arith.constant 0 : index
      %c0_17 = arith.constant 0 : index
      %31 = vector.load %arg4[%c0_16, %c0_17] : memref<1x128xf32, #tpu.memory_space<vmem>>, vector<1x128xf32>
      %32 = vector.broadcast %31 : vector<1x128xf32> to vector<8x128xf32>
      %33 = arith.mulf %30, %32 : vector<8x128xf32>
      %c0_18 = arith.constant 0 : index
      %c0_19 = arith.constant 0 : index
      %34 = vector.load %arg5[%c0_18, %c0_19] : memref<1x128xf32, #tpu.memory_space<vmem>>, vector<1x128xf32>
      %35 = vector.broadcast %34 : vector<1x128xf32> to vector<8x128xf32>
      %36 = arith.addf %33, %35 : vector<8x128xf32>
      %cst_20 = arith.constant 0.000000e+00 : f32
      %37 = vector.broadcast %cst_20 : f32 to vector<8x128xf32>
      %38 = arith.maximumf %36, %37 : vector<8x128xf32>
      %39 = arith.truncf %38 : vector<8x128xf32> to vector<8x128xbf16>
      %c0_21 = arith.constant 0 : index
      %c0_22 = arith.constant 0 : index
      %40 = vector.load %arg6[%c0_21, %c0_22] : memref<8x128xbf16, #tpu.memory_space<vmem>>, vector<8x128xbf16>
      tpu.vector_store %arg6[%c0_21, %c0_22], %39 {strides = array<i32>} : memref<8x128xbf16, #tpu.memory_space<vmem>>, vector<8x128xbf16>,
    } else {
    }
    return
  }
  func.func @transform_0(%arg0: i32, %arg1: i32) -> (i32, i32) {
    %c0_i32 = arith.constant 0 : i32
    %c0_i32_0 = arith.constant 0 : i32
    return %arg1, %c0_i32 : i32, i32
  }
  func.func @transform_1(%arg0: i32, %arg1: i32) -> (i32, i32) {
    %c0_i32 = arith.constant 0 : i32
    %c0_i32_0 = arith.constant 0 : i32
    %c0_i32_1 = arith.constant 0 : i32
    return %c0_i32, %c0_i32_0 : i32, i32
  }
  func.func @transform_2(%arg0: i32, %arg1: i32) -> (i32, i32) {
    %c0_i32 = arith.constant 0 : i32
    %c0_i32_0 = arith.constant 0 : i32
    %c0_i32_1 = arith.constant 0 : i32
    return %c0_i32, %c0_i32_0 : i32, i32
  }
  func.func @transform_3(%arg0: i32, %arg1: i32) -> (i32, i32) {
    %c0_i32 = arith.constant 0 : i32
    %c0_i32_0 = arith.constant 0 : i32
    %c0_i32_1 = arith.constant 0 : i32
    return %c0_i32, %c0_i32_0 : i32, i32
  }
  func.func @transform_4(%arg0: i32, %arg1: i32) -> (i32, i32) {
    %c0_i32 = arith.constant 0 : i32
    %c0_i32_0 = arith.constant 0 : i32
    return %arg1, %c0_i32 : i32, i32
  }
}

module attributes {stable_mosaic.version = 11 : i64} {
  func.func @kernel(%arg0: i32, %arg1: i32, %arg2: memref<32x1024xbf16, #tpu.memory_space<vmem>>, %arg3: memref<1024x128xbf16, #tpu.memory_space<vmem>>, %arg4: memref<1x128xf32, #tpu.memory_space<vmem>>, %arg5: memref<1x128xf32, #tpu.memory_space<vmem>>, %arg6: memref<32x128xbf16, #tpu.memory_space<vmem>>, %arg7: memref<1x128xf32, #tpu.memory_space<vmem>>, %arg8: memref<1x128xf32, #tpu.memory_space<vmem>>) attributes {dimension_semantics = [#tpu.dimension_semantics<arbitrary>, #tpu.dimension_semantics<arbitrary>], iteration_bounds = array<i64: 2, 1>, scalar_prefetch = 0 : i64, scratch_operands = 2 : i64, tpu.core_type = #tpu.core_type<tc>, window_params = [{transform_indices = @transform_0, window_bounds = array<i64: 32, 1024>}, {pipeline_mode = #tpu.pipeline_mode<synchronous>, transform_indices = @transform_1, window_bounds = array<i64: 1024, 128>}, {pipeline_mode = #tpu.pipeline_mode<synchronous>, transform_indices = @transform_2, window_bounds = array<i64: 1, 128>}, {pipeline_mode = #tpu.pipeline_mode<synchronous>, transform_indices = @transform_3, window_bounds = array<i64: 1, 128>}, {transform_indices = @transform_4, window_bounds = array<i64: 32, 128>}]} {
    %c0 = arith.constant 0 : index
    %c0_0 = arith.constant 0 : index
    %0 = vector.load %arg2[%c0, %c0_0] : memref<32x1024xbf16, #tpu.memory_space<vmem>>, vector<32x1024xbf16>
    %c0_1 = arith.constant 0 : index
    %c0_2 = arith.constant 0 : index
    %1 = vector.load %arg3[%c0_1, %c0_2] : memref<1024x128xbf16, #tpu.memory_space<vmem>>, vector<1024x128xbf16>
    %cst = arith.constant dense<0.000000e+00> : vector<32x128xf32>
    %2 = tpu.matmul %0, %1, %cst {dimension_numbers = #tpu.dot_dimension_numbers<[1], [0], [0], [1], [0, 0, 1, 1], [], []>} : vector<32x1024xbf16>, vector<1024x128xbf16>, vector<32x128xf32> -> vector<32x128xf32>
    %c0_i32 = arith.constant 0 : i32
    %3 = arith.cmpi eq, %arg0, %c0_i32 : i32
    %c0_i32_3 = arith.constant 0 : i32
    %4 = arith.cmpi eq, %arg1, %c0_i32_3 : i32
    %5 = arith.andi %3, %4 : i1
    %6 = arith.extui %5 : i1 to i32
    %c0_i32_4 = arith.constant 0 : i32
    %7 = arith.cmpi ne, %6, %c0_i32_4 : i32
    scf.if %7 {
      %cst_8 = arith.constant 0.000000e+00 : f32
      %14 = vector.broadcast %cst_8 : f32 to vector<1x128xf32>
      %c0_9 = arith.constant 0 : index
      %c0_10 = arith.constant 0 : index
      %15 = vector.load %arg7[%c0_9, %c0_10] : memref<1x128xf32, #tpu.memory_space<vmem>>, vector<1x128xf32>
      tpu.vector_store %arg7[%c0_9, %c0_10], %14 {strides = array<i32>} : memref<1x128xf32, #tpu.memory_space<vmem>>, vector<1x128xf32>,
      %cst_11 = arith.constant 0.000000e+00 : f32
      %16 = vector.broadcast %cst_11 : f32 to vector<1x128xf32>
      %c0_12 = arith.constant 0 : index
      %c0_13 = arith.constant 0 : index
      %17 = vector.load %arg8[%c0_12, %c0_13] : memref<1x128xf32, #tpu.memory_space<vmem>>, vector<1x128xf32>
      tpu.vector_store %arg8[%c0_12, %c0_13], %16 {strides = array<i32>} : memref<1x128xf32, #tpu.memory_space<vmem>>, vector<1x128xf32>,
    } else {
    }
    %c0_i32_5 = arith.constant 0 : i32
    %8 = arith.cmpi eq, %arg0, %c0_i32_5 : i32
    %9 = arith.extui %8 : i1 to i32
    %c0_i32_6 = arith.constant 0 : i32
    %10 = arith.cmpi ne, %9, %c0_i32_6 : i32
    scf.if %10 {
      %c0_8 = arith.constant 0 : index
      %c0_9 = arith.constant 0 : index
      %14 = vector.load %arg7[%c0_8, %c0_9] : memref<1x128xf32, #tpu.memory_space<vmem>>, vector<1x128xf32>
      %cst_10 = arith.constant dense<0.000000e+00> : vector<128xf32>
      %15 = vector.multi_reduction <add>, %2, %cst_10 [0] : vector<32x128xf32> to vector<128xf32>
      %16 = vector.shape_cast %15 : vector<128xf32> to vector<1x128xf32>
      %17 = arith.addf %14, %16 : vector<1x128xf32>
      %c0_11 = arith.constant 0 : index
      %c0_12 = arith.constant 0 : index
      %18 = vector.load %arg7[%c0_11, %c0_12] : memref<1x128xf32, #tpu.memory_space<vmem>>, vector<1x128xf32>
      tpu.vector_store %arg7[%c0_11, %c0_12], %17 {strides = array<i32>} : memref<1x128xf32, #tpu.memory_space<vmem>>, vector<1x128xf32>,
      %c0_13 = arith.constant 0 : index
      %c0_14 = arith.constant 0 : index
      %19 = vector.load %arg8[%c0_13, %c0_14] : memref<1x128xf32, #tpu.memory_space<vmem>>, vector<1x128xf32>
      %20 = arith.mulf %2, %2 : vector<32x128xf32>
      %cst_15 = arith.constant dense<0.000000e+00> : vector<128xf32>
      %21 = vector.multi_reduction <add>, %20, %cst_15 [0] : vector<32x128xf32> to vector<128xf32>
      %22 = vector.shape_cast %21 : vector<128xf32> to vector<1x128xf32>
      %23 = arith.addf %19, %22 : vector<1x128xf32>
      %c0_16 = arith.constant 0 : index
      %c0_17 = arith.constant 0 : index
      %24 = vector.load %arg8[%c0_16, %c0_17] : memref<1x128xf32, #tpu.memory_space<vmem>>, vector<1x128xf32>
      tpu.vector_store %arg8[%c0_16, %c0_17], %23 {strides = array<i32>} : memref<1x128xf32, #tpu.memory_space<vmem>>, vector<1x128xf32>,
    } else {
    }
    %c1_i32 = arith.constant 1 : i32
    %11 = arith.cmpi eq, %arg0, %c1_i32 : i32
    %12 = arith.extui %11 : i1 to i32
    %c0_i32_7 = arith.constant 0 : i32
    %13 = arith.cmpi ne, %12, %c0_i32_7 : i32
    scf.if %13 {
      %c0_8 = arith.constant 0 : index
      %c0_9 = arith.constant 0 : index
      %14 = vector.load %arg7[%c0_8, %c0_9] : memref<1x128xf32, #tpu.memory_space<vmem>>, vector<1x128xf32>
      %cst_10 = arith.constant 3.125000e-02 : f32
      %15 = vector.broadcast %cst_10 : f32 to vector<1x128xf32>
      %16 = arith.mulf %14, %15 : vector<1x128xf32>
      %c0_11 = arith.constant 0 : index
      %c0_12 = arith.constant 0 : index
      %17 = vector.load %arg8[%c0_11, %c0_12] : memref<1x128xf32, #tpu.memory_space<vmem>>, vector<1x128xf32>
      %cst_13 = arith.constant 3.125000e-02 : f32
      %18 = vector.broadcast %cst_13 : f32 to vector<1x128xf32>
      %19 = arith.mulf %17, %18 : vector<1x128xf32>
      %20 = arith.mulf %16, %16 : vector<1x128xf32>
      %21 = arith.subf %19, %20 : vector<1x128xf32>
      %cst_14 = arith.constant 0.000000e+00 : f32
      %22 = vector.broadcast %cst_14 : f32 to vector<1x128xf32>
      %23 = arith.maximumf %21, %22 : vector<1x128xf32>
      %cst_15 = arith.constant 9.99999974E-6 : f32
      %24 = vector.broadcast %cst_15 : f32 to vector<1x128xf32>
      %25 = arith.addf %23, %24 : vector<1x128xf32>
      %26 = math.rsqrt %25 : vector<1x128xf32>
      %27 = vector.broadcast %16 : vector<1x128xf32> to vector<32x128xf32>
      %28 = arith.subf %2, %27 : vector<32x128xf32>
      %29 = vector.broadcast %26 : vector<1x128xf32> to vector<32x128xf32>
      %30 = arith.mulf %28, %29 : vector<32x128xf32>
      %c0_16 = arith.constant 0 : index
      %c0_17 = arith.constant 0 : index
      %31 = vector.load %arg4[%c0_16, %c0_17] : memref<1x128xf32, #tpu.memory_space<vmem>>, vector<1x128xf32>
      %32 = vector.broadcast %31 : vector<1x128xf32> to vector<32x128xf32>
      %33 = arith.mulf %30, %32 : vector<32x128xf32>
      %c0_18 = arith.constant 0 : index
      %c0_19 = arith.constant 0 : index
      %34 = vector.load %arg5[%c0_18, %c0_19] : memref<1x128xf32, #tpu.memory_space<vmem>>, vector<1x128xf32>
      %35 = vector.broadcast %34 : vector<1x128xf32> to vector<32x128xf32>
      %36 = arith.addf %33, %35 : vector<32x128xf32>
      %cst_20 = arith.constant 0.000000e+00 : f32
      %37 = vector.broadcast %cst_20 : f32 to vector<32x128xf32>
      %38 = arith.maximumf %36, %37 : vector<32x128xf32>
      %39 = arith.truncf %38 : vector<32x128xf32> to vector<32x128xbf16>
      %c0_21 = arith.constant 0 : index
      %c0_22 = arith.constant 0 : index
      %40 = vector.load %arg6[%c0_21, %c0_22] : memref<32x128xbf16, #tpu.memory_space<vmem>>, vector<32x128xbf16>
      tpu.vector_store %arg6[%c0_21, %c0_22], %39 {strides = array<i32>} : memref<32x128xbf16, #tpu.memory_space<vmem>>, vector<32x128xbf16>,
    } else {
    }
    return
  }
  func.func @transform_0(%arg0: i32, %arg1: i32) -> (i32, i32) {
    %c0_i32 = arith.constant 0 : i32
    %c0_i32_0 = arith.constant 0 : i32
    return %arg1, %c0_i32 : i32, i32
  }
  func.func @transform_1(%arg0: i32, %arg1: i32) -> (i32, i32) {
    %c0_i32 = arith.constant 0 : i32
    %c0_i32_0 = arith.constant 0 : i32
    %c0_i32_1 = arith.constant 0 : i32
    return %c0_i32, %c0_i32_0 : i32, i32
  }
  func.func @transform_2(%arg0: i32, %arg1: i32) -> (i32, i32) {
    %c0_i32 = arith.constant 0 : i32
    %c0_i32_0 = arith.constant 0 : i32
    %c0_i32_1 = arith.constant 0 : i32
    return %c0_i32, %c0_i32_0 : i32, i32
  }
  func.func @transform_3(%arg0: i32, %arg1: i32) -> (i32, i32) {
    %c0_i32 = arith.constant 0 : i32
    %c0_i32_0 = arith.constant 0 : i32
    %c0_i32_1 = arith.constant 0 : i32
    return %c0_i32, %c0_i32_0 : i32, i32
  }
  func.func @transform_4(%arg0: i32, %arg1: i32) -> (i32, i32) {
    %c0_i32 = arith.constant 0 : i32
    %c0_i32_0 = arith.constant 0 : i32
    return %arg1, %c0_i32 : i32, i32
  }
}

module attributes {stable_mosaic.version = 11 : i64} {
  func.func @kernel(%arg0: i32, %arg1: i32, %arg2: memref<128x512xbf16, #tpu.memory_space<vmem>>, %arg3: memref<512x128xbf16, #tpu.memory_space<vmem>>, %arg4: memref<1x128xf32, #tpu.memory_space<vmem>>, %arg5: memref<1x128xf32, #tpu.memory_space<vmem>>, %arg6: memref<128x128xbf16, #tpu.memory_space<vmem>>, %arg7: memref<1x128xf32, #tpu.memory_space<vmem>>, %arg8: memref<1x128xf32, #tpu.memory_space<vmem>>) attributes {dimension_semantics = [#tpu.dimension_semantics<arbitrary>, #tpu.dimension_semantics<arbitrary>], iteration_bounds = array<i64: 2, 1>, scalar_prefetch = 0 : i64, scratch_operands = 2 : i64, tpu.core_type = #tpu.core_type<tc>, window_params = [{transform_indices = @transform_0, window_bounds = array<i64: 128, 512>}, {pipeline_mode = #tpu.pipeline_mode<synchronous>, transform_indices = @transform_1, window_bounds = array<i64: 512, 128>}, {pipeline_mode = #tpu.pipeline_mode<synchronous>, transform_indices = @transform_2, window_bounds = array<i64: 1, 128>}, {pipeline_mode = #tpu.pipeline_mode<synchronous>, transform_indices = @transform_3, window_bounds = array<i64: 1, 128>}, {transform_indices = @transform_4, window_bounds = array<i64: 128, 128>}]} {
    %c0 = arith.constant 0 : index
    %c0_0 = arith.constant 0 : index
    %0 = vector.load %arg2[%c0, %c0_0] : memref<128x512xbf16, #tpu.memory_space<vmem>>, vector<128x512xbf16>
    %c0_1 = arith.constant 0 : index
    %c0_2 = arith.constant 0 : index
    %1 = vector.load %arg3[%c0_1, %c0_2] : memref<512x128xbf16, #tpu.memory_space<vmem>>, vector<512x128xbf16>
    %cst = arith.constant dense<0.000000e+00> : vector<128x128xf32>
    %2 = tpu.matmul %0, %1, %cst {dimension_numbers = #tpu.dot_dimension_numbers<[1], [0], [0], [1], [0, 0, 1, 1], [], []>} : vector<128x512xbf16>, vector<512x128xbf16>, vector<128x128xf32> -> vector<128x128xf32>
    %c0_i32 = arith.constant 0 : i32
    %3 = arith.cmpi eq, %arg0, %c0_i32 : i32
    %c0_i32_3 = arith.constant 0 : i32
    %4 = arith.cmpi eq, %arg1, %c0_i32_3 : i32
    %5 = arith.andi %3, %4 : i1
    %6 = arith.extui %5 : i1 to i32
    %c0_i32_4 = arith.constant 0 : i32
    %7 = arith.cmpi ne, %6, %c0_i32_4 : i32
    scf.if %7 {
      %cst_8 = arith.constant 0.000000e+00 : f32
      %14 = vector.broadcast %cst_8 : f32 to vector<1x128xf32>
      %c0_9 = arith.constant 0 : index
      %c0_10 = arith.constant 0 : index
      %15 = vector.load %arg7[%c0_9, %c0_10] : memref<1x128xf32, #tpu.memory_space<vmem>>, vector<1x128xf32>
      tpu.vector_store %arg7[%c0_9, %c0_10], %14 {strides = array<i32>} : memref<1x128xf32, #tpu.memory_space<vmem>>, vector<1x128xf32>,
      %cst_11 = arith.constant 0.000000e+00 : f32
      %16 = vector.broadcast %cst_11 : f32 to vector<1x128xf32>
      %c0_12 = arith.constant 0 : index
      %c0_13 = arith.constant 0 : index
      %17 = vector.load %arg8[%c0_12, %c0_13] : memref<1x128xf32, #tpu.memory_space<vmem>>, vector<1x128xf32>
      tpu.vector_store %arg8[%c0_12, %c0_13], %16 {strides = array<i32>} : memref<1x128xf32, #tpu.memory_space<vmem>>, vector<1x128xf32>,
    } else {
    }
    %c0_i32_5 = arith.constant 0 : i32
    %8 = arith.cmpi eq, %arg0, %c0_i32_5 : i32
    %9 = arith.extui %8 : i1 to i32
    %c0_i32_6 = arith.constant 0 : i32
    %10 = arith.cmpi ne, %9, %c0_i32_6 : i32
    scf.if %10 {
      %c0_8 = arith.constant 0 : index
      %c0_9 = arith.constant 0 : index
      %14 = vector.load %arg7[%c0_8, %c0_9] : memref<1x128xf32, #tpu.memory_space<vmem>>, vector<1x128xf32>
      %cst_10 = arith.constant dense<0.000000e+00> : vector<128xf32>
      %15 = vector.multi_reduction <add>, %2, %cst_10 [0] : vector<128x128xf32> to vector<128xf32>
      %16 = vector.shape_cast %15 : vector<128xf32> to vector<1x128xf32>
      %17 = arith.addf %14, %16 : vector<1x128xf32>
      %c0_11 = arith.constant 0 : index
      %c0_12 = arith.constant 0 : index
      %18 = vector.load %arg7[%c0_11, %c0_12] : memref<1x128xf32, #tpu.memory_space<vmem>>, vector<1x128xf32>
      tpu.vector_store %arg7[%c0_11, %c0_12], %17 {strides = array<i32>} : memref<1x128xf32, #tpu.memory_space<vmem>>, vector<1x128xf32>,
      %c0_13 = arith.constant 0 : index
      %c0_14 = arith.constant 0 : index
      %19 = vector.load %arg8[%c0_13, %c0_14] : memref<1x128xf32, #tpu.memory_space<vmem>>, vector<1x128xf32>
      %20 = arith.mulf %2, %2 : vector<128x128xf32>
      %cst_15 = arith.constant dense<0.000000e+00> : vector<128xf32>
      %21 = vector.multi_reduction <add>, %20, %cst_15 [0] : vector<128x128xf32> to vector<128xf32>
      %22 = vector.shape_cast %21 : vector<128xf32> to vector<1x128xf32>
      %23 = arith.addf %19, %22 : vector<1x128xf32>
      %c0_16 = arith.constant 0 : index
      %c0_17 = arith.constant 0 : index
      %24 = vector.load %arg8[%c0_16, %c0_17] : memref<1x128xf32, #tpu.memory_space<vmem>>, vector<1x128xf32>
      tpu.vector_store %arg8[%c0_16, %c0_17], %23 {strides = array<i32>} : memref<1x128xf32, #tpu.memory_space<vmem>>, vector<1x128xf32>,
    } else {
    }
    %c1_i32 = arith.constant 1 : i32
    %11 = arith.cmpi eq, %arg0, %c1_i32 : i32
    %12 = arith.extui %11 : i1 to i32
    %c0_i32_7 = arith.constant 0 : i32
    %13 = arith.cmpi ne, %12, %c0_i32_7 : i32
    scf.if %13 {
      %c0_8 = arith.constant 0 : index
      %c0_9 = arith.constant 0 : index
      %14 = vector.load %arg7[%c0_8, %c0_9] : memref<1x128xf32, #tpu.memory_space<vmem>>, vector<1x128xf32>
      %cst_10 = arith.constant 7.812500e-03 : f32
      %15 = vector.broadcast %cst_10 : f32 to vector<1x128xf32>
      %16 = arith.mulf %14, %15 : vector<1x128xf32>
      %c0_11 = arith.constant 0 : index
      %c0_12 = arith.constant 0 : index
      %17 = vector.load %arg8[%c0_11, %c0_12] : memref<1x128xf32, #tpu.memory_space<vmem>>, vector<1x128xf32>
      %cst_13 = arith.constant 7.812500e-03 : f32
      %18 = vector.broadcast %cst_13 : f32 to vector<1x128xf32>
      %19 = arith.mulf %17, %18 : vector<1x128xf32>
      %20 = arith.mulf %16, %16 : vector<1x128xf32>
      %21 = arith.subf %19, %20 : vector<1x128xf32>
      %cst_14 = arith.constant 0.000000e+00 : f32
      %22 = vector.broadcast %cst_14 : f32 to vector<1x128xf32>
      %23 = arith.maximumf %21, %22 : vector<1x128xf32>
      %cst_15 = arith.constant 9.99999974E-6 : f32
      %24 = vector.broadcast %cst_15 : f32 to vector<1x128xf32>
      %25 = arith.addf %23, %24 : vector<1x128xf32>
      %26 = math.rsqrt %25 : vector<1x128xf32>
      %27 = vector.broadcast %16 : vector<1x128xf32> to vector<128x128xf32>
      %28 = arith.subf %2, %27 : vector<128x128xf32>
      %29 = vector.broadcast %26 : vector<1x128xf32> to vector<128x128xf32>
      %30 = arith.mulf %28, %29 : vector<128x128xf32>
      %c0_16 = arith.constant 0 : index
      %c0_17 = arith.constant 0 : index
      %31 = vector.load %arg4[%c0_16, %c0_17] : memref<1x128xf32, #tpu.memory_space<vmem>>, vector<1x128xf32>
      %32 = vector.broadcast %31 : vector<1x128xf32> to vector<128x128xf32>
      %33 = arith.mulf %30, %32 : vector<128x128xf32>
      %c0_18 = arith.constant 0 : index
      %c0_19 = arith.constant 0 : index
      %34 = vector.load %arg5[%c0_18, %c0_19] : memref<1x128xf32, #tpu.memory_space<vmem>>, vector<1x128xf32>
      %35 = vector.broadcast %34 : vector<1x128xf32> to vector<128x128xf32>
      %36 = arith.addf %33, %35 : vector<128x128xf32>
      %cst_20 = arith.constant 0.000000e+00 : f32
      %37 = vector.broadcast %cst_20 : f32 to vector<128x128xf32>
      %38 = arith.maximumf %36, %37 : vector<128x128xf32>
      %39 = arith.truncf %38 : vector<128x128xf32> to vector<128x128xbf16>
      %c0_21 = arith.constant 0 : index
      %c0_22 = arith.constant 0 : index
      %40 = vector.load %arg6[%c0_21, %c0_22] : memref<128x128xbf16, #tpu.memory_space<vmem>>, vector<128x128xbf16>
      tpu.vector_store %arg6[%c0_21, %c0_22], %39 {strides = array<i32>} : memref<128x128xbf16, #tpu.memory_space<vmem>>, vector<128x128xbf16>,
    } else {
    }
    return
  }
  func.func @transform_0(%arg0: i32, %arg1: i32) -> (i32, i32) {
    %c0_i32 = arith.constant 0 : i32
    %c0_i32_0 = arith.constant 0 : i32
    return %arg1, %c0_i32 : i32, i32
  }
  func.func @transform_1(%arg0: i32, %arg1: i32) -> (i32, i32) {
    %c0_i32 = arith.constant 0 : i32
    %c0_i32_0 = arith.constant 0 : i32
    %c0_i32_1 = arith.constant 0 : i32
    return %c0_i32, %c0_i32_0 : i32, i32
  }
  func.func @transform_2(%arg0: i32, %arg1: i32) -> (i32, i32) {
    %c0_i32 = arith.constant 0 : i32
    %c0_i32_0 = arith.constant 0 : i32
    %c0_i32_1 = arith.constant 0 : i32
    return %c0_i32, %c0_i32_0 : i32, i32
  }
  func.func @transform_3(%arg0: i32, %arg1: i32) -> (i32, i32) {
    %c0_i32 = arith.constant 0 : i32
    %c0_i32_0 = arith.constant 0 : i32
    %c0_i32_1 = arith.constant 0 : i32
    return %c0_i32, %c0_i32_0 : i32, i32
  }
  func.func @transform_4(%arg0: i32, %arg1: i32) -> (i32, i32) {
    %c0_i32 = arith.constant 0 : i32
    %c0_i32_0 = arith.constant 0 : i32
    return %arg1, %c0_i32 : i32, i32
  }
}

module attributes {stable_mosaic.version = 11 : i64} {
  func.func @kernel(%arg0: i32, %arg1: i32, %arg2: memref<256x256xbf16, #tpu.memory_space<vmem>>, %arg3: memref<256x128xbf16, #tpu.memory_space<vmem>>, %arg4: memref<1x128xf32, #tpu.memory_space<vmem>>, %arg5: memref<1x128xf32, #tpu.memory_space<vmem>>, %arg6: memref<256x128xbf16, #tpu.memory_space<vmem>>, %arg7: memref<1x128xf32, #tpu.memory_space<vmem>>, %arg8: memref<1x128xf32, #tpu.memory_space<vmem>>) attributes {dimension_semantics = [#tpu.dimension_semantics<arbitrary>, #tpu.dimension_semantics<arbitrary>], iteration_bounds = array<i64: 2, 2>, scalar_prefetch = 0 : i64, scratch_operands = 2 : i64, tpu.core_type = #tpu.core_type<tc>, window_params = [{transform_indices = @transform_0, window_bounds = array<i64: 256, 256>}, {pipeline_mode = #tpu.pipeline_mode<synchronous>, transform_indices = @transform_1, window_bounds = array<i64: 256, 128>}, {pipeline_mode = #tpu.pipeline_mode<synchronous>, transform_indices = @transform_2, window_bounds = array<i64: 1, 128>}, {pipeline_mode = #tpu.pipeline_mode<synchronous>, transform_indices = @transform_3, window_bounds = array<i64: 1, 128>}, {transform_indices = @transform_4, window_bounds = array<i64: 256, 128>}]} {
    %c0 = arith.constant 0 : index
    %c0_0 = arith.constant 0 : index
    %0 = vector.load %arg2[%c0, %c0_0] : memref<256x256xbf16, #tpu.memory_space<vmem>>, vector<256x256xbf16>
    %c0_1 = arith.constant 0 : index
    %c0_2 = arith.constant 0 : index
    %1 = vector.load %arg3[%c0_1, %c0_2] : memref<256x128xbf16, #tpu.memory_space<vmem>>, vector<256x128xbf16>
    %cst = arith.constant dense<0.000000e+00> : vector<256x128xf32>
    %2 = tpu.matmul %0, %1, %cst {dimension_numbers = #tpu.dot_dimension_numbers<[1], [0], [0], [1], [0, 0, 1, 1], [], []>} : vector<256x256xbf16>, vector<256x128xbf16>, vector<256x128xf32> -> vector<256x128xf32>
    %c0_i32 = arith.constant 0 : i32
    %3 = arith.cmpi eq, %arg0, %c0_i32 : i32
    %c0_i32_3 = arith.constant 0 : i32
    %4 = arith.cmpi eq, %arg1, %c0_i32_3 : i32
    %5 = arith.andi %3, %4 : i1
    %6 = arith.extui %5 : i1 to i32
    %c0_i32_4 = arith.constant 0 : i32
    %7 = arith.cmpi ne, %6, %c0_i32_4 : i32
    scf.if %7 {
      %cst_8 = arith.constant 0.000000e+00 : f32
      %14 = vector.broadcast %cst_8 : f32 to vector<1x128xf32>
      %c0_9 = arith.constant 0 : index
      %c0_10 = arith.constant 0 : index
      %15 = vector.load %arg7[%c0_9, %c0_10] : memref<1x128xf32, #tpu.memory_space<vmem>>, vector<1x128xf32>
      tpu.vector_store %arg7[%c0_9, %c0_10], %14 {strides = array<i32>} : memref<1x128xf32, #tpu.memory_space<vmem>>, vector<1x128xf32>,
      %cst_11 = arith.constant 0.000000e+00 : f32
      %16 = vector.broadcast %cst_11 : f32 to vector<1x128xf32>
      %c0_12 = arith.constant 0 : index
      %c0_13 = arith.constant 0 : index
      %17 = vector.load %arg8[%c0_12, %c0_13] : memref<1x128xf32, #tpu.memory_space<vmem>>, vector<1x128xf32>
      tpu.vector_store %arg8[%c0_12, %c0_13], %16 {strides = array<i32>} : memref<1x128xf32, #tpu.memory_space<vmem>>, vector<1x128xf32>,
    } else {
    }
    %c0_i32_5 = arith.constant 0 : i32
    %8 = arith.cmpi eq, %arg0, %c0_i32_5 : i32
    %9 = arith.extui %8 : i1 to i32
    %c0_i32_6 = arith.constant 0 : i32
    %10 = arith.cmpi ne, %9, %c0_i32_6 : i32
    scf.if %10 {
      %c0_8 = arith.constant 0 : index
      %c0_9 = arith.constant 0 : index
      %14 = vector.load %arg7[%c0_8, %c0_9] : memref<1x128xf32, #tpu.memory_space<vmem>>, vector<1x128xf32>
      %cst_10 = arith.constant dense<0.000000e+00> : vector<128xf32>
      %15 = vector.multi_reduction <add>, %2, %cst_10 [0] : vector<256x128xf32> to vector<128xf32>
      %16 = vector.shape_cast %15 : vector<128xf32> to vector<1x128xf32>
      %17 = arith.addf %14, %16 : vector<1x128xf32>
      %c0_11 = arith.constant 0 : index
      %c0_12 = arith.constant 0 : index
      %18 = vector.load %arg7[%c0_11, %c0_12] : memref<1x128xf32, #tpu.memory_space<vmem>>, vector<1x128xf32>
      tpu.vector_store %arg7[%c0_11, %c0_12], %17 {strides = array<i32>} : memref<1x128xf32, #tpu.memory_space<vmem>>, vector<1x128xf32>,
      %c0_13 = arith.constant 0 : index
      %c0_14 = arith.constant 0 : index
      %19 = vector.load %arg8[%c0_13, %c0_14] : memref<1x128xf32, #tpu.memory_space<vmem>>, vector<1x128xf32>
      %20 = arith.mulf %2, %2 : vector<256x128xf32>
      %cst_15 = arith.constant dense<0.000000e+00> : vector<128xf32>
      %21 = vector.multi_reduction <add>, %20, %cst_15 [0] : vector<256x128xf32> to vector<128xf32>
      %22 = vector.shape_cast %21 : vector<128xf32> to vector<1x128xf32>
      %23 = arith.addf %19, %22 : vector<1x128xf32>
      %c0_16 = arith.constant 0 : index
      %c0_17 = arith.constant 0 : index
      %24 = vector.load %arg8[%c0_16, %c0_17] : memref<1x128xf32, #tpu.memory_space<vmem>>, vector<1x128xf32>
      tpu.vector_store %arg8[%c0_16, %c0_17], %23 {strides = array<i32>} : memref<1x128xf32, #tpu.memory_space<vmem>>, vector<1x128xf32>,
    } else {
    }
    %c1_i32 = arith.constant 1 : i32
    %11 = arith.cmpi eq, %arg0, %c1_i32 : i32
    %12 = arith.extui %11 : i1 to i32
    %c0_i32_7 = arith.constant 0 : i32
    %13 = arith.cmpi ne, %12, %c0_i32_7 : i32
    scf.if %13 {
      %c0_8 = arith.constant 0 : index
      %c0_9 = arith.constant 0 : index
      %14 = vector.load %arg7[%c0_8, %c0_9] : memref<1x128xf32, #tpu.memory_space<vmem>>, vector<1x128xf32>
      %cst_10 = arith.constant 0.001953125 : f32
      %15 = vector.broadcast %cst_10 : f32 to vector<1x128xf32>
      %16 = arith.mulf %14, %15 : vector<1x128xf32>
      %c0_11 = arith.constant 0 : index
      %c0_12 = arith.constant 0 : index
      %17 = vector.load %arg8[%c0_11, %c0_12] : memref<1x128xf32, #tpu.memory_space<vmem>>, vector<1x128xf32>
      %cst_13 = arith.constant 0.001953125 : f32
      %18 = vector.broadcast %cst_13 : f32 to vector<1x128xf32>
      %19 = arith.mulf %17, %18 : vector<1x128xf32>
      %20 = arith.mulf %16, %16 : vector<1x128xf32>
      %21 = arith.subf %19, %20 : vector<1x128xf32>
      %cst_14 = arith.constant 0.000000e+00 : f32
      %22 = vector.broadcast %cst_14 : f32 to vector<1x128xf32>
      %23 = arith.maximumf %21, %22 : vector<1x128xf32>
      %cst_15 = arith.constant 9.99999974E-6 : f32
      %24 = vector.broadcast %cst_15 : f32 to vector<1x128xf32>
      %25 = arith.addf %23, %24 : vector<1x128xf32>
      %26 = math.rsqrt %25 : vector<1x128xf32>
      %27 = vector.broadcast %16 : vector<1x128xf32> to vector<256x128xf32>
      %28 = arith.subf %2, %27 : vector<256x128xf32>
      %29 = vector.broadcast %26 : vector<1x128xf32> to vector<256x128xf32>
      %30 = arith.mulf %28, %29 : vector<256x128xf32>
      %c0_16 = arith.constant 0 : index
      %c0_17 = arith.constant 0 : index
      %31 = vector.load %arg4[%c0_16, %c0_17] : memref<1x128xf32, #tpu.memory_space<vmem>>, vector<1x128xf32>
      %32 = vector.broadcast %31 : vector<1x128xf32> to vector<256x128xf32>
      %33 = arith.mulf %30, %32 : vector<256x128xf32>
      %c0_18 = arith.constant 0 : index
      %c0_19 = arith.constant 0 : index
      %34 = vector.load %arg5[%c0_18, %c0_19] : memref<1x128xf32, #tpu.memory_space<vmem>>, vector<1x128xf32>
      %35 = vector.broadcast %34 : vector<1x128xf32> to vector<256x128xf32>
      %36 = arith.addf %33, %35 : vector<256x128xf32>
      %cst_20 = arith.constant 0.000000e+00 : f32
      %37 = vector.broadcast %cst_20 : f32 to vector<256x128xf32>
      %38 = arith.maximumf %36, %37 : vector<256x128xf32>
      %39 = arith.truncf %38 : vector<256x128xf32> to vector<256x128xbf16>
      %c0_21 = arith.constant 0 : index
      %c0_22 = arith.constant 0 : index
      %40 = vector.load %arg6[%c0_21, %c0_22] : memref<256x128xbf16, #tpu.memory_space<vmem>>, vector<256x128xbf16>
      tpu.vector_store %arg6[%c0_21, %c0_22], %39 {strides = array<i32>} : memref<256x128xbf16, #tpu.memory_space<vmem>>, vector<256x128xbf16>,
    } else {
    }
    return
  }
  func.func @transform_0(%arg0: i32, %arg1: i32) -> (i32, i32) {
    %c0_i32 = arith.constant 0 : i32
    %c0_i32_0 = arith.constant 0 : i32
    return %arg1, %c0_i32 : i32, i32
  }
  func.func @transform_1(%arg0: i32, %arg1: i32) -> (i32, i32) {
    %c0_i32 = arith.constant 0 : i32
    %c0_i32_0 = arith.constant 0 : i32
    %c0_i32_1 = arith.constant 0 : i32
    return %c0_i32, %c0_i32_0 : i32, i32
  }
  func.func @transform_2(%arg0: i32, %arg1: i32) -> (i32, i32) {
    %c0_i32 = arith.constant 0 : i32
    %c0_i32_0 = arith.constant 0 : i32
    %c0_i32_1 = arith.constant 0 : i32
    return %c0_i32, %c0_i32_0 : i32, i32
  }
  func.func @transform_3(%arg0: i32, %arg1: i32) -> (i32, i32) {
    %c0_i32 = arith.constant 0 : i32
    %c0_i32_0 = arith.constant 0 : i32
    %c0_i32_1 = arith.constant 0 : i32
    return %c0_i32, %c0_i32_0 : i32, i32
  }
  func.func @transform_4(%arg0: i32, %arg1: i32) -> (i32, i32) {
    %c0_i32 = arith.constant 0 : i32
    %c0_i32_0 = arith.constant 0 : i32
    return %arg1, %c0_i32 : i32, i32
  }
}

module attributes {stable_mosaic.version = 11 : i64} {
  func.func @_deconv_tanh_kernel(%arg0: i32, %arg1: memref<256x128xbf16, #tpu.memory_space<vmem>>, %arg2: memref<128x128xbf16, #tpu.memory_space<vmem>>, %arg3: memref<256x128xf32, #tpu.memory_space<vmem>>) attributes {dimension_semantics = [#tpu.dimension_semantics<parallel>], iteration_bounds = array<i64: 8>, scalar_prefetch = 0 : i64, scratch_operands = 0 : i64, tpu.core_type = #tpu.core_type<tc>, window_params = [{transform_indices = @transform_0, window_bounds = array<i64: 256, 128>}, {pipeline_mode = #tpu.pipeline_mode<synchronous>, transform_indices = @transform_1, window_bounds = array<i64: 128, 128>}, {transform_indices = @transform_2, window_bounds = array<i64: 256, 128>}]} {
    %c0 = arith.constant 0 : index
    %c0_0 = arith.constant 0 : index
    %0 = vector.load %arg1[%c0, %c0_0] : memref<256x128xbf16, #tpu.memory_space<vmem>>, vector<256x128xbf16>
    %c0_1 = arith.constant 0 : index
    %c0_2 = arith.constant 0 : index
    %1 = vector.load %arg2[%c0_1, %c0_2] : memref<128x128xbf16, #tpu.memory_space<vmem>>, vector<128x128xbf16>
    %cst = arith.constant dense<0.000000e+00> : vector<256x128xf32>
    %2 = tpu.matmul %0, %1, %cst {dimension_numbers = #tpu.dot_dimension_numbers<[1], [0], [0], [1], [0, 0, 1, 1], [], []>} : vector<256x128xbf16>, vector<128x128xbf16>, vector<256x128xf32> -> vector<256x128xf32>
    %3 = math.tanh %2 : vector<256x128xf32>
    %c0_3 = arith.constant 0 : index
    %c0_4 = arith.constant 0 : index
    %4 = vector.load %arg3[%c0_3, %c0_4] : memref<256x128xf32, #tpu.memory_space<vmem>>, vector<256x128xf32>
    tpu.vector_store %arg3[%c0_3, %c0_4], %3 {strides = array<i32>} : memref<256x128xf32, #tpu.memory_space<vmem>>, vector<256x128xf32>,
    return
  }
  func.func @transform_0(%arg0: i32) -> (i32, i32) {
    %c0_i32 = arith.constant 0 : i32
    %c0_i32_0 = arith.constant 0 : i32
    return %arg0, %c0_i32 : i32, i32
  }
  func.func @transform_1(%arg0: i32) -> (i32, i32) {
    %c0_i32 = arith.constant 0 : i32
    %c0_i32_0 = arith.constant 0 : i32
    %c0_i32_1 = arith.constant 0 : i32
    return %c0_i32, %c0_i32_0 : i32, i32
  }
  func.func @transform_2(%arg0: i32) -> (i32, i32) {
    %c0_i32 = arith.constant 0 : i32
    %c0_i32_0 = arith.constant 0 : i32
    return %arg0, %c0_i32 : i32, i32
  }
}

</mosaic_0001>

<llo_original>
// kernel: generator_forward.5
$region0: #{generator_forward.5}
  #allocation0 [shape = 'u32[]', space=smem, size = 0x4, offset = 0x4, fixed_abs, tag = 'smem constant byte address 0x4 - core index']
  #allocation1 [shape = 'u32[72,128]{1,0:T(1,128)}', space=vmem, size = 0x9000, scoped, tag = 'internal scratch']
  #allocation2 [shape = 'f32[1,128]{1,0:T(1,128)}', space=vmem, size = 0x200, scoped, tag = 'scratch operand']
  #allocation3 [shape = 'f32[1,128]{1,0:T(1,128)}', space=vmem, size = 0x200, scoped, tag = 'scratch operand']
  %s0 = inlined_call_operand.vmem [shape: bf16[8,64], index: 0, kind: input, shape index: {}]
  %s1 = inlined_call_operand.hbm [shape: bf16[64,128], index: 1, kind: input, shape index: {}]
  %s2 = inlined_call_operand.hbm [shape: f32[1,128], index: 2, kind: input, shape index: {}]
  %s3 = inlined_call_operand.hbm [shape: f32[1,128], index: 3, kind: input, shape index: {}]
  %s4 = inlined_call_operand.vmem [shape: bf16[8,128], index: 4, kind: output, shape index: {}]
  %s5 = sld [smem:[#allocation0]]
  $region73: #{generator_forward.5} parent=0
    _
  %s7 = ssub.s32 1, %s5
  %s8 = scalar_select 0, %s7, %s5
  $region1: #{generator_forward.5} parent=0
    #allocation4 [shape = 'u8[16384]{0}', space=vmem, size = 0x4000, scoped, tag = 'input window, operand 1, single buffered']
    #allocation5 [shape = 's32[2]{0}', space=sflag, size = 0x8, scoped, tag = 'scoped memory for generator_forward.5']
    #allocation6 [shape = 'u8[512]{0}', space=vmem, size = 0x400, scoped, tag = 'input window, operand 2, single buffered']
    #allocation7 [shape = 's32[1]{0}', space=sflag, size = 0x4, scoped, tag = 'scoped memory for generator_forward.5']
    #allocation8 [shape = 'u8[512]{0}', space=vmem, size = 0x400, scoped, tag = 'input window, operand 3, single buffered']
    %9 = vsyncpa [#allocation5], 0
    %10 = vsyncpa [#allocation7], 0
    loop: start=0, step=1, limit=4
    $region2: #{generator_forward.5} parent=1 // loop_pre_header
      _
    $region3: #{generator_forward.5} parent=1 // loop_header
      %s12 = sphi 0, %s16
      %p13 = scmp.ge.s32.totalorder %s12, 4
      %s19 = sphi 0, %s31
      %s20 = sphi 0, %s27
      %s21 = sphi 0, %s19
      %s22 = sphi 0, %s20
      %s23 = sphi 0, %s21
      %s24 = sphi 0, %s22
      %s34 = sphi 0, %s36
      %s37 = sphi 0, %s34
      %s38 = sphi 0, %s37
      %s54 = sphi 0, %s38
      %s58 = sphi 0, %s58
      %s60 = sphi 0, %s58
      %s61 = sphi 0, %s60
      %s75 = sphi 0, %s61
      %s79 = sphi 0, %s79
      %s81 = sphi 0, %s79
      %s82 = sphi 0, %s81
      %s96 = sphi 0, %s82
      %s100 = sphi 0, %s100
      %s102 = sphi 0, %s100
      %s103 = sphi 0, %s102
      %s117 = sphi 0, %s103
      %s123 = sphi 0, %s125
      %s126 = sphi 0, %s123
      %s127 = sphi 0, %s126
      %s143 = sphi 0, %s127
    $region4: #{generator_forward.5} parent=1 // loop_header_branch
      %15 = sbr.rel (%p13) target = $region8
    $region5: #{generator_forward.5} parent=1 // loop_body
      %s17 = ssub.s32 %s12, 1
      %s18 = ssub.s32 %s12, 2
      %s25 = sadd.s32 1, %s20
      %p26 = scmp.ge.s32.totalorder %s25, 1
      %s27 = scalar_select %p26, 0, %s25
      %s28 = sadd.s32 1, %s19
      %s29 = scalar_select %p26, %s28, %s19
      %p30 = scmp.ge.s32.totalorder %s29, 2
      %s31 = scalar_select %p30, 0, %s29
      %s32 = ssub.s32 %s20, %s27
      %p33 = scmp.eq.s32.totalorder %s32, 0
      %s35 = sadd.s32 %s34, 1
      %s36 = scalar_select %p33, %s34, %s35
      %p39 = pneg %p33
      %p40 = scmp.eq.s32.totalorder %s12, 1
      %p41 = por %p39, %p40
      %p42 = scmp.ne.s32.totalorder %s34, %s37
      %p43 = scmp.eq.s32.totalorder %s12, 0
      %p44 = por %p42, %p43
      %p45 = scmp.ne.s32.totalorder %s34, %s37
      %p46 = scmp.eq.s32.totalorder %s17, 1
      %p47 = por %p45, %p46
      %p48 = scmp.ne.s32.totalorder %s37, %s38
      %p49 = scmp.eq.s32.totalorder %s17, 0
      %p50 = por %p48, %p49
      %p51 = scmp.ne.s32.totalorder %s37, %s38
      %p52 = scmp.eq.s32.totalorder %s18, 1
      %p53 = por %p51, %p52
      %p55 = scmp.ne.s32.totalorder %s38, %s54
      %p56 = scmp.eq.s32.totalorder %s18, 0
      %p57 = por %p55, %p56
      %s59 = sadd.s32 %s58, 1
      %p62 = scmp.eq.s32.totalorder %s12, 1
      %p63 = scmp.ne.s32.totalorder %s58, %s60
      %p64 = scmp.eq.s32.totalorder %s12, 0
      %p65 = por %p63, %p64
      %p66 = scmp.ne.s32.totalorder %s58, %s60
      %p67 = scmp.eq.s32.totalorder %s17, 1
      %p68 = por %p66, %p67
      %p69 = scmp.ne.s32.totalorder %s60, %s61
      %p70 = scmp.eq.s32.totalorder %s17, 0
      %p71 = por %p69, %p70
      %p72 = scmp.ne.s32.totalorder %s60, %s61
      %p73 = scmp.eq.s32.totalorder %s18, 1
      %p74 = por %p72, %p73
      %p76 = scmp.ne.s32.totalorder %s61, %s75
      %p77 = scmp.eq.s32.totalorder %s18, 0
      %p78 = por %p76, %p77
      %s80 = sadd.s32 %s79, 1
      %p83 = scmp.eq.s32.totalorder %s12, 1
      %p84 = scmp.ne.s32.totalorder %s79, %s81
      %p85 = scmp.eq.s32.totalorder %s12, 0
      %p86 = por %p84, %p85
      %p87 = scmp.ne.s32.totalorder %s79, %s81
      %p88 = scmp.eq.s32.totalorder %s17, 1
      %p89 = por %p87, %p88
      %p90 = scmp.ne.s32.totalorder %s81, %s82
      %p91 = scmp.eq.s32.totalorder %s17, 0
      %p92 = por %p90, %p91
      %p93 = scmp.ne.s32.totalorder %s81, %s82
      %p94 = scmp.eq.s32.totalorder %s18, 1
      %p95 = por %p93, %p94
      %p97 = scmp.ne.s32.totalorder %s82, %s96
      %p98 = scmp.eq.s32.totalorder %s18, 0
      %p99 = por %p97, %p98
      %s101 = sadd.s32 %s100, 1
      %p104 = scmp.eq.s32.totalorder %s12, 1
      %p105 = scmp.ne.s32.totalorder %s100, %s102
      %p106 = scmp.eq.s32.totalorder %s12, 0
      %p107 = por %p105, %p106
      %p108 = scmp.ne.s32.totalorder %s100, %s102
      %p109 = scmp.eq.s32.totalorder %s17, 1
      %p110 = por %p108, %p109
      %p111 = scmp.ne.s32.totalorder %s102, %s103
      %p112 = scmp.eq.s32.totalorder %s17, 0
      %p113 = por %p111, %p112
      %p114 = scmp.ne.s32.totalorder %s102, %s103
      %p115 = scmp.eq.s32.totalorder %s18, 1
      %p116 = por %p114, %p115
      %p118 = scmp.ne.s32.totalorder %s103, %s117
      %p119 = scmp.eq.s32.totalorder %s18, 0
      %p120 = por %p118, %p119
      %s121 = ssub.s32 %s20, %s27
      %p122 = scmp.eq.s32.totalorder %s121, 0
      %s124 = sadd.s32 %s123, 1
      %s125 = scalar_select %p122, %s123, %s124
      %p128 = pneg %p122
      %p129 = scmp.eq.s32.totalorder %s12, 1
      %p130 = por %p128, %p129
      %p131 = scmp.ne.s32.totalorder %s123, %s126
      %p132 = scmp.eq.s32.totalorder %s12, 0
      %p133 = por %p131, %p132
      %p134 = scmp.ne.s32.totalorder %s123, %s126
      %p135 = scmp.eq.s32.totalorder %s17, 1
      %p136 = por %p134, %p135
      %p137 = scmp.ne.s32.totalorder %s126, %s127
      %p138 = scmp.eq.s32.totalorder %s17, 0
      %p139 = por %p137, %p138
      %p140 = scmp.ne.s32.totalorder %s126, %s127
      %p141 = scmp.eq.s32.totalorder %s18, 1
      %p142 = por %p140, %p141
      %p144 = scmp.ne.s32.totalorder %s127, %s143
      %p145 = scmp.eq.s32.totalorder %s18, 0
      %p146 = por %p144, %p145
      %p147 = scmp.le.s32.totalorder 1, %s12
      %p148 = scmp.lt.s32.totalorder %s12, 3
      %p149 = pnand %p147, %p148
      %p150 = pneg %p149
      // Predicated region
      $region9: #{generator_forward.5} parent=5 // pred_check
        _
      $region10: #{generator_forward.5} parent=5 // pred_check_branch
        %152 = sbr.rel (%p149) target = $region12
      $region11: #{generator_forward.5} parent=5 // pred_region
        %s153 = ssub.s32 %s12, 1
        // Predicated region
        $region13: #{generator_forward.5} parent=11 // pred_check
          %p154 = pneg %p50
        $region14: #{generator_forward.5} parent=11 // pred_check_branch
          %156 = sbr.rel (%p154) target = $region16
        $region15: #{generator_forward.5} parent=11 // pred_region
          %p157 = scmp.lt.s32.totalorder %s22, 0
          %s158 = scalar_select %p157, %s22, 0
          %s159 = smul.addr %s158, 4
          %s160 = scalar_lea.vmem %s0, %s159
        $region16: #{generator_forward.5} parent=11 // pred_fallthru
          _
        // Predicated region
        $region17: #{generator_forward.5} parent=11 // pred_check
          %p161 = pneg %p71
        $region18: #{generator_forward.5} parent=11 // pred_check_branch
          %163 = sbr.rel (%p161) target = $region20
        $region19: #{generator_forward.5} parent=11 // pred_region
          %165 = vsyncadd [#allocation5], 0
          %s166 = sshll.u32 %s1, 4
          %s167 = int_to_ptr.hbm [resolvable:$true] %s166
          %s168 = sshll.u32 [#allocation4], 4
          %s169 = int_to_ptr.vmem [resolvable:$true] %s168
          %174 = dma.hbm_to_vmem [thread:$0]  %s167, 512, %s169, [#allocation5], 64, 64, 4
        $region20: #{generator_forward.5} parent=11 // pred_fallthru
          _
        // Predicated region
        $region21: #{generator_forward.5} parent=11 // pred_check
          %p175 = pneg %p92
        $region22: #{generator_forward.5} parent=11 // pred_check_branch
          %177 = sbr.rel (%p175) target = $region24
        $region23: #{generator_forward.5} parent=11 // pred_region
          %179 = vsyncadd [#allocation7], 0
          %s181 = sshll.u32 %s2, 4
          %s182 = int_to_ptr.hbm [resolvable:$true] %s181
          %s183 = sshll.u32 [#allocation6], 4
          %s184 = int_to_ptr.vmem [resolvable:$true] %s183
          %186 = dma.hbm_to_vmem [thread:$0]  %s182, 16, %s184, [#allocation7]
        $region24: #{generator_forward.5} parent=11 // pred_fallthru
          _
        // Predicated region
        $region25: #{generator_forward.5} parent=11 // pred_check
          %p187 = pneg %p113
        $region26: #{generator_forward.5} parent=11 // pred_check_branch
          %189 = sbr.rel (%p187) target = $region28
        $region27: #{generator_forward.5} parent=11 // pred_region
          %191 = vsyncadd [#allocation7], 0
          %s193 = sshll.u32 %s3, 4
          %s194 = int_to_ptr.hbm [resolvable:$true] %s193
          %s195 = sshll.u32 [#allocation8], 4
          %s196 = int_to_ptr.vmem [resolvable:$true] %s195
          %198 = dma.hbm_to_vmem [thread:$0]  %s194, 16, %s196, [#allocation7]
        $region28: #{generator_forward.5} parent=11 // pred_fallthru
          _
      $region12: #{generator_forward.5} parent=5 // pred_fallthru
        _
      %p199 = scmp.lt.s32.totalorder %s12, 2
      // Predicated region
      $region29: #{generator_forward.5} parent=5 // pred_check
        %p200 = pneg %p199
      $region30: #{generator_forward.5} parent=5 // pred_check_branch
        %202 = sbr.rel (%p200) target = $region32
      $region31: #{generator_forward.5} parent=5 // pred_region
        _
      $region32: #{generator_forward.5} parent=5 // pred_fallthru
        _
      %p203 = scmp.le.s32.totalorder 1, %s12
      %p204 = scmp.lt.s32.totalorder %s12, 3
      %p205 = pnand %p203, %p204
      %p206 = pneg %p205
      // Predicated region
      $region33: #{generator_forward.5} parent=5 // pred_check
        _
      $region34: #{generator_forward.5} parent=5 // pred_check_branch
        %208 = sbr.rel (%p205) target = $region36
      $region35: #{generator_forward.5} parent=5 // pred_region
        %s209 = ssub.s32 %s12, 1
        // Predicated region
        $region37: #{generator_forward.5} parent=35 // pred_check
          %p210 = pneg %p71
        $region38: #{generator_forward.5} parent=35 // pred_check_branch
          %212 = sbr.rel (%p210) target = $region40
        $region39: #{generator_forward.5} parent=35 // pred_region
          %214 = dma.done [#allocation5], 512
        $region40: #{generator_forward.5} parent=35 // pred_fallthru
          _
        // Predicated region
        $region41: #{generator_forward.5} parent=35 // pred_check
          %p215 = pneg %p92
        $region42: #{generator_forward.5} parent=35 // pred_check_branch
          %217 = sbr.rel (%p215) target = $region44
        $region43: #{generator_forward.5} parent=35 // pred_region
          %219 = dma.done [#allocation7], 16
        $region44: #{generator_forward.5} parent=35 // pred_fallthru
          _
        // Predicated region
        $region45: #{generator_forward.5} parent=35 // pred_check
          %p220 = pneg %p113
        $region46: #{generator_forward.5} parent=35 // pred_check_branch
          %222 = sbr.rel (%p220) target = $region48
        $region47: #{generator_forward.5} parent=35 // pred_region
          %224 = dma.done [#allocation7], 16
        $region48: #{generator_forward.5} parent=35 // pred_fallthru
          _
        %p225 = scmp.lt.s32.totalorder %s22, 0
        %s226 = scalar_select %p225, %s22, 0
        %s227 = smul.addr %s226, 4
        %s228 = scalar_lea.vmem %s0, %s227
        %p229 = pneg %p50
        %p230 = pneg %p47
        %p231 = pneg %p71
        %p232 = pneg %p68
        %p233 = pneg %p92
        %p234 = pneg %p89
        %p235 = pneg %p113
        %p236 = pneg %p110
        %p237 = pneg %p139
        %p238 = pneg %p136
        %p239 = scmp.lt.s32.totalorder %s22, 0
        %s240 = scalar_select %p239, %s22, 0
        %s241 = smul.addr %s240, 4
        %s242 = scalar_lea.vmem %s4, %s241
        %p243 = scmp.lt.s32.totalorder %s22, 0
        %s244 = scalar_select %p243, %s22, 0
        %s245 = smul.addr %s244, 4
        %s246 = scalar_lea.vmem %s0, %s245
        %p247 = scmp.lt.s32.totalorder %s22, 0
        %s248 = scalar_select %p247, %s22, 0
        %s249 = smul.addr %s248, 4
        %s250 = scalar_lea.vmem %s4, %s249
        %v252 = vld [vmem:[%s246] sm:$0xf]
        %v253 = vld [vmem:[#allocation4] sm:$0xf]
        %v254 = vld [vmem:[#allocation4 + $0x4] sm:$0xf]
        %v255 = vld [vmem:[#allocation4 + $0x8] sm:$0xf]
        %v256 = vld [vmem:[#allocation4 + $0xc] sm:$0xf]
        %v257 = vld [vmem:[#allocation4 + $0x10] sm:$0xf]
        %v258 = vld [vmem:[#allocation4 + $0x14] sm:$0xf]
        %v259 = vld [vmem:[#allocation4 + $0x18] sm:$0xf]
        %v260 = vld [vmem:[#allocation4 + $0x1c] sm:$0xf]
        %v269 = vunpack.c.l.b16 %v253
        %v270 = vunpack.c.l.b16 %v254
        %v271 = vunpack.c.l.b16 %v255
        %v272 = vunpack.c.l.b16 %v256
        %v273 = vunpack.c.l.b16 %v257
        %v274 = vunpack.c.l.b16 %v258
        %v275 = vunpack.c.l.b16 %v259
        %v276 = vunpack.c.l.b16 %v260
        %v277 = vpack.c.b16 %v270, %v269
        %v278 = vpack.c.b16 %v272, %v271
        %v279 = vpack.c.b16 %v274, %v273
        %v280 = vpack.c.b16 %v276, %v275
        %vm285 = vcmask 523264
        %v287 = vsel %vm285, %v252, 0
        %289 = vmatpush.bf16.msra.mxu0 0
        %290 = vmatpush.bf16.msra.mxu0 0
        %291 = vmatpush.bf16.msra.mxu0 0
        %292 = vmatpush.bf16.msra.mxu0 0
        %293 = vmatpush.bf16.msra.mxu0 %v280
        %294 = vmatpush.bf16.msra.mxu0 %v279
        %295 = vmatpush.bf16.msra.mxu0 %v278
        %296 = vmatpush.bf16.msra.mxu0 %v277
        %297 = vmatmul.bf16.gmra.mxu0 %v287
        %v298 = vpop.f32.mrf.mxu0
        %v299 = vadd.f32 0.0, %v298
        %v300 = vpop.f32.mrf.mxu0
        %301 = vdwg.mxu0
        %p302 = scmp.eq.s32.totalorder %s21, 0
        %p303 = scmp.eq.s32.totalorder %s22, 0
        %p304 = pnand %p302, %p303
        %p305 = pneg %p304
        // Predicated region
        $region49: #{generator_forward.5} parent=35 // pred_check
          _
        $region50: #{generator_forward.5} parent=35 // pred_check_branch
          %307 = sbr.rel (%p304) target = $region52
        $region51: #{generator_forward.5} parent=35 // pred_region
          %308 = vst [vmem:[#allocation2] sm:$0x1] 0.0
          %309 = vst [vmem:[#allocation3] sm:$0x1] 0.0
        $region52: #{generator_forward.5} parent=35 // pred_fallthru
          _
        // Predicated region
        $region53: #{generator_forward.5} parent=35 // pred_check
          %p310 = pneg %p302
        $region54: #{generator_forward.5} parent=35 // pred_check_branch
          %312 = sbr.rel (%p310) target = $region56
        $region55: #{generator_forward.5} parent=35 // pred_region
          %v313 = vld [vmem:[#allocation2] sm:$0x1]
          %v314 = vrot.slane %v299, 4
          %v315 = vadd.f32 %v299, %v314
          %v316 = vrot.slane %v315, 2
          %v317 = vadd.f32 %v315, %v316
          %v318 = vrot.slane %v317, 1
          %v319 = vadd.f32 %v317, %v318
          %v320 = vadd.f32 %v313, %v319
          %321 = vst [vmem:[#allocation2] sm:$0x1] %v320
          %v322 = vld [vmem:[#allocation3] sm:$0x1]
          %v323 = vmul.f32 %v299, %v299
          %v324 = vrot.slane %v323, 4
          %v325 = vadd.f32 %v323, %v324
          %v326 = vrot.slane %v325, 2
          %v327 = vadd.f32 %v325, %v326
          %v328 = vrot.slane %v327, 1
          %v329 = vadd.f32 %v327, %v328
          %v330 = vadd.f32 %v322, %v329
          %331 = vst [vmem:[#allocation3] sm:$0x1] %v330
        $region56: #{generator_forward.5} parent=35 // pred_fallthru
          _
        %p332 = scmp.eq.s32.totalorder %s21, 1
        // Predicated region
        $region57: #{generator_forward.5} parent=35 // pred_check
          %p333 = pneg %p332
        $region58: #{generator_forward.5} parent=35 // pred_check_branch
          %335 = sbr.rel (%p333) target = $region60
        $region59: #{generator_forward.5} parent=35 // pred_region
          %v336 = vld [vmem:[#allocation2] sm:$0x1]
          %v337 = vmul.f32 %v336, 0.125
          %v338 = vld [vmem:[#allocation3] sm:$0x1]
          %v339 = vmul.f32 %v338, 0.125
          %v340 = vmul.f32 %v337, %v337
          %v341 = vsub.f32 %v339, %v340
          %v342 = vmax.f32 %v341, 0.0
          %v343 = vadd.f32 %v342, 1e-05
          %v344 = vrsqrt.pop %v343
          %v345 = vmul.f32 %v344, %v343
          %v346 = vmul.f32 %v345, %v344
          %v347 = vmul.f32 0.5, %v346
          %v348 = vsub.f32 1.5, %v347
          %v349 = vmul.f32 %v344, %v348
          %vm350 = vweird.f32 %v343
          %vm351 = vweird.f32 %v344
          %vm352 = vmor %vm350, %vm351
          %v353 = vsel %vm352, %v344, %v349
          %v355 = vperm.slane %v337, 0
          %v357 = vsub.f32 %v299, %v355
          %v359 = vperm.slane %v353, 0
          %v361 = vmul.f32 %v357, %v359
          %v362 = vld [vmem:[#allocation6] sm:$0x1]
          %v364 = vperm.slane %v362, 0
          %v366 = vmul.f32 %v361, %v364
          %v367 = vld [vmem:[#allocation8] sm:$0x1]
          %v369 = vperm.slane %v367, 0
          %v371 = vadd.f32 %v366, %v369
          %v372 = vmax.f32 %v371, 0.0
          %v373 = vpack.c.bf16 %v372, %v372
          %374 = vst [vmem:[%s250] sm:$0xf] %v373
        $region60: #{generator_forward.5} parent=35 // pred_fallthru
          _
        %p375 = scmp.lt.s32.totalorder %s22, 0
        %s376 = scalar_select %p375, %s22, 0
        %s377 = smul.addr %s376, 4
        %s378 = scalar_lea.vmem %s4, %s377
        // Predicated region
        $region61: #{generator_forward.5} parent=35 // pred_check
          %p379 = pneg %p136
        $region62: #{generator_forward.5} parent=35 // pred_check_branch
          %381 = sbr.rel (%p379) target = $region64
        $region63: #{generator_forward.5} parent=35 // pred_region
          _
        $region64: #{generator_forward.5} parent=35 // pred_fallthru
          _
        // Predicated region
        $region65: #{generator_forward.5} parent=35 // pred_check
          %p382 = pneg %p136
        $region66: #{generator_forward.5} parent=35 // pred_check_branch
          %384 = sbr.rel (%p382) target = $region68
        $region67: #{generator_forward.5} parent=35 // pred_region
          %p385 = scmp.lt.s32.totalorder %s22, 0
          %s386 = scalar_select %p385, %s22, 0
          %s387 = smul.addr %s386, 4
          %s388 = scalar_lea.vmem %s4, %s387
        $region68: #{generator_forward.5} parent=35 // pred_fallthru
          _
      $region36: #{generator_forward.5} parent=5 // pred_fallthru
        _
      %p389 = scmp.le.s32.totalorder 2, %s12
      // Predicated region
      $region69: #{generator_forward.5} parent=5 // pred_check
        %p390 = pneg %p389
      $region70: #{generator_forward.5} parent=5 // pred_check_branch
        %392 = sbr.rel (%p390) target = $region72
      $region71: #{generator_forward.5} parent=5 // pred_region
        %s393 = ssub.s32 %s12, 2
      $region72: #{generator_forward.5} parent=5 // pred_fallthru
        _
    $region6: #{generator_forward.5} parent=1 // loop_footer
      %s16 = sadd.s32 1, %s12
    $region7: #{generator_forward.5} parent=1 // loop_footer_branch
      %11 = sbr.rel target = $region3
    $region8: #{generator_forward.5} parent=1 // loop_exit
      _
    %394 = vsyncpa [#allocation5], 1
    %s395 = scalar_lea.sflag [#allocation5], 1
    %396 = vsyncpa %s395, 1
    %397 = vsyncpa [#allocation7], 1

// kernel: generator_forward.6
$region0: #{generator_forward.6}
  #allocation0 [shape = 'u32[]', space=smem, size = 0x4, offset = 0x4, fixed_abs, tag = 'smem constant byte address 0x4 - core index']
  #allocation1 [shape = 'u32[72,128]{1,0:T(1,128)}', space=vmem, size = 0x9000, scoped, tag = 'internal scratch']
  #allocation2 [shape = 'f32[1,128]{1,0:T(1,128)}', space=vmem, size = 0x200, scoped, tag = 'scratch operand']
  #allocation3 [shape = 'f32[1,128]{1,0:T(1,128)}', space=vmem, size = 0x200, scoped, tag = 'scratch operand']
  %s0 = inlined_call_operand.vmem [shape: bf16[32,1024], index: 0, kind: input, shape index: {}]
  %s1 = inlined_call_operand.hbm [shape: bf16[1024,128], index: 1, kind: input, shape index: {}]
  %s2 = inlined_call_operand.hbm [shape: f32[1,128], index: 2, kind: input, shape index: {}]
  %s3 = inlined_call_operand.hbm [shape: f32[1,128], index: 3, kind: input, shape index: {}]
  %s4 = inlined_call_operand.vmem [shape: bf16[32,128], index: 4, kind: output, shape index: {}]
  %s5 = sld [smem:[#allocation0]]
  $region73: #{generator_forward.6} parent=0
    _
  %s7 = ssub.s32 1, %s5
  %s8 = scalar_select 0, %s7, %s5
  $region1: #{generator_forward.6} parent=0
    #allocation4 [shape = 'u8[262144]{0}', space=vmem, size = 0x40000, scoped, tag = 'input window, operand 1, single buffered']
    #allocation5 [shape = 's32[2]{0}', space=sflag, size = 0x8, scoped, tag = 'scoped memory for generator_forward.6']
    #allocation6 [shape = 'u8[512]{0}', space=vmem, size = 0x400, scoped, tag = 'input window, operand 2, single buffered']
    #allocation7 [shape = 's32[1]{0}', space=sflag, size = 0x4, scoped, tag = 'scoped memory for generator_forward.6']
    #allocation8 [shape = 'u8[512]{0}', space=vmem, size = 0x400, scoped, tag = 'input window, operand 3, single buffered']
    %9 = vsyncpa [#allocation5], 0
    %10 = vsyncpa [#allocation7], 0
    loop: start=0, step=1, limit=4
    $region2: #{generator_forward.6} parent=1 // loop_pre_header
      _
    $region3: #{generator_forward.6} parent=1 // loop_header
      %s12 = sphi 0, %s16
      %p13 = scmp.ge.s32.totalorder %s12, 4
      %s19 = sphi 0, %s31
      %s20 = sphi 0, %s27
      %s21 = sphi 0, %s19
      %s22 = sphi 0, %s20
      %s23 = sphi 0, %s21
      %s24 = sphi 0, %s22
      %s34 = sphi 0, %s36
      %s37 = sphi 0, %s34
      %s38 = sphi 0, %s37
      %s54 = sphi 0, %s38
      %s58 = sphi 0, %s58
      %s60 = sphi 0, %s58
      %s61 = sphi 0, %s60
      %s75 = sphi 0, %s61
      %s79 = sphi 0, %s79
      %s81 = sphi 0, %s79
      %s82 = sphi 0, %s81
      %s96 = sphi 0, %s82
      %s100 = sphi 0, %s100
      %s102 = sphi 0, %s100
      %s103 = sphi 0, %s102
      %s117 = sphi 0, %s103
      %s123 = sphi 0, %s125
      %s126 = sphi 0, %s123
      %s127 = sphi 0, %s126
      %s143 = sphi 0, %s127
    $region4: #{generator_forward.6} parent=1 // loop_header_branch
      %15 = sbr.rel (%p13) target = $region8
    $region5: #{generator_forward.6} parent=1 // loop_body
      %s17 = ssub.s32 %s12, 1
      %s18 = ssub.s32 %s12, 2
      %s25 = sadd.s32 1, %s20
      %p26 = scmp.ge.s32.totalorder %s25, 1
      %s27 = scalar_select %p26, 0, %s25
      %s28 = sadd.s32 1, %s19
      %s29 = scalar_select %p26, %s28, %s19
      %p30 = scmp.ge.s32.totalorder %s29, 2
      %s31 = scalar_select %p30, 0, %s29
      %s32 = ssub.s32 %s20, %s27
      %p33 = scmp.eq.s32.totalorder %s32, 0
      %s35 = sadd.s32 %s34, 1
      %s36 = scalar_select %p33, %s34, %s35
      %p39 = pneg %p33
      %p40 = scmp.eq.s32.totalorder %s12, 1
      %p41 = por %p39, %p40
      %p42 = scmp.ne.s32.totalorder %s34, %s37
      %p43 = scmp.eq.s32.totalorder %s12, 0
      %p44 = por %p42, %p43
      %p45 = scmp.ne.s32.totalorder %s34, %s37
      %p46 = scmp.eq.s32.totalorder %s17, 1
      %p47 = por %p45, %p46
      %p48 = scmp.ne.s32.totalorder %s37, %s38
      %p49 = scmp.eq.s32.totalorder %s17, 0
      %p50 = por %p48, %p49
      %p51 = scmp.ne.s32.totalorder %s37, %s38
      %p52 = scmp.eq.s32.totalorder %s18, 1
      %p53 = por %p51, %p52
      %p55 = scmp.ne.s32.totalorder %s38, %s54
      %p56 = scmp.eq.s32.totalorder %s18, 0
      %p57 = por %p55, %p56
      %s59 = sadd.s32 %s58, 1
      %p62 = scmp.eq.s32.totalorder %s12, 1
      %p63 = scmp.ne.s32.totalorder %s58, %s60
      %p64 = scmp.eq.s32.totalorder %s12, 0
      %p65 = por %p63, %p64
      %p66 = scmp.ne.s32.totalorder %s58, %s60
      %p67 = scmp.eq.s32.totalorder %s17, 1
      %p68 = por %p66, %p67
      %p69 = scmp.ne.s32.totalorder %s60, %s61
      %p70 = scmp.eq.s32.totalorder %s17, 0
      %p71 = por %p69, %p70
      %p72 = scmp.ne.s32.totalorder %s60, %s61
      %p73 = scmp.eq.s32.totalorder %s18, 1
      %p74 = por %p72, %p73
      %p76 = scmp.ne.s32.totalorder %s61, %s75
      %p77 = scmp.eq.s32.totalorder %s18, 0
      %p78 = por %p76, %p77
      %s80 = sadd.s32 %s79, 1
      %p83 = scmp.eq.s32.totalorder %s12, 1
      %p84 = scmp.ne.s32.totalorder %s79, %s81
      %p85 = scmp.eq.s32.totalorder %s12, 0
      %p86 = por %p84, %p85
      %p87 = scmp.ne.s32.totalorder %s79, %s81
      %p88 = scmp.eq.s32.totalorder %s17, 1
      %p89 = por %p87, %p88
      %p90 = scmp.ne.s32.totalorder %s81, %s82
      %p91 = scmp.eq.s32.totalorder %s17, 0
      %p92 = por %p90, %p91
      %p93 = scmp.ne.s32.totalorder %s81, %s82
      %p94 = scmp.eq.s32.totalorder %s18, 1
      %p95 = por %p93, %p94
      %p97 = scmp.ne.s32.totalorder %s82, %s96
      %p98 = scmp.eq.s32.totalorder %s18, 0
      %p99 = por %p97, %p98
      %s101 = sadd.s32 %s100, 1
      %p104 = scmp.eq.s32.totalorder %s12, 1
      %p105 = scmp.ne.s32.totalorder %s100, %s102
      %p106 = scmp.eq.s32.totalorder %s12, 0
      %p107 = por %p105, %p106
      %p108 = scmp.ne.s32.totalorder %s100, %s102
      %p109 = scmp.eq.s32.totalorder %s17, 1
      %p110 = por %p108, %p109
      %p111 = scmp.ne.s32.totalorder %s102, %s103
      %p112 = scmp.eq.s32.totalorder %s17, 0
      %p113 = por %p111, %p112
      %p114 = scmp.ne.s32.totalorder %s102, %s103
      %p115 = scmp.eq.s32.totalorder %s18, 1
      %p116 = por %p114, %p115
      %p118 = scmp.ne.s32.totalorder %s103, %s117
      %p119 = scmp.eq.s32.totalorder %s18, 0
      %p120 = por %p118, %p119
      %s121 = ssub.s32 %s20, %s27
      %p122 = scmp.eq.s32.totalorder %s121, 0
      %s124 = sadd.s32 %s123, 1
      %s125 = scalar_select %p122, %s123, %s124
      %p128 = pneg %p122
      %p129 = scmp.eq.s32.totalorder %s12, 1
      %p130 = por %p128, %p129
      %p131 = scmp.ne.s32.totalorder %s123, %s126
      %p132 = scmp.eq.s32.totalorder %s12, 0
      %p133 = por %p131, %p132
      %p134 = scmp.ne.s32.totalorder %s123, %s126
      %p135 = scmp.eq.s32.totalorder %s17, 1
      %p136 = por %p134, %p135
      %p137 = scmp.ne.s32.totalorder %s126, %s127
      %p138 = scmp.eq.s32.totalorder %s17, 0
      %p139 = por %p137, %p138
      %p140 = scmp.ne.s32.totalorder %s126, %s127
      %p141 = scmp.eq.s32.totalorder %s18, 1
      %p142 = por %p140, %p141
      %p144 = scmp.ne.s32.totalorder %s127, %s143
      %p145 = scmp.eq.s32.totalorder %s18, 0
      %p146 = por %p144, %p145
      %p147 = scmp.le.s32.totalorder 1, %s12
      %p148 = scmp.lt.s32.totalorder %s12, 3
      %p149 = pnand %p147, %p148
      %p150 = pneg %p149
      // Predicated region
      $region9: #{generator_forward.6} parent=5 // pred_check
        _
      $region10: #{generator_forward.6} parent=5 // pred_check_branch
        %152 = sbr.rel (%p149) target = $region12
      $region11: #{generator_forward.6} parent=5 // pred_region
        %s153 = ssub.s32 %s12, 1
        // Predicated region
        $region13: #{generator_forward.6} parent=11 // pred_check
          %p154 = pneg %p50
        $region14: #{generator_forward.6} parent=11 // pred_check_branch
          %156 = sbr.rel (%p154) target = $region16
        $region15: #{generator_forward.6} parent=11 // pred_region
          %s157 = smul.u32 4, %s22
          %p158 = scmp.lt.s32.totalorder %s157, 3
          %s159 = scalar_select %p158, %s157, 3
          %s160 = smul.addr %s159, 8
          %s161 = smul.addr %s160, 4
          %s162 = scalar_lea.vmem %s0, %s161
          %s163 = smul.u32 4, %s22
        $region16: #{generator_forward.6} parent=11 // pred_fallthru
          _
        // Predicated region
        $region17: #{generator_forward.6} parent=11 // pred_check
          %p164 = pneg %p71
        $region18: #{generator_forward.6} parent=11 // pred_check_branch
          %166 = sbr.rel (%p164) target = $region20
        $region19: #{generator_forward.6} parent=11 // pred_region
          %168 = vsyncadd [#allocation5], 0
          %s169 = sshll.u32 %s1, 4
          %s170 = int_to_ptr.hbm [resolvable:$true] %s169
          %s171 = sshll.u32 [#allocation4], 4
          %s172 = int_to_ptr.vmem [resolvable:$true] %s171
          %177 = dma.hbm_to_vmem [thread:$0]  %s170, 8192, %s172, [#allocation5], 64, 64, 4
        $region20: #{generator_forward.6} parent=11 // pred_fallthru
          _
        // Predicated region
        $region21: #{generator_forward.6} parent=11 // pred_check
          %p178 = pneg %p92
        $region22: #{generator_forward.6} parent=11 // pred_check_branch
          %180 = sbr.rel (%p178) target = $region24
        $region23: #{generator_forward.6} parent=11 // pred_region
          %182 = vsyncadd [#allocation7], 0
          %s184 = sshll.u32 %s2, 4
          %s185 = int_to_ptr.hbm [resolvable:$true] %s184
          %s186 = sshll.u32 [#allocation6], 4
          %s187 = int_to_ptr.vmem [resolvable:$true] %s186
          %189 = dma.hbm_to_vmem [thread:$0]  %s185, 16, %s187, [#allocation7]
        $region24: #{generator_forward.6} parent=11 // pred_fallthru
          _
        // Predicated region
        $region25: #{generator_forward.6} parent=11 // pred_check
          %p190 = pneg %p113
        $region26: #{generator_forward.6} parent=11 // pred_check_branch
          %192 = sbr.rel (%p190) target = $region28
        $region27: #{generator_forward.6} parent=11 // pred_region
          %194 = vsyncadd [#allocation7], 0
          %s196 = sshll.u32 %s3, 4
          %s197 = int_to_ptr.hbm [resolvable:$true] %s196
          %s198 = sshll.u32 [#allocation8], 4
          %s199 = int_to_ptr.vmem [resolvable:$true] %s198
          %201 = dma.hbm_to_vmem [thread:$0]  %s197, 16, %s199, [#allocation7]
        $region28: #{generator_forward.6} parent=11 // pred_fallthru
          _
      $region12: #{generator_forward.6} parent=5 // pred_fallthru
        _
      %p202 = scmp.lt.s32.totalorder %s12, 2
      // Predicated region
      $region29: #{generator_forward.6} parent=5 // pred_check
        %p203 = pneg %p202
      $region30: #{generator_forward.6} parent=5 // pred_check_branch
        %205 = sbr.rel (%p203) target = $region32
      $region31: #{generator_forward.6} parent=5 // pred_region
        _
      $region32: #{generator_forward.6} parent=5 // pred_fallthru
        _
      %p206 = scmp.le.s32.totalorder 1, %s12
      %p207 = scmp.lt.s32.totalorder %s12, 3
      %p208 = pnand %p206, %p207
      %p209 = pneg %p208
      // Predicated region
      $region33: #{generator_forward.6} parent=5 // pred_check
        _
      $region34: #{generator_forward.6} parent=5 // pred_check_branch
        %211 = sbr.rel (%p208) target = $region36
      $region35: #{generator_forward.6} parent=5 // pred_region
        %s212 = ssub.s32 %s12, 1
        // Predicated region
        $region37: #{generator_forward.6} parent=35 // pred_check
          %p213 = pneg %p71
        $region38: #{generator_forward.6} parent=35 // pred_check_branch
          %215 = sbr.rel (%p213) target = $region40
        $region39: #{generator_forward.6} parent=35 // pred_region
          %217 = dma.done [#allocation5], 8192
        $region40: #{generator_forward.6} parent=35 // pred_fallthru
          _
        // Predicated region
        $region41: #{generator_forward.6} parent=35 // pred_check
          %p218 = pneg %p92
        $region42: #{generator_forward.6} parent=35 // pred_check_branch
          %220 = sbr.rel (%p218) target = $region44
        $region43: #{generator_forward.6} parent=35 // pred_region
          %222 = dma.done [#allocation7], 16
        $region44: #{generator_forward.6} parent=35 // pred_fallthru
          _
        // Predicated region
        $region45: #{generator_forward.6} parent=35 // pred_check
          %p223 = pneg %p113
        $region46: #{generator_forward.6} parent=35 // pred_check_branch
          %225 = sbr.rel (%p223) target = $region48
        $region47: #{generator_forward.6} parent=35 // pred_region
          %227 = dma.done [#allocation7], 16
        $region48: #{generator_forward.6} parent=35 // pred_fallthru
          _
        %s228 = smul.u32 4, %s22
        %p229 = scmp.lt.s32.totalorder %s228, 3
        %s230 = scalar_select %p229, %s228, 3
        %s231 = smul.addr %s230, 8
        %s232 = smul.addr %s231, 4
        %s233 = scalar_lea.vmem %s0, %s232
        %p234 = pneg %p50
        %p235 = pneg %p47
        %p236 = pneg %p71
        %p237 = pneg %p68
        %p238 = pneg %p92
        %p239 = pneg %p89
        %p240 = pneg %p113
        %p241 = pneg %p110
        %p242 = pneg %p139
        %p243 = pneg %p136
        %s244 = smul.u32 4, %s22
        %p245 = scmp.lt.s32.totalorder %s244, 3
        %s246 = scalar_select %p245, %s244, 3
        %s247 = smul.addr %s246, 4
        %s248 = scalar_lea.vmem %s4, %s247
        %s249 = smul.u32 4, %s22
        %p250 = scmp.lt.s32.totalorder %s249, 3
        %s251 = scalar_select %p250, %s249, 3
        %s252 = smul.addr %s251, 8
        %s253 = smul.addr %s252, 4
        %s254 = scalar_lea.vmem %s0, %s253
        %s255 = smul.u32 4, %s22
        %s256 = smul.u32 4, %s22
        %p257 = scmp.lt.s32.totalorder %s256, 3
        %s258 = scalar_select %p257, %s256, 3
        %s259 = smul.addr %s258, 4
        %s260 = scalar_lea.vmem %s4, %s259
        %s261 = smul.u32 4, %s22
        %v262 = vld [vmem:[%s254] sm:$0xff]
        %v263 = vld [vmem:[%s254 + $0x8] sm:$0xff]
        %v264 = vld [vmem:[%s254 + $0x10] sm:$0xff]
        %v265 = vld [vmem:[%s254 + $0x18] sm:$0xff]
        %v266 = vld [vmem:[%s254 + $0x20] sm:$0xff]
        %v267 = vld [vmem:[%s254 + $0x28] sm:$0xff]
        %v268 = vld [vmem:[%s254 + $0x30] sm:$0xff]
        %v269 = vld [vmem:[%s254 + $0x38] sm:$0xff]
        %v270 = vld [vmem:[%s254 + $0x40] sm:$0xff]
        %v271 = vld [vmem:[%s254 + $0x48] sm:$0xff]
        %v272 = vld [vmem:[%s254 + $0x50] sm:$0xff]
        %v273 = vld [vmem:[%s254 + $0x58] sm:$0xff]
        %v274 = vld [vmem:[%s254 + $0x60] sm:$0xff]
        %v275 = vld [vmem:[%s254 + $0x68] sm:$0xff]
        %v276 = vld [vmem:[%s254 + $0x70] sm:$0xff]
        %v277 = vld [vmem:[%s254 + $0x78] sm:$0xff]
        %v278 = vld [vmem:[#allocation4] sm:$0xf]
        %v279 = vld [vmem:[#allocation4 + $0x4] sm:$0xf]
        %v280 = vld [vmem:[#allocation4 + $0x8] sm:$0xf]
        %v281 = vld [vmem:[#allocation4 + $0xc] sm:$0xf]
        %v282 = vld [vmem:[#allocation4 + $0x10] sm:$0xf]
        %v283 = vld [vmem:[#allocation4 + $0x14] sm:$0xf]
        %v284 = vld [vmem:[#allocation4 + $0x18] sm:$0xf]
        %v285 = vld [vmem:[#allocation4 + $0x1c] sm:$0xf]
        %v286 = vld [vmem:[#allocation4 + $0x20] sm:$0xf]
        %v287 = vld [vmem:[#allocation4 + $0x24] sm:$0xf]
        %v288 = vld [vmem:[#allocation4 + $0x28] sm:$0xf]
        %v289 = vld [vmem:[#allocation4 + $0x2c] sm:$0xf]
        %v290 = vld [vmem:[#allocation4 + $0x30] sm:$0xf]
        %v291 = vld [vmem:[#allocation4 + $0x34] sm:$0xf]
        %v292 = vld [vmem:[#allocation4 + $0x38] sm:$0xf]
        %v293 = vld [vmem:[#allocation4 + $0x3c] sm:$0xf]
        %v294 = vld [vmem:[#allocation4 + $0x40] sm:$0xf]
        %v295 = vld [vmem:[#allocation4 + $0x44] sm:$0xf]
        %v296 = vld [vmem:[#allocation4 + $0x48] sm:$0xf]
        %v297 = vld [vmem:[#allocation4 + $0x4c] sm:$0xf]
        %v298 = vld [vmem:[#allocation4 + $0x50] sm:$0xf]
        %v299 = vld [vmem:[#allocation4 + $0x54] sm:$0xf]
        %v300 = vld [vmem:[#allocation4 + $0x58] sm:$0xf]
        %v301 = vld [vmem:[#allocation4 + $0x5c] sm:$0xf]
        %v302 = vld [vmem:[#allocation4 + $0x60] sm:$0xf]
        %v303 = vld [vmem:[#allocation4 + $0x64] sm:$0xf]
        %v304 = vld [vmem:[#allocation4 + $0x68] sm:$0xf]
        %v305 = vld [vmem:[#allocation4 + $0x6c] sm:$0xf]
        %v306 = vld [vmem:[#allocation4 + $0x70] sm:$0xf]
        %v307 = vld [vmem:[#allocation4 + $0x74] sm:$0xf]
        %v308 = vld [vmem:[#allocation4 + $0x78] sm:$0xf]
        %v309 = vld [vmem:[#allocation4 + $0x7c] sm:$0xf]
        %v310 = vld [vmem:[#allocation4 + $0x80] sm:$0xf]
        %v311 = vld [vmem:[#allocation4 + $0x84] sm:$0xf]
        %v312 = vld [vmem:[#allocation4 + $0x88] sm:$0xf]
        %v313 = vld [vmem:[#allocation4 + $0x8c] sm:$0xf]
        %v314 = vld [vmem:[#allocation4 + $0x90] sm:$0xf]
        %v315 = vld [vmem:[#allocation4 + $0x94] sm:$0xf]
        %v316 = vld [vmem:[#allocation4 + $0x98] sm:$0xf]
        %v317 = vld [vmem:[#allocation4 + $0x9c] sm:$0xf]
        %v318 = vld [vmem:[#allocation4 + $0xa0] sm:$0xf]
        %v319 = vld [vmem:[#allocation4 + $0xa4] sm:$0xf]
        %v320 = vld [vmem:[#allocation4 + $0xa8] sm:$0xf]
        %v321 = vld [vmem:[#allocation4 + $0xac] sm:$0xf]
        %v322 = vld [vmem:[#allocation4 + $0xb0] sm:$0xf]
        %v323 = vld [vmem:[#allocation4 + $0xb4] sm:$0xf]
        %v324 = vld [vmem:[#allocation4 + $0xb8] sm:$0xf]
        %v325 = vld [vmem:[#allocation4 + $0xbc] sm:$0xf]
        %v326 = vld [vmem:[#allocation4 + $0xc0] sm:$0xf]
        %v327 = vld [vmem:[#allocation4 + $0xc4] sm:$0xf]
        %v328 = vld [vmem:[#allocation4 + $0xc8] sm:$0xf]
        %v329 = vld [vmem:[#allocation4 + $0xcc] sm:$0xf]
        %v330 = vld [vmem:[#allocation4 + $0xd0] sm:$0xf]
        %v331 = vld [vmem:[#allocation4 + $0xd4] sm:$0xf]
        %v332 = vld [vmem:[#allocation4 + $0xd8] sm:$0xf]
        %v333 = vld [vmem:[#allocation4 + $0xdc] sm:$0xf]
        %v334 = vld [vmem:[#allocation4 + $0xe0] sm:$0xf]
        %v335 = vld [vmem:[#allocation4 + $0xe4] sm:$0xf]
        %v336 = vld [vmem:[#allocation4 + $0xe8] sm:$0xf]
        %v337 = vld [vmem:[#allocation4 + $0xec] sm:$0xf]
        %v338 = vld [vmem:[#allocation4 + $0xf0] sm:$0xf]
        %v339 = vld [vmem:[#allocation4 + $0xf4] sm:$0xf]
        %v340 = vld [vmem:[#allocation4 + $0xf8] sm:$0xf]
        %v341 = vld [vmem:[#allocation4 + $0xfc] sm:$0xf]
        %v342 = vld [vmem:[#allocation4 + $0x100] sm:$0xf]
        %v343 = vld [vmem:[#allocation4 + $0x104] sm:$0xf]
        %v344 = vld [vmem:[#allocation4 + $0x108] sm:$0xf]
        %v345 = vld [vmem:[#allocation4 + $0x10c] sm:$0xf]
        %v346 = vld [vmem:[#allocation4 + $0x110] sm:$0xf]
        %v347 = vld [vmem:[#allocation4 + $0x114] sm:$0xf]
        %v348 = vld [vmem:[#allocation4 + $0x118] sm:$0xf]
        %v349 = vld [vmem:[#allocation4 + $0x11c] sm:$0xf]
        %v350 = vld [vmem:[#allocation4 + $0x120] sm:$0xf]
        %v351 = vld [vmem:[#allocation4 + $0x124] sm:$0xf]
        %v352 = vld [vmem:[#allocation4 + $0x128] sm:$0xf]
        %v353 = vld [vmem:[#allocation4 + $0x12c] sm:$0xf]
        %v354 = vld [vmem:[#allocation4 + $0x130] sm:$0xf]
        %v355 = vld [vmem:[#allocation4 + $0x134] sm:$0xf]
        %v356 = vld [vmem:[#allocation4 + $0x138] sm:$0xf]
        %v357 = vld [vmem:[#allocation4 + $0x13c] sm:$0xf]
        %v358 = vld [vmem:[#allocation4 + $0x140] sm:$0xf]
        %v359 = vld [vmem:[#allocation4 + $0x144] sm:$0xf]
        %v360 = vld [vmem:[#allocation4 + $0x148] sm:$0xf]
        %v361 = vld [vmem:[#allocation4 + $0x14c] sm:$0xf]
        %v362 = vld [vmem:[#allocation4 + $0x150] sm:$0xf]
        %v363 = vld [vmem:[#allocation4 + $0x154] sm:$0xf]
        %v364 = vld [vmem:[#allocation4 + $0x158] sm:$0xf]
        %v365 = vld [vmem:[#allocation4 + $0x15c] sm:$0xf]
        %v366 = vld [vmem:[#allocation4 + $0x160] sm:$0xf]
        %v367 = vld [vmem:[#allocation4 + $0x164] sm:$0xf]
        %v368 = vld [vmem:[#allocation4 + $0x168] sm:$0xf]
        %v369 = vld [vmem:[#allocation4 + $0x16c] sm:$0xf]
        %v370 = vld [vmem:[#allocation4 + $0x170] sm:$0xf]
        %v371 = vld [vmem:[#allocation4 + $0x174] sm:$0xf]
        %v372 = vld [vmem:[#allocation4 + $0x178] sm:$0xf]
        %v373 = vld [vmem:[#allocation4 + $0x17c] sm:$0xf]
        %v374 = vld [vmem:[#allocation4 + $0x180] sm:$0xf]
        %v375 = vld [vmem:[#allocation4 + $0x184] sm:$0xf]
        %v376 = vld [vmem:[#allocation4 + $0x188] sm:$0xf]
        %v377 = vld [vmem:[#allocation4 + $0x18c] sm:$0xf]
        %v378 = vld [vmem:[#allocation4 + $0x190] sm:$0xf]
        %v379 = vld [vmem:[#allocation4 + $0x194] sm:$0xf]
        %v380 = vld [vmem:[#allocation4 + $0x198] sm:$0xf]
        %v381 = vld [vmem:[#allocation4 + $0x19c] sm:$0xf]
        %v382 = vld [vmem:[#allocation4 + $0x1a0] sm:$0xf]
        %v383 = vld [vmem:[#allocation4 + $0x1a4] sm:$0xf]
        %v384 = vld [vmem:[#allocation4 + $0x1a8] sm:$0xf]
        %v385 = vld [vmem:[#allocation4 + $0x1ac] sm:$0xf]
        %v386 = vld [vmem:[#allocation4 + $0x1b0] sm:$0xf]
        %v387 = vld [vmem:[#allocation4 + $0x1b4] sm:$0xf]
        %v388 = vld [vmem:[#allocation4 + $0x1b8] sm:$0xf]
        %v389 = vld [vmem:[#allocation4 + $0x1bc] sm:$0xf]
        %v390 = vld [vmem:[#allocation4 + $0x1c0] sm:$0xf]
        %v391 = vld [vmem:[#allocation4 + $0x1c4] sm:$0xf]
        %v392 = vld [vmem:[#allocation4 + $0x1c8] sm:$0xf]
        %v393 = vld [vmem:[#allocation4 + $0x1cc] sm:$0xf]
        %v394 = vld [vmem:[#allocation4 + $0x1d0] sm:$0xf]
        %v395 = vld [vmem:[#allocation4 + $0x1d4] sm:$0xf]
        %v396 = vld [vmem:[#allocation4 + $0x1d8] sm:$0xf]
        %v397 = vld [vmem:[#allocation4 + $0x1dc] sm:$0xf]
        %v398 = vld [vmem:[#allocation4 + $0x1e0] sm:$0xf]
        %v399 = vld [vmem:[#allocation4 + $0x1e4] sm:$0xf]
        %v400 = vld [vmem:[#allocation4 + $0x1e8] sm:$0xf]
        %v401 = vld [vmem:[#allocation4 + $0x1ec] sm:$0xf]
        %v402 = vld [vmem:[#allocation4 + $0x1f0] sm:$0xf]
        %v403 = vld [vmem:[#allocation4 + $0x1f4] sm:$0xf]
        %v404 = vld [vmem:[#allocation4 + $0x1f8] sm:$0xf]
        %v405 = vld [vmem:[#allocation4 + $0x1fc] sm:$0xf]
        %v422 = vunpack.c.l.b16 %v262
        %v423 = vunpack.c.h.b16 %v262
        %v424 = vunpack.c.l.b16 %v263
        %v425 = vunpack.c.h.b16 %v263
        %v426 = vunpack.c.l.b16 %v264
        %v427 = vunpack.c.h.b16 %v264
        %v428 = vunpack.c.l.b16 %v265
        %v429 = vunpack.c.h.b16 %v265
        %v430 = vunpack.c.l.b16 %v266
        %v431 = vunpack.c.h.b16 %v266
        %v432 = vunpack.c.l.b16 %v267
        %v433 = vunpack.c.h.b16 %v267
        %v434 = vunpack.c.l.b16 %v268
        %v435 = vunpack.c.h.b16 %v268
        %v436 = vunpack.c.l.b16 %v269
        %v437 = vunpack.c.h.b16 %v269
        %v438 = vunpack.c.l.b16 %v270
        %v439 = vunpack.c.h.b16 %v270
        %v440 = vunpack.c.l.b16 %v271
        %v441 = vunpack.c.h.b16 %v271
        %v442 = vunpack.c.l.b16 %v272
        %v443 = vunpack.c.h.b16 %v272
        %v444 = vunpack.c.l.b16 %v273
        %v445 = vunpack.c.h.b16 %v273
        %v446 = vunpack.c.l.b16 %v274
        %v447 = vunpack.c.h.b16 %v274
        %v448 = vunpack.c.l.b16 %v275
        %v449 = vunpack.c.h.b16 %v275
        %v450 = vunpack.c.l.b16 %v276
        %v451 = vunpack.c.h.b16 %v276
        %v452 = vunpack.c.l.b16 %v277
        %v453 = vunpack.c.h.b16 %v277
        %v454 = vpack.c.b16 %v430, %v422
        %v455 = vpack.c.b16 %v431, %v423
        %v456 = vpack.c.b16 %v432, %v424
        %v457 = vpack.c.b16 %v433, %v425
        %v458 = vpack.c.b16 %v434, %v426
        %v459 = vpack.c.b16 %v435, %v427
        %v460 = vpack.c.b16 %v436, %v428
        %v461 = vpack.c.b16 %v437, %v429
        %v462 = vpack.c.b16 %v446, %v438
        %v463 = vpack.c.b16 %v447, %v439
        %v464 = vpack.c.b16 %v448, %v440
        %v465 = vpack.c.b16 %v449, %v441
        %v466 = vpack.c.b16 %v450, %v442
        %v467 = vpack.c.b16 %v451, %v443
        %v468 = vpack.c.b16 %v452, %v444
        %v469 = vpack.c.b16 %v453, %v445
        %v614 = vunpack.c.l.b16 %v278
        %v615 = vunpack.c.l.b16 %v279
        %v616 = vunpack.c.l.b16 %v280
        %v617 = vunpack.c.l.b16 %v281
        %v618 = vunpack.c.l.b16 %v282
        %v619 = vunpack.c.l.b16 %v283
        %v620 = vunpack.c.l.b16 %v284
        %v621 = vunpack.c.l.b16 %v285
        %v622 = vunpack.c.l.b16 %v286
        %v623 = vunpack.c.l.b16 %v287
        %v624 = vunpack.c.l.b16 %v288
        %v625 = vunpack.c.l.b16 %v289
        %v626 = vunpack.c.l.b16 %v290
        %v627 = vunpack.c.l.b16 %v291
        %v628 = vunpack.c.l.b16 %v292
        %v629 = vunpack.c.l.b16 %v293
        %v630 = vunpack.c.l.b16 %v294
        %v631 = vunpack.c.l.b16 %v295
        %v632 = vunpack.c.l.b16 %v296
        %v633 = vunpack.c.l.b16 %v297
        %v634 = vunpack.c.l.b16 %v298
        %v635 = vunpack.c.l.b16 %v299
        %v636 = vunpack.c.l.b16 %v300
        %v637 = vunpack.c.l.b16 %v301
        %v638 = vunpack.c.l.b16 %v302
        %v639 = vunpack.c.l.b16 %v303
        %v640 = vunpack.c.l.b16 %v304
        %v641 = vunpack.c.l.b16 %v305
        %v642 = vunpack.c.l.b16 %v306
        %v643 = vunpack.c.l.b16 %v307
        %v644 = vunpack.c.l.b16 %v308
        %v645 = vunpack.c.l.b16 %v309
        %v646 = vunpack.c.l.b16 %v310
        %v647 = vunpack.c.l.b16 %v311
        %v648 = vunpack.c.l.b16 %v312
        %v649 = vunpack.c.l.b16 %v313
        %v650 = vunpack.c.l.b16 %v314
        %v651 = vunpack.c.l.b16 %v315
        %v652 = vunpack.c.l.b16 %v316
        %v653 = vunpack.c.l.b16 %v317
        %v654 = vunpack.c.l.b16 %v318
        %v655 = vunpack.c.l.b16 %v319
        %v656 = vunpack.c.l.b16 %v320
        %v657 = vunpack.c.l.b16 %v321
        %v658 = vunpack.c.l.b16 %v322
        %v659 = vunpack.c.l.b16 %v323
        %v660 = vunpack.c.l.b16 %v324
        %v661 = vunpack.c.l.b16 %v325
        %v662 = vunpack.c.l.b16 %v326
        %v663 = vunpack.c.l.b16 %v327
        %v664 = vunpack.c.l.b16 %v328
        %v665 = vunpack.c.l.b16 %v329
        %v666 = vunpack.c.l.b16 %v330
        %v667 = vunpack.c.l.b16 %v331
        %v668 = vunpack.c.l.b16 %v332
        %v669 = vunpack.c.l.b16 %v333
        %v670 = vunpack.c.l.b16 %v334
        %v671 = vunpack.c.l.b16 %v335
        %v672 = vunpack.c.l.b16 %v336
        %v673 = vunpack.c.l.b16 %v337
        %v674 = vunpack.c.l.b16 %v338
        %v675 = vunpack.c.l.b16 %v339
        %v676 = vunpack.c.l.b16 %v340
        %v677 = vunpack.c.l.b16 %v341
        %v678 = vunpack.c.l.b16 %v342
        %v679 = vunpack.c.l.b16 %v343
        %v680 = vunpack.c.l.b16 %v344
        %v681 = vunpack.c.l.b16 %v345
        %v682 = vunpack.c.l.b16 %v346
        %v683 = vunpack.c.l.b16 %v347
        %v684 = vunpack.c.l.b16 %v348
        %v685 = vunpack.c.l.b16 %v349
        %v686 = vunpack.c.l.b16 %v350
        %v687 = vunpack.c.l.b16 %v351
        %v688 = vunpack.c.l.b16 %v352
        %v689 = vunpack.c.l.b16 %v353
        %v690 = vunpack.c.l.b16 %v354
        %v691 = vunpack.c.l.b16 %v355
        %v692 = vunpack.c.l.b16 %v356
        %v693 = vunpack.c.l.b16 %v357
        %v694 = vunpack.c.l.b16 %v358
        %v695 = vunpack.c.l.b16 %v359
        %v696 = vunpack.c.l.b16 %v360
        %v697 = vunpack.c.l.b16 %v361
        %v698 = vunpack.c.l.b16 %v362
        %v699 = vunpack.c.l.b16 %v363
        %v700 = vunpack.c.l.b16 %v364
        %v701 = vunpack.c.l.b16 %v365
        %v702 = vunpack.c.l.b16 %v366
        %v703 = vunpack.c.l.b16 %v367
        %v704 = vunpack.c.l.b16 %v368
        %v705 = vunpack.c.l.b16 %v369
        %v706 = vunpack.c.l.b16 %v370
        %v707 = vunpack.c.l.b16 %v371
        %v708 = vunpack.c.l.b16 %v372
        %v709 = vunpack.c.l.b16 %v373
        %v710 = vunpack.c.l.b16 %v374
        %v711 = vunpack.c.l.b16 %v375
        %v712 = vunpack.c.l.b16 %v376
        %v713 = vunpack.c.l.b16 %v377
        %v714 = vunpack.c.l.b16 %v378
        %v715 = vunpack.c.l.b16 %v379
        %v716 = vunpack.c.l.b16 %v380
        %v717 = vunpack.c.l.b16 %v381
        %v718 = vunpack.c.l.b16 %v382
        %v719 = vunpack.c.l.b16 %v383
        %v720 = vunpack.c.l.b16 %v384
        %v721 = vunpack.c.l.b16 %v385
        %v722 = vunpack.c.l.b16 %v386
        %v723 = vunpack.c.l.b16 %v387
        %v724 = vunpack.c.l.b16 %v388
        %v725 = vunpack.c.l.b16 %v389
        %v726 = vunpack.c.l.b16 %v390
        %v727 = vunpack.c.l.b16 %v391
        %v728 = vunpack.c.l.b16 %v392
        %v729 = vunpack.c.l.b16 %v393
        %v730 = vunpack.c.l.b16 %v394
        %v731 = vunpack.c.l.b16 %v395
        %v732 = vunpack.c.l.b16 %v396
        %v733 = vunpack.c.l.b16 %v397
        %v734 = vunpack.c.l.b16 %v398
        %v735 = vunpack.c.l.b16 %v399
        %v736 = vunpack.c.l.b16 %v400
        %v737 = vunpack.c.l.b16 %v401
        %v738 = vunpack.c.l.b16 %v402
        %v739 = vunpack.c.l.b16 %v403
        %v740 = vunpack.c.l.b16 %v404
        %v741 = vunpack.c.l.b16 %v405
        %v742 = vpack.c.b16 %v615, %v614
        %v743 = vpack.c.b16 %v617, %v616
        %v744 = vpack.c.b16 %v619, %v618
        %v745 = vpack.c.b16 %v621, %v620
        %v746 = vpack.c.b16 %v623, %v622
        %v747 = vpack.c.b16 %v625, %v624
        %v748 = vpack.c.b16 %v627, %v626
        %v749 = vpack.c.b16 %v629, %v628
        %v750 = vpack.c.b16 %v631, %v630
        %v751 = vpack.c.b16 %v633, %v632
        %v752 = vpack.c.b16 %v635, %v634
        %v753 = vpack.c.b16 %v637, %v636
        %v754 = vpack.c.b16 %v639, %v638
        %v755 = vpack.c.b16 %v641, %v640
        %v756 = vpack.c.b16 %v643, %v642
        %v757 = vpack.c.b16 %v645, %v644
        %v758 = vpack.c.b16 %v647, %v646
        %v759 = vpack.c.b16 %v649, %v648
        %v760 = vpack.c.b16 %v651, %v650
        %v761 = vpack.c.b16 %v653, %v652
        %v762 = vpack.c.b16 %v655, %v654
        %v763 = vpack.c.b16 %v657, %v656
        %v764 = vpack.c.b16 %v659, %v658
        %v765 = vpack.c.b16 %v661, %v660
        %v766 = vpack.c.b16 %v663, %v662
        %v767 = vpack.c.b16 %v665, %v664
        %v768 = vpack.c.b16 %v667, %v666
        %v769 = vpack.c.b16 %v669, %v668
        %v770 = vpack.c.b16 %v671, %v670
        %v771 = vpack.c.b16 %v673, %v672
        %v772 = vpack.c.b16 %v675, %v674
        %v773 = vpack.c.b16 %v677, %v676
        %v774 = vpack.c.b16 %v679, %v678
        %v775 = vpack.c.b16 %v681, %v680
        %v776 = vpack.c.b16 %v683, %v682
        %v777 = vpack.c.b16 %v685, %v684
        %v778 = vpack.c.b16 %v687, %v686
        %v779 = vpack.c.b16 %v689, %v688
        %v780 = vpack.c.b16 %v691, %v690
        %v781 = vpack.c.b16 %v693, %v692
        %v782 = vpack.c.b16 %v695, %v694
        %v783 = vpack.c.b16 %v697, %v696
        %v784 = vpack.c.b16 %v699, %v698
        %v785 = vpack.c.b16 %v701, %v700
        %v786 = vpack.c.b16 %v703, %v702
        %v787 = vpack.c.b16 %v705, %v704
        %v788 = vpack.c.b16 %v707, %v706
        %v789 = vpack.c.b16 %v709, %v708
        %v790 = vpack.c.b16 %v711, %v710
        %v791 = vpack.c.b16 %v713, %v712
        %v792 = vpack.c.b16 %v715, %v714
        %v793 = vpack.c.b16 %v717, %v716
        %v794 = vpack.c.b16 %v719, %v718
        %v795 = vpack.c.b16 %v721, %v720
        %v796 = vpack.c.b16 %v723, %v722
        %v797 = vpack.c.b16 %v725, %v724
        %v798 = vpack.c.b16 %v727, %v726
        %v799 = vpack.c.b16 %v729, %v728
        %v800 = vpack.c.b16 %v731, %v730
        %v801 = vpack.c.b16 %v733, %v732
        %v802 = vpack.c.b16 %v735, %v734
        %v803 = vpack.c.b16 %v737, %v736
        %v804 = vpack.c.b16 %v739, %v738
        %v805 = vpack.c.b16 %v741, %v740
        %870 = vmatpush.bf16.msra.mxu0 %v749
        %871 = vmatpush.bf16.msra.mxu0 %v748
        %872 = vmatpush.bf16.msra.mxu0 %v747
        %873 = vmatpush.bf16.msra.mxu0 %v746
        %874 = vmatpush.bf16.msra.mxu0 %v745
        %875 = vmatpush.bf16.msra.mxu0 %v744
        %876 = vmatpush.bf16.msra.mxu0 %v743
        %877 = vmatpush.bf16.msra.mxu0 %v742
        %878 = vmatmul.bf16.gmra.mxu0 %v454
        %v879 = vpop.f32.mrf.mxu0
        %v880 = vadd.f32 0.0, %v879
        %v881 = vpop.f32.mrf.mxu0
        %v882 = vadd.f32 0.0, %v881
        %883 = vmatmul.bf16.gmra.mxu0 %v462
        %v884 = vpop.f32.mrf.mxu0
        %v885 = vadd.f32 0.0, %v884
        %v886 = vpop.f32.mrf.mxu0
        %v887 = vadd.f32 0.0, %v886
        %888 = vdwg.mxu0
        %889 = vmatpush.bf16.msra.mxu0 %v757
        %890 = vmatpush.bf16.msra.mxu0 %v756
        %891 = vmatpush.bf16.msra.mxu0 %v755
        %892 = vmatpush.bf16.msra.mxu0 %v754
        %893 = vmatpush.bf16.msra.mxu0 %v753
        %894 = vmatpush.bf16.msra.mxu0 %v752
        %895 = vmatpush.bf16.msra.mxu0 %v751
        %896 = vmatpush.bf16.msra.mxu0 %v750
        %897 = vmatmul.bf16.gmra.mxu0 %v455
        %v898 = vpop.f32.mrf.mxu0
        %v899 = vadd.f32 %v880, %v898
        %v900 = vpop.f32.mrf.mxu0
        %v901 = vadd.f32 %v882, %v900
        %902 = vmatmul.bf16.gmra.mxu0 %v463
        %v903 = vpop.f32.mrf.mxu0
        %v904 = vadd.f32 %v885, %v903
        %v905 = vpop.f32.mrf.mxu0
        %v906 = vadd.f32 %v887, %v905
        %907 = vdwg.mxu0
        %908 = vmatpush.bf16.msra.mxu0 %v765
        %909 = vmatpush.bf16.msra.mxu0 %v764
        %910 = vmatpush.bf16.msra.mxu0 %v763
        %911 = vmatpush.bf16.msra.mxu0 %v762
        %912 = vmatpush.bf16.msra.mxu0 %v761
        %913 = vmatpush.bf16.msra.mxu0 %v760
        %914 = vmatpush.bf16.msra.mxu0 %v759
        %915 = vmatpush.bf16.msra.mxu0 %v758
        %916 = vmatmul.bf16.gmra.mxu0 %v456
        %v917 = vpop.f32.mrf.mxu0
        %v918 = vadd.f32 %v899, %v917
        %v919 = vpop.f32.mrf.mxu0
        %v920 = vadd.f32 %v901, %v919
        %921 = vmatmul.bf16.gmra.mxu0 %v464
        %v922 = vpop.f32.mrf.mxu0
        %v923 = vadd.f32 %v904, %v922
        %v924 = vpop.f32.mrf.mxu0
        %v925 = vadd.f32 %v906, %v924
        %926 = vdwg.mxu0
        %927 = vmatpush.bf16.msra.mxu0 %v773
        %928 = vmatpush.bf16.msra.mxu0 %v772
        %929 = vmatpush.bf16.msra.mxu0 %v771
        %930 = vmatpush.bf16.msra.mxu0 %v770
        %931 = vmatpush.bf16.msra.mxu0 %v769
        %932 = vmatpush.bf16.msra.mxu0 %v768
        %933 = vmatpush.bf16.msra.mxu0 %v767
        %934 = vmatpush.bf16.msra.mxu0 %v766
        %935 = vmatmul.bf16.gmra.mxu0 %v457
        %v936 = vpop.f32.mrf.mxu0
        %v937 = vadd.f32 %v918, %v936
        %v938 = vpop.f32.mrf.mxu0
        %v939 = vadd.f32 %v920, %v938
        %940 = vmatmul.bf16.gmra.mxu0 %v465
        %v941 = vpop.f32.mrf.mxu0
        %v942 = vadd.f32 %v923, %v941
        %v943 = vpop.f32.mrf.mxu0
        %v944 = vadd.f32 %v925, %v943
        %945 = vdwg.mxu0
        %946 = vmatpush.bf16.msra.mxu0 %v781
        %947 = vmatpush.bf16.msra.mxu0 %v780
        %948 = vmatpush.bf16.msra.mxu0 %v779
        %949 = vmatpush.bf16.msra.mxu0 %v778
        %950 = vmatpush.bf16.msra.mxu0 %v777
        %951 = vmatpush.bf16.msra.mxu0 %v776
        %952 = vmatpush.bf16.msra.mxu0 %v775
        %953 = vmatpush.bf16.msra.mxu0 %v774
        %954 = vmatmul.bf16.gmra.mxu0 %v458
        %v955 = vpop.f32.mrf.mxu0
        %v956 = vadd.f32 %v937, %v955
        %v957 = vpop.f32.mrf.mxu0
        %v958 = vadd.f32 %v939, %v957
        %959 = vmatmul.bf16.gmra.mxu0 %v466
        %v960 = vpop.f32.mrf.mxu0
        %v961 = vadd.f32 %v942, %v960
        %v962 = vpop.f32.mrf.mxu0
        %v963 = vadd.f32 %v944, %v962
        %964 = vdwg.mxu0
        %965 = vmatpush.bf16.msra.mxu0 %v789
        %966 = vmatpush.bf16.msra.mxu0 %v788
        %967 = vmatpush.bf16.msra.mxu0 %v787
        %968 = vmatpush.bf16.msra.mxu0 %v786
        %969 = vmatpush.bf16.msra.mxu0 %v785
        %970 = vmatpush.bf16.msra.mxu0 %v784
        %971 = vmatpush.bf16.msra.mxu0 %v783
        %972 = vmatpush.bf16.msra.mxu0 %v782
        %973 = vmatmul.bf16.gmra.mxu0 %v459
        %v974 = vpop.f32.mrf.mxu0
        %v975 = vadd.f32 %v956, %v974
        %v976 = vpop.f32.mrf.mxu0
        %v977 = vadd.f32 %v958, %v976
        %978 = vmatmul.bf16.gmra.mxu0 %v467
        %v979 = vpop.f32.mrf.mxu0
        %v980 = vadd.f32 %v961, %v979
        %v981 = vpop.f32.mrf.mxu0
        %v982 = vadd.f32 %v963, %v981
        %983 = vdwg.mxu0
        %984 = vmatpush.bf16.msra.mxu0 %v797
        %985 = vmatpush.bf16.msra.mxu0 %v796
        %986 = vmatpush.bf16.msra.mxu0 %v795
        %987 = vmatpush.bf16.msra.mxu0 %v794
        %988 = vmatpush.bf16.msra.mxu0 %v793
        %989 = vmatpush.bf16.msra.mxu0 %v792
        %990 = vmatpush.bf16.msra.mxu0 %v791
        %991 = vmatpush.bf16.msra.mxu0 %v790
        %992 = vmatmul.bf16.gmra.mxu0 %v460
        %v993 = vpop.f32.mrf.mxu0
        %v994 = vadd.f32 %v975, %v993
        %v995 = vpop.f32.mrf.mxu0
        %v996 = vadd.f32 %v977, %v995
        %997 = vmatmul.bf16.gmra.mxu0 %v468
        %v998 = vpop.f32.mrf.mxu0
        %v999 = vadd.f32 %v980, %v998
        %v1000 = vpop.f32.mrf.mxu0
        %v1001 = vadd.f32 %v982, %v1000
        %1002 = vdwg.mxu0
        %1003 = vmatpush.bf16.msra.mxu0 %v805
        %1004 = vmatpush.bf16.msra.mxu0 %v804
        %1005 = vmatpush.bf16.msra.mxu0 %v803
        %1006 = vmatpush.bf16.msra.mxu0 %v802
        %1007 = vmatpush.bf16.msra.mxu0 %v801
        %1008 = vmatpush.bf16.msra.mxu0 %v800
        %1009 = vmatpush.bf16.msra.mxu0 %v799
        %1010 = vmatpush.bf16.msra.mxu0 %v798
        %1011 = vmatmul.bf16.gmra.mxu0 %v461
        %v1012 = vpop.f32.mrf.mxu0
        %v1013 = vadd.f32 %v994, %v1012
        %v1014 = vpop.f32.mrf.mxu0
        %v1015 = vadd.f32 %v996, %v1014
        %1016 = vmatmul.bf16.gmra.mxu0 %v469
        %v1017 = vpop.f32.mrf.mxu0
        %v1018 = vadd.f32 %v999, %v1017
        %v1019 = vpop.f32.mrf.mxu0
        %v1020 = vadd.f32 %v1001, %v1019
        %1021 = vdwg.mxu0
        %p1022 = scmp.eq.s32.totalorder %s21, 0
        %p1023 = scmp.eq.s32.totalorder %s22, 0
        %p1024 = pnand %p1022, %p1023
        %p1025 = pneg %p1024
        // Predicated region
        $region49: #{generator_forward.6} parent=35 // pred_check
          _
        $region50: #{generator_forward.6} parent=35 // pred_check_branch
          %1027 = sbr.rel (%p1024) target = $region52
        $region51: #{generator_forward.6} parent=35 // pred_region
          %1028 = vst [vmem:[#allocation2] sm:$0x1] 0.0
          %1029 = vst [vmem:[#allocation3] sm:$0x1] 0.0
        $region52: #{generator_forward.6} parent=35 // pred_fallthru
          _
        // Predicated region
        $region53: #{generator_forward.6} parent=35 // pred_check
          %p1030 = pneg %p1022
        $region54: #{generator_forward.6} parent=35 // pred_check_branch
          %1032 = sbr.rel (%p1030) target = $region56
        $region55: #{generator_forward.6} parent=35 // pred_region
          %v1033 = vld [vmem:[#allocation2] sm:$0x1]
          %v1034 = vadd.f32 %v1013, %v1015
          %v1035 = vadd.f32 %v1034, %v1018
          %v1036 = vadd.f32 %v1035, %v1020
          %v1037 = vrot.slane %v1036, 4
          %v1038 = vadd.f32 %v1036, %v1037
          %v1039 = vrot.slane %v1038, 2
          %v1040 = vadd.f32 %v1038, %v1039
          %v1041 = vrot.slane %v1040, 1
          %v1042 = vadd.f32 %v1040, %v1041
          %v1043 = vadd.f32 %v1033, %v1042
          %1044 = vst [vmem:[#allocation2] sm:$0x1] %v1043
          %v1045 = vld [vmem:[#allocation3] sm:$0x1]
          %v1046 = vmul.f32 %v1013, %v1013
          %v1047 = vmul.f32 %v1015, %v1015
          %v1048 = vmul.f32 %v1018, %v1018
          %v1049 = vmul.f32 %v1020, %v1020
          %v1050 = vadd.f32 %v1046, %v1047
          %v1051 = vadd.f32 %v1050, %v1048
          %v1052 = vadd.f32 %v1051, %v1049
          %v1053 = vrot.slane %v1052, 4
          %v1054 = vadd.f32 %v1052, %v1053
          %v1055 = vrot.slane %v1054, 2
          %v1056 = vadd.f32 %v1054, %v1055
          %v1057 = vrot.slane %v1056, 1
          %v1058 = vadd.f32 %v1056, %v1057
          %v1059 = vadd.f32 %v1045, %v1058
          %1060 = vst [vmem:[#allocation3] sm:$0x1] %v1059
        $region56: #{generator_forward.6} parent=35 // pred_fallthru
          _
        %p1061 = scmp.eq.s32.totalorder %s21, 1
        // Predicated region
        $region57: #{generator_forward.6} parent=35 // pred_check
          %p1062 = pneg %p1061
        $region58: #{generator_forward.6} parent=35 // pred_check_branch
          %1064 = sbr.rel (%p1062) target = $region60
        $region59: #{generator_forward.6} parent=35 // pred_region
          %v1065 = vld [vmem:[#allocation2] sm:$0x1]
          %v1066 = vmul.f32 %v1065, 0.03125
          %v1067 = vld [vmem:[#allocation3] sm:$0x1]
          %v1068 = vmul.f32 %v1067, 0.03125
          %v1069 = vmul.f32 %v1066, %v1066
          %v1070 = vsub.f32 %v1068, %v1069
          %v1071 = vmax.f32 %v1070, 0.0
          %v1072 = vadd.f32 %v1071, 1e-05
          %v1073 = vrsqrt.pop %v1072
          %v1074 = vmul.f32 %v1073, %v1072
          %v1075 = vmul.f32 %v1074, %v1073
          %v1076 = vmul.f32 0.5, %v1075
          %v1077 = vsub.f32 1.5, %v1076
          %v1078 = vmul.f32 %v1073, %v1077
          %vm1079 = vweird.f32 %v1072
          %vm1080 = vweird.f32 %v1073
          %vm1081 = vmor %vm1079, %vm1080
          %v1082 = vsel %vm1081, %v1073, %v1078
          %v1084 = vperm.slane %v1066, 0
          %v1086 = vsub.f32 %v1013, %v1084
          %v1087 = vsub.f32 %v1015, %v1084
          %v1088 = vsub.f32 %v1018, %v1084
          %v1089 = vsub.f32 %v1020, %v1084
          %v1091 = vperm.slane %v1082, 0
          %v1093 = vmul.f32 %v1086, %v1091
          %v1094 = vmul.f32 %v1087, %v1091
          %v1095 = vmul.f32 %v1088, %v1091
          %v1096 = vmul.f32 %v1089, %v1091
          %v1097 = vld [vmem:[#allocation6] sm:$0x1]
          %v1099 = vperm.slane %v1097, 0
          %v1101 = vmul.f32 %v1093, %v1099
          %v1102 = vmul.f32 %v1094, %v1099
          %v1103 = vmul.f32 %v1095, %v1099
          %v1104 = vmul.f32 %v1096, %v1099
          %v1105 = vld [vmem:[#allocation8] sm:$0x1]
          %v1107 = vperm.slane %v1105, 0
          %v1109 = vadd.f32 %v1101, %v1107
          %v1110 = vadd.f32 %v1102, %v1107
          %v1111 = vadd.f32 %v1103, %v1107
          %v1112 = vadd.f32 %v1104, %v1107
          %v1113 = vmax.f32 %v1109, 0.0
          %v1114 = vmax.f32 %v1110, 0.0
          %v1115 = vmax.f32 %v1111, 0.0
          %v1116 = vmax.f32 %v1112, 0.0
          %v1117 = vpack.c.bf16 %v1113, %v1113
          %v1118 = vpack.c.bf16 %v1114, %v1114
          %v1119 = vpack.c.bf16 %v1115, %v1115
          %v1120 = vpack.c.bf16 %v1116, %v1116
          %1121 = vst [vmem:[%s260] sm:$0xf] %v1117
          %1122 = vst [vmem:[%s260 + $0x4] sm:$0xf] %v1118
          %1123 = vst [vmem:[%s260 + $0x8] sm:$0xf] %v1119
          %1124 = vst [vmem:[%s260 + $0xc] sm:$0xf] %v1120
        $region60: #{generator_forward.6} parent=35 // pred_fallthru
          _
        %s1125 = smul.u32 4, %s22
        %p1126 = scmp.lt.s32.totalorder %s1125, 3
        %s1127 = scalar_select %p1126, %s1125, 3
        %s1128 = smul.addr %s1127, 4
        %s1129 = scalar_lea.vmem %s4, %s1128
        // Predicated region
        $region61: #{generator_forward.6} parent=35 // pred_check
          %p1130 = pneg %p136
        $region62: #{generator_forward.6} parent=35 // pred_check_branch
          %1132 = sbr.rel (%p1130) target = $region64
        $region63: #{generator_forward.6} parent=35 // pred_region
          %s1133 = smul.u32 4, %s22
        $region64: #{generator_forward.6} parent=35 // pred_fallthru
          _
        // Predicated region
        $region65: #{generator_forward.6} parent=35 // pred_check
          %p1134 = pneg %p136
        $region66: #{generator_forward.6} parent=35 // pred_check_branch
          %1136 = sbr.rel (%p1134) target = $region68
        $region67: #{generator_forward.6} parent=35 // pred_region
          %s1137 = smul.u32 4, %s22
          %p1138 = scmp.lt.s32.totalorder %s1137, 3
          %s1139 = scalar_select %p1138, %s1137, 3
          %s1140 = smul.addr %s1139, 4
          %s1141 = scalar_lea.vmem %s4, %s1140
        $region68: #{generator_forward.6} parent=35 // pred_fallthru
          _
      $region36: #{generator_forward.6} parent=5 // pred_fallthru
        _
      %p1142 = scmp.le.s32.totalorder 2, %s12
      // Predicated region
      $region69: #{generator_forward.6} parent=5 // pred_check
        %p1143 = pneg %p1142
      $region70: #{generator_forward.6} parent=5 // pred_check_branch
        %1145 = sbr.rel (%p1143) target = $region72
      $region71: #{generator_forward.6} parent=5 // pred_region
        %s1146 = ssub.s32 %s12, 2
      $region72: #{generator_forward.6} parent=5 // pred_fallthru
        _
    $region6: #{generator_forward.6} parent=1 // loop_footer
      %s16 = sadd.s32 1, %s12
    $region7: #{generator_forward.6} parent=1 // loop_footer_branch
      %11 = sbr.rel target = $region3
    $region8: #{generator_forward.6} parent=1 // loop_exit
      _
    %1147 = vsyncpa [#allocation5], 1
    %s1148 = scalar_lea.sflag [#allocation5], 1
    %1149 = vsyncpa %s1148, 1
    %1150 = vsyncpa [#allocation7], 1

// kernel: generator_forward.7
$region0: #{generator_forward.7}
  #allocation0 [shape = 'u32[]', space=smem, size = 0x4, offset = 0x4, fixed_abs, tag = 'smem constant byte address 0x4 - core index']
  #allocation1 [shape = 'u32[72,128]{1,0:T(1,128)}', space=vmem, size = 0x9000, scoped, tag = 'internal scratch']
  #allocation2 [shape = 'f32[1,128]{1,0:T(1,128)}', space=vmem, size = 0x200, scoped, tag = 'scratch operand']
  #allocation3 [shape = 'f32[1,128]{1,0:T(1,128)}', space=vmem, size = 0x200, scoped, tag = 'scratch operand']
  %s0 = inlined_call_operand.vmem [shape: bf16[128,512], index: 0, kind: input, shape index: {}]
  %s1 = inlined_call_operand.vmem [shape: bf16[512,128], index: 1, kind: input, shape index: {}]
  %s2 = inlined_call_operand.vmem [shape: f32[1,128], index: 2, kind: input, shape index: {}]
  %s3 = inlined_call_operand.vmem [shape: f32[1,128], index: 3, kind: input, shape index: {}]
  %s4 = inlined_call_operand.vmem [shape: bf16[128,128], index: 4, kind: output, shape index: {}]
  %s5 = sld [smem:[#allocation0]]
  $region61: #{generator_forward.7} parent=0
    _
  %s7 = ssub.s32 1, %s5
  %s8 = scalar_select 0, %s7, %s5
  loop: start=0, step=1, limit=4
  $region2: #{generator_forward.7} parent=0 // loop_pre_header
    _
  $region3: #{generator_forward.7} parent=0 // loop_header
    %s10 = sphi 0, %s14
    %p11 = scmp.ge.s32.totalorder %s10, 4
    %s17 = sphi 0, %s29
    %s18 = sphi 0, %s25
    %s19 = sphi 0, %s17
    %s20 = sphi 0, %s18
    %s21 = sphi 0, %s19
    %s22 = sphi 0, %s20
    %s32 = sphi 0, %s34
    %s35 = sphi 0, %s32
    %s36 = sphi 0, %s35
    %s52 = sphi 0, %s36
    %s56 = sphi 0, %s56
    %s58 = sphi 0, %s56
    %s59 = sphi 0, %s58
    %s73 = sphi 0, %s59
    %s77 = sphi 0, %s77
    %s79 = sphi 0, %s77
    %s80 = sphi 0, %s79
    %s94 = sphi 0, %s80
    %s98 = sphi 0, %s98
    %s100 = sphi 0, %s98
    %s101 = sphi 0, %s100
    %s115 = sphi 0, %s101
    %s121 = sphi 0, %s123
    %s124 = sphi 0, %s121
    %s125 = sphi 0, %s124
    %s141 = sphi 0, %s125
  $region4: #{generator_forward.7} parent=0 // loop_header_branch
    %13 = sbr.rel (%p11) target = $region8
  $region5: #{generator_forward.7} parent=0 // loop_body
    %s15 = ssub.s32 %s10, 1
    %s16 = ssub.s32 %s10, 2
    %s23 = sadd.s32 1, %s18
    %p24 = scmp.ge.s32.totalorder %s23, 1
    %s25 = scalar_select %p24, 0, %s23
    %s26 = sadd.s32 1, %s17
    %s27 = scalar_select %p24, %s26, %s17
    %p28 = scmp.ge.s32.totalorder %s27, 2
    %s29 = scalar_select %p28, 0, %s27
    %s30 = ssub.s32 %s18, %s25
    %p31 = scmp.eq.s32.totalorder %s30, 0
    %s33 = sadd.s32 %s32, 1
    %s34 = scalar_select %p31, %s32, %s33
    %p37 = pneg %p31
    %p38 = scmp.eq.s32.totalorder %s10, 1
    %p39 = por %p37, %p38
    %p40 = scmp.ne.s32.totalorder %s32, %s35
    %p41 = scmp.eq.s32.totalorder %s10, 0
    %p42 = por %p40, %p41
    %p43 = scmp.ne.s32.totalorder %s32, %s35
    %p44 = scmp.eq.s32.totalorder %s15, 1
    %p45 = por %p43, %p44
    %p46 = scmp.ne.s32.totalorder %s35, %s36
    %p47 = scmp.eq.s32.totalorder %s15, 0
    %p48 = por %p46, %p47
    %p49 = scmp.ne.s32.totalorder %s35, %s36
    %p50 = scmp.eq.s32.totalorder %s16, 1
    %p51 = por %p49, %p50
    %p53 = scmp.ne.s32.totalorder %s36, %s52
    %p54 = scmp.eq.s32.totalorder %s16, 0
    %p55 = por %p53, %p54
    %s57 = sadd.s32 %s56, 1
    %p60 = scmp.eq.s32.totalorder %s10, 1
    %p61 = scmp.ne.s32.totalorder %s56, %s58
    %p62 = scmp.eq.s32.totalorder %s10, 0
    %p63 = por %p61, %p62
    %p64 = scmp.ne.s32.totalorder %s56, %s58
    %p65 = scmp.eq.s32.totalorder %s15, 1
    %p66 = por %p64, %p65
    %p67 = scmp.ne.s32.totalorder %s58, %s59
    %p68 = scmp.eq.s32.totalorder %s15, 0
    %p69 = por %p67, %p68
    %p70 = scmp.ne.s32.totalorder %s58, %s59
    %p71 = scmp.eq.s32.totalorder %s16, 1
    %p72 = por %p70, %p71
    %p74 = scmp.ne.s32.totalorder %s59, %s73
    %p75 = scmp.eq.s32.totalorder %s16, 0
    %p76 = por %p74, %p75
    %s78 = sadd.s32 %s77, 1
    %p81 = scmp.eq.s32.totalorder %s10, 1
    %p82 = scmp.ne.s32.totalorder %s77, %s79
    %p83 = scmp.eq.s32.totalorder %s10, 0
    %p84 = por %p82, %p83
    %p85 = scmp.ne.s32.totalorder %s77, %s79
    %p86 = scmp.eq.s32.totalorder %s15, 1
    %p87 = por %p85, %p86
    %p88 = scmp.ne.s32.totalorder %s79, %s80
    %p89 = scmp.eq.s32.totalorder %s15, 0
    %p90 = por %p88, %p89
    %p91 = scmp.ne.s32.totalorder %s79, %s80
    %p92 = scmp.eq.s32.totalorder %s16, 1
    %p93 = por %p91, %p92
    %p95 = scmp.ne.s32.totalorder %s80, %s94
    %p96 = scmp.eq.s32.totalorder %s16, 0
    %p97 = por %p95, %p96
    %s99 = sadd.s32 %s98, 1
    %p102 = scmp.eq.s32.totalorder %s10, 1
    %p103 = scmp.ne.s32.totalorder %s98, %s100
    %p104 = scmp.eq.s32.totalorder %s10, 0
    %p105 = por %p103, %p104
    %p106 = scmp.ne.s32.totalorder %s98, %s100
    %p107 = scmp.eq.s32.totalorder %s15, 1
    %p108 = por %p106, %p107
    %p109 = scmp.ne.s32.totalorder %s100, %s101
    %p110 = scmp.eq.s32.totalorder %s15, 0
    %p111 = por %p109, %p110
    %p112 = scmp.ne.s32.totalorder %s100, %s101
    %p113 = scmp.eq.s32.totalorder %s16, 1
    %p114 = por %p112, %p113
    %p116 = scmp.ne.s32.totalorder %s101, %s115
    %p117 = scmp.eq.s32.totalorder %s16, 0
    %p118 = por %p116, %p117
    %s119 = ssub.s32 %s18, %s25
    %p120 = scmp.eq.s32.totalorder %s119, 0
    %s122 = sadd.s32 %s121, 1
    %s123 = scalar_select %p120, %s121, %s122
    %p126 = pneg %p120
    %p127 = scmp.eq.s32.totalorder %s10, 1
    %p128 = por %p126, %p127
    %p129 = scmp.ne.s32.totalorder %s121, %s124
    %p130 = scmp.eq.s32.totalorder %s10, 0
    %p131 = por %p129, %p130
    %p132 = scmp.ne.s32.totalorder %s121, %s124
    %p133 = scmp.eq.s32.totalorder %s15, 1
    %p134 = por %p132, %p133
    %p135 = scmp.ne.s32.totalorder %s124, %s125
    %p136 = scmp.eq.s32.totalorder %s15, 0
    %p137 = por %p135, %p136
    %p138 = scmp.ne.s32.totalorder %s124, %s125
    %p139 = scmp.eq.s32.totalorder %s16, 1
    %p140 = por %p138, %p139
    %p142 = scmp.ne.s32.totalorder %s125, %s141
    %p143 = scmp.eq.s32.totalorder %s16, 0
    %p144 = por %p142, %p143
    %p145 = scmp.le.s32.totalorder 1, %s10
    %p146 = scmp.lt.s32.totalorder %s10, 3
    %p147 = pnand %p145, %p146
    %p148 = pneg %p147
    // Predicated region
    $region9: #{generator_forward.7} parent=5 // pred_check
      _
    $region10: #{generator_forward.7} parent=5 // pred_check_branch
      %150 = sbr.rel (%p147) target = $region12
    $region11: #{generator_forward.7} parent=5 // pred_region
      %s151 = ssub.s32 %s10, 1
      // Predicated region
      $region13: #{generator_forward.7} parent=11 // pred_check
        %p152 = pneg %p48
      $region14: #{generator_forward.7} parent=11 // pred_check_branch
        %154 = sbr.rel (%p152) target = $region16
      $region15: #{generator_forward.7} parent=11 // pred_region
        %s155 = smul.u32 16, %s20
        %p156 = scmp.lt.s32.totalorder %s155, 15
        %s157 = scalar_select %p156, %s155, 15
        %s158 = smul.addr %s157, 4
        %s159 = smul.addr %s158, 4
        %s160 = scalar_lea.vmem %s0, %s159
        %s161 = smul.u32 16, %s20
      $region16: #{generator_forward.7} parent=11 // pred_fallthru
        _
      // Predicated region
      $region17: #{generator_forward.7} parent=11 // pred_check
        %p162 = pneg %p69
      $region18: #{generator_forward.7} parent=11 // pred_check_branch
        %164 = sbr.rel (%p162) target = $region20
      $region19: #{generator_forward.7} parent=11 // pred_region
        _
      $region20: #{generator_forward.7} parent=11 // pred_fallthru
        _
      // Predicated region
      $region21: #{generator_forward.7} parent=11 // pred_check
        %p165 = pneg %p90
      $region22: #{generator_forward.7} parent=11 // pred_check_branch
        %167 = sbr.rel (%p165) target = $region24
      $region23: #{generator_forward.7} parent=11 // pred_region
        _
      $region24: #{generator_forward.7} parent=11 // pred_fallthru
        _
      // Predicated region
      $region25: #{generator_forward.7} parent=11 // pred_check
        %p168 = pneg %p111
      $region26: #{generator_forward.7} parent=11 // pred_check_branch
        %170 = sbr.rel (%p168) target = $region28
      $region27: #{generator_forward.7} parent=11 // pred_region
        _
      $region28: #{generator_forward.7} parent=11 // pred_fallthru
        _
    $region12: #{generator_forward.7} parent=5 // pred_fallthru
      _
    %p171 = scmp.lt.s32.totalorder %s10, 2
    // Predicated region
    $region29: #{generator_forward.7} parent=5 // pred_check
      %p172 = pneg %p171
    $region30: #{generator_forward.7} parent=5 // pred_check_branch
      %174 = sbr.rel (%p172) target = $region32
    $region31: #{generator_forward.7} parent=5 // pred_region
      _
    $region32: #{generator_forward.7} parent=5 // pred_fallthru
      _
    %p175 = scmp.le.s32.totalorder 1, %s10
    %p176 = scmp.lt.s32.totalorder %s10, 3
    %p177 = pnand %p175, %p176
    %p178 = pneg %p177
    // Predicated region
    $region33: #{generator_forward.7} parent=5 // pred_check
      _
    $region34: #{generator_forward.7} parent=5 // pred_check_branch
      %180 = sbr.rel (%p177) target = $region36
    $region35: #{generator_forward.7} parent=5 // pred_region
      %s181 = ssub.s32 %s10, 1
      %s182 = smul.u32 16, %s20
      %p183 = scmp.lt.s32.totalorder %s182, 15
      %s184 = scalar_select %p183, %s182, 15
      %s185 = smul.addr %s184, 4
      %s186 = smul.addr %s185, 4
      %s187 = scalar_lea.vmem %s0, %s186
      %p188 = pneg %p48
      %p189 = pneg %p45
      %p190 = pneg %p69
      %p191 = pneg %p66
      %p192 = pneg %p90
      %p193 = pneg %p87
      %p194 = pneg %p111
      %p195 = pneg %p108
      %p196 = pneg %p137
      %p197 = pneg %p134
      %s198 = smul.u32 16, %s20
      %p199 = scmp.lt.s32.totalorder %s198, 15
      %s200 = scalar_select %p199, %s198, 15
      %s201 = smul.addr %s200, 4
      %s202 = scalar_lea.vmem %s4, %s201
      %s203 = smul.u32 16, %s20
      %p204 = scmp.lt.s32.totalorder %s203, 15
      %s205 = scalar_select %p204, %s203, 15
      %s206 = smul.addr %s205, 4
      %s207 = smul.addr %s206, 4
      %s208 = scalar_lea.vmem %s0, %s207
      %s209 = smul.u32 16, %s20
      %s210 = smul.u32 16, %s20
      %p211 = scmp.lt.s32.totalorder %s210, 15
      %s212 = scalar_select %p211, %s210, 15
      %s213 = smul.addr %s212, 4
      %s214 = scalar_lea.vmem %s4, %s213
      %s215 = smul.u32 16, %s20
      %v216 = vld [vmem:[%s208] sm:$0xff]
      %v217 = vld [vmem:[%s208 + $0x8] sm:$0xff]
      %v218 = vld [vmem:[%s208 + $0x10] sm:$0xff]
      %v219 = vld [vmem:[%s208 + $0x18] sm:$0xff]
      %v220 = vld [vmem:[%s208 + $0x20] sm:$0xff]
      %v221 = vld [vmem:[%s208 + $0x28] sm:$0xff]
      %v222 = vld [vmem:[%s208 + $0x30] sm:$0xff]
      %v223 = vld [vmem:[%s208 + $0x38] sm:$0xff]
      %v224 = vld [vmem:[%s208 + $0x40] sm:$0xff]
      %v225 = vld [vmem:[%s208 + $0x48] sm:$0xff]
      %v226 = vld [vmem:[%s208 + $0x50] sm:$0xff]
      %v227 = vld [vmem:[%s208 + $0x58] sm:$0xff]
      %v228 = vld [vmem:[%s208 + $0x60] sm:$0xff]
      %v229 = vld [vmem:[%s208 + $0x68] sm:$0xff]
      %v230 = vld [vmem:[%s208 + $0x70] sm:$0xff]
      %v231 = vld [vmem:[%s208 + $0x78] sm:$0xff]
      %v232 = vld [vmem:[%s208 + $0x80] sm:$0xff]
      %v233 = vld [vmem:[%s208 + $0x88] sm:$0xff]
      %v234 = vld [vmem:[%s208 + $0x90] sm:$0xff]
      %v235 = vld [vmem:[%s208 + $0x98] sm:$0xff]
      %v236 = vld [vmem:[%s208 + $0xa0] sm:$0xff]
      %v237 = vld [vmem:[%s208 + $0xa8] sm:$0xff]
      %v238 = vld [vmem:[%s208 + $0xb0] sm:$0xff]
      %v239 = vld [vmem:[%s208 + $0xb8] sm:$0xff]
      %v240 = vld [vmem:[%s208 + $0xc0] sm:$0xff]
      %v241 = vld [vmem:[%s208 + $0xc8] sm:$0xff]
      %v242 = vld [vmem:[%s208 + $0xd0] sm:$0xff]
      %v243 = vld [vmem:[%s208 + $0xd8] sm:$0xff]
      %v244 = vld [vmem:[%s208 + $0xe0] sm:$0xff]
      %v245 = vld [vmem:[%s208 + $0xe8] sm:$0xff]
      %v246 = vld [vmem:[%s208 + $0xf0] sm:$0xff]
      %v247 = vld [vmem:[%s208 + $0xf8] sm:$0xff]
      %v248 = vld [vmem:[%s1] sm:$0xf]
      %v249 = vld [vmem:[%s1 + $0x4] sm:$0xf]
      %v250 = vld [vmem:[%s1 + $0x8] sm:$0xf]
      %v251 = vld [vmem:[%s1 + $0xc] sm:$0xf]
      %v252 = vld [vmem:[%s1 + $0x10] sm:$0xf]
      %v253 = vld [vmem:[%s1 + $0x14] sm:$0xf]
      %v254 = vld [vmem:[%s1 + $0x18] sm:$0xf]
      %v255 = vld [vmem:[%s1 + $0x1c] sm:$0xf]
      %v256 = vld [vmem:[%s1 + $0x20] sm:$0xf]
      %v257 = vld [vmem:[%s1 + $0x24] sm:$0xf]
      %v258 = vld [vmem:[%s1 + $0x28] sm:$0xf]
      %v259 = vld [vmem:[%s1 + $0x2c] sm:$0xf]
      %v260 = vld [vmem:[%s1 + $0x30] sm:$0xf]
      %v261 = vld [vmem:[%s1 + $0x34] sm:$0xf]
      %v262 = vld [vmem:[%s1 + $0x38] sm:$0xf]
      %v263 = vld [vmem:[%s1 + $0x3c] sm:$0xf]
      %v264 = vld [vmem:[%s1 + $0x40] sm:$0xf]
      %v265 = vld [vmem:[%s1 + $0x44] sm:$0xf]
      %v266 = vld [vmem:[%s1 + $0x48] sm:$0xf]
      %v267 = vld [vmem:[%s1 + $0x4c] sm:$0xf]
      %v268 = vld [vmem:[%s1 + $0x50] sm:$0xf]
      %v269 = vld [vmem:[%s1 + $0x54] sm:$0xf]
      %v270 = vld [vmem:[%s1 + $0x58] sm:$0xf]
      %v271 = vld [vmem:[%s1 + $0x5c] sm:$0xf]
      %v272 = vld [vmem:[%s1 + $0x60] sm:$0xf]
      %v273 = vld [vmem:[%s1 + $0x64] sm:$0xf]
      %v274 = vld [vmem:[%s1 + $0x68] sm:$0xf]
      %v275 = vld [vmem:[%s1 + $0x6c] sm:$0xf]
      %v276 = vld [vmem:[%s1 + $0x70] sm:$0xf]
      %v277 = vld [vmem:[%s1 + $0x74] sm:$0xf]
      %v278 = vld [vmem:[%s1 + $0x78] sm:$0xf]
      %v279 = vld [vmem:[%s1 + $0x7c] sm:$0xf]
      %v280 = vld [vmem:[%s1 + $0x80] sm:$0xf]
      %v281 = vld [vmem:[%s1 + $0x84] sm:$0xf]
      %v282 = vld [vmem:[%s1 + $0x88] sm:$0xf]
      %v283 = vld [vmem:[%s1 + $0x8c] sm:$0xf]
      %v284 = vld [vmem:[%s1 + $0x90] sm:$0xf]
      %v285 = vld [vmem:[%s1 + $0x94] sm:$0xf]
      %v286 = vld [vmem:[%s1 + $0x98] sm:$0xf]
      %v287 = vld [vmem:[%s1 + $0x9c] sm:$0xf]
      %v288 = vld [vmem:[%s1 + $0xa0] sm:$0xf]
      %v289 = vld [vmem:[%s1 + $0xa4] sm:$0xf]
      %v290 = vld [vmem:[%s1 + $0xa8] sm:$0xf]
      %v291 = vld [vmem:[%s1 + $0xac] sm:$0xf]
      %v292 = vld [vmem:[%s1 + $0xb0] sm:$0xf]
      %v293 = vld [vmem:[%s1 + $0xb4] sm:$0xf]
      %v294 = vld [vmem:[%s1 + $0xb8] sm:$0xf]
      %v295 = vld [vmem:[%s1 + $0xbc] sm:$0xf]
      %v296 = vld [vmem:[%s1 + $0xc0] sm:$0xf]
      %v297 = vld [vmem:[%s1 + $0xc4] sm:$0xf]
      %v298 = vld [vmem:[%s1 + $0xc8] sm:$0xf]
      %v299 = vld [vmem:[%s1 + $0xcc] sm:$0xf]
      %v300 = vld [vmem:[%s1 + $0xd0] sm:$0xf]
      %v301 = vld [vmem:[%s1 + $0xd4] sm:$0xf]
      %v302 = vld [vmem:[%s1 + $0xd8] sm:$0xf]
      %v303 = vld [vmem:[%s1 + $0xdc] sm:$0xf]
      %v304 = vld [vmem:[%s1 + $0xe0] sm:$0xf]
      %v305 = vld [vmem:[%s1 + $0xe4] sm:$0xf]
      %v306 = vld [vmem:[%s1 + $0xe8] sm:$0xf]
      %v307 = vld [vmem:[%s1 + $0xec] sm:$0xf]
      %v308 = vld [vmem:[%s1 + $0xf0] sm:$0xf]
      %v309 = vld [vmem:[%s1 + $0xf4] sm:$0xf]
      %v310 = vld [vmem:[%s1 + $0xf8] sm:$0xf]
      %v311 = vld [vmem:[%s1 + $0xfc] sm:$0xf]
      %v344 = vunpack.c.l.b16 %v216
      %v345 = vunpack.c.h.b16 %v216
      %v346 = vunpack.c.l.b16 %v217
      %v347 = vunpack.c.h.b16 %v217
      %v348 = vunpack.c.l.b16 %v218
      %v349 = vunpack.c.h.b16 %v218
      %v350 = vunpack.c.l.b16 %v219
      %v351 = vunpack.c.h.b16 %v219
      %v352 = vunpack.c.l.b16 %v220
      %v353 = vunpack.c.h.b16 %v220
      %v354 = vunpack.c.l.b16 %v221
      %v355 = vunpack.c.h.b16 %v221
      %v356 = vunpack.c.l.b16 %v222
      %v357 = vunpack.c.h.b16 %v222
      %v358 = vunpack.c.l.b16 %v223
      %v359 = vunpack.c.h.b16 %v223
      %v360 = vunpack.c.l.b16 %v224
      %v361 = vunpack.c.h.b16 %v224
      %v362 = vunpack.c.l.b16 %v225
      %v363 = vunpack.c.h.b16 %v225
      %v364 = vunpack.c.l.b16 %v226
      %v365 = vunpack.c.h.b16 %v226
      %v366 = vunpack.c.l.b16 %v227
      %v367 = vunpack.c.h.b16 %v227
      %v368 = vunpack.c.l.b16 %v228
      %v369 = vunpack.c.h.b16 %v228
      %v370 = vunpack.c.l.b16 %v229
      %v371 = vunpack.c.h.b16 %v229
      %v372 = vunpack.c.l.b16 %v230
      %v373 = vunpack.c.h.b16 %v230
      %v374 = vunpack.c.l.b16 %v231
      %v375 = vunpack.c.h.b16 %v231
      %v376 = vunpack.c.l.b16 %v232
      %v377 = vunpack.c.h.b16 %v232
      %v378 = vunpack.c.l.b16 %v233
      %v379 = vunpack.c.h.b16 %v233
      %v380 = vunpack.c.l.b16 %v234
      %v381 = vunpack.c.h.b16 %v234
      %v382 = vunpack.c.l.b16 %v235
      %v383 = vunpack.c.h.b16 %v235
      %v384 = vunpack.c.l.b16 %v236
      %v385 = vunpack.c.h.b16 %v236
      %v386 = vunpack.c.l.b16 %v237
      %v387 = vunpack.c.h.b16 %v237
      %v388 = vunpack.c.l.b16 %v238
      %v389 = vunpack.c.h.b16 %v238
      %v390 = vunpack.c.l.b16 %v239
      %v391 = vunpack.c.h.b16 %v239
      %v392 = vunpack.c.l.b16 %v240
      %v393 = vunpack.c.h.b16 %v240
      %v394 = vunpack.c.l.b16 %v241
      %v395 = vunpack.c.h.b16 %v241
      %v396 = vunpack.c.l.b16 %v242
      %v397 = vunpack.c.h.b16 %v242
      %v398 = vunpack.c.l.b16 %v243
      %v399 = vunpack.c.h.b16 %v243
      %v400 = vunpack.c.l.b16 %v244
      %v401 = vunpack.c.h.b16 %v244
      %v402 = vunpack.c.l.b16 %v245
      %v403 = vunpack.c.h.b16 %v245
      %v404 = vunpack.c.l.b16 %v246
      %v405 = vunpack.c.h.b16 %v246
      %v406 = vunpack.c.l.b16 %v247
      %v407 = vunpack.c.h.b16 %v247
      %v408 = vpack.c.b16 %v348, %v344
      %v409 = vpack.c.b16 %v349, %v345
      %v410 = vpack.c.b16 %v350, %v346
      %v411 = vpack.c.b16 %v351, %v347
      %v412 = vpack.c.b16 %v356, %v352
      %v413 = vpack.c.b16 %v357, %v353
      %v414 = vpack.c.b16 %v358, %v354
      %v415 = vpack.c.b16 %v359, %v355
      %v416 = vpack.c.b16 %v364, %v360
      %v417 = vpack.c.b16 %v365, %v361
      %v418 = vpack.c.b16 %v366, %v362
      %v419 = vpack.c.b16 %v367, %v363
      %v420 = vpack.c.b16 %v372, %v368
      %v421 = vpack.c.b16 %v373, %v369
      %v422 = vpack.c.b16 %v374, %v370
      %v423 = vpack.c.b16 %v375, %v371
      %v424 = vpack.c.b16 %v380, %v376
      %v425 = vpack.c.b16 %v381, %v377
      %v426 = vpack.c.b16 %v382, %v378
      %v427 = vpack.c.b16 %v383, %v379
      %v428 = vpack.c.b16 %v388, %v384
      %v429 = vpack.c.b16 %v389, %v385
      %v430 = vpack.c.b16 %v390, %v386
      %v431 = vpack.c.b16 %v391, %v387
      %v432 = vpack.c.b16 %v396, %v392
      %v433 = vpack.c.b16 %v397, %v393
      %v434 = vpack.c.b16 %v398, %v394
      %v435 = vpack.c.b16 %v399, %v395
      %v436 = vpack.c.b16 %v404, %v400
      %v437 = vpack.c.b16 %v405, %v401
      %v438 = vpack.c.b16 %v406, %v402
      %v439 = vpack.c.b16 %v407, %v403
      %v536 = vunpack.c.l.b16 %v248
      %v537 = vunpack.c.l.b16 %v249
      %v538 = vunpack.c.l.b16 %v250
      %v539 = vunpack.c.l.b16 %v251
      %v540 = vunpack.c.l.b16 %v252
      %v541 = vunpack.c.l.b16 %v253
      %v542 = vunpack.c.l.b16 %v254
      %v543 = vunpack.c.l.b16 %v255
      %v544 = vunpack.c.l.b16 %v256
      %v545 = vunpack.c.l.b16 %v257
      %v546 = vunpack.c.l.b16 %v258
      %v547 = vunpack.c.l.b16 %v259
      %v548 = vunpack.c.l.b16 %v260
      %v549 = vunpack.c.l.b16 %v261
      %v550 = vunpack.c.l.b16 %v262
      %v551 = vunpack.c.l.b16 %v263
      %v552 = vunpack.c.l.b16 %v264
      %v553 = vunpack.c.l.b16 %v265
      %v554 = vunpack.c.l.b16 %v266
      %v555 = vunpack.c.l.b16 %v267
      %v556 = vunpack.c.l.b16 %v268
      %v557 = vunpack.c.l.b16 %v269
      %v558 = vunpack.c.l.b16 %v270
      %v559 = vunpack.c.l.b16 %v271
      %v560 = vunpack.c.l.b16 %v272
      %v561 = vunpack.c.l.b16 %v273
      %v562 = vunpack.c.l.b16 %v274
      %v563 = vunpack.c.l.b16 %v275
      %v564 = vunpack.c.l.b16 %v276
      %v565 = vunpack.c.l.b16 %v277
      %v566 = vunpack.c.l.b16 %v278
      %v567 = vunpack.c.l.b16 %v279
      %v568 = vunpack.c.l.b16 %v280
      %v569 = vunpack.c.l.b16 %v281
      %v570 = vunpack.c.l.b16 %v282
      %v571 = vunpack.c.l.b16 %v283
      %v572 = vunpack.c.l.b16 %v284
      %v573 = vunpack.c.l.b16 %v285
      %v574 = vunpack.c.l.b16 %v286
      %v575 = vunpack.c.l.b16 %v287
      %v576 = vunpack.c.l.b16 %v288
      %v577 = vunpack.c.l.b16 %v289
      %v578 = vunpack.c.l.b16 %v290
      %v579 = vunpack.c.l.b16 %v291
      %v580 = vunpack.c.l.b16 %v292
      %v581 = vunpack.c.l.b16 %v293
      %v582 = vunpack.c.l.b16 %v294
      %v583 = vunpack.c.l.b16 %v295
      %v584 = vunpack.c.l.b16 %v296
      %v585 = vunpack.c.l.b16 %v297
      %v586 = vunpack.c.l.b16 %v298
      %v587 = vunpack.c.l.b16 %v299
      %v588 = vunpack.c.l.b16 %v300
      %v589 = vunpack.c.l.b16 %v301
      %v590 = vunpack.c.l.b16 %v302
      %v591 = vunpack.c.l.b16 %v303
      %v592 = vunpack.c.l.b16 %v304
      %v593 = vunpack.c.l.b16 %v305
      %v594 = vunpack.c.l.b16 %v306
      %v595 = vunpack.c.l.b16 %v307
      %v596 = vunpack.c.l.b16 %v308
      %v597 = vunpack.c.l.b16 %v309
      %v598 = vunpack.c.l.b16 %v310
      %v599 = vunpack.c.l.b16 %v311
      %v600 = vpack.c.b16 %v537, %v536
      %v601 = vpack.c.b16 %v539, %v538
      %v602 = vpack.c.b16 %v541, %v540
      %v603 = vpack.c.b16 %v543, %v542
      %v604 = vpack.c.b16 %v545, %v544
      %v605 = vpack.c.b16 %v547, %v546
      %v606 = vpack.c.b16 %v549, %v548
      %v607 = vpack.c.b16 %v551, %v550
      %v608 = vpack.c.b16 %v553, %v552
      %v609 = vpack.c.b16 %v555, %v554
      %v610 = vpack.c.b16 %v557, %v556
      %v611 = vpack.c.b16 %v559, %v558
      %v612 = vpack.c.b16 %v561, %v560
      %v613 = vpack.c.b16 %v563, %v562
      %v614 = vpack.c.b16 %v565, %v564
      %v615 = vpack.c.b16 %v567, %v566
      %v616 = vpack.c.b16 %v569, %v568
      %v617 = vpack.c.b16 %v571, %v570
      %v618 = vpack.c.b16 %v573, %v572
      %v619 = vpack.c.b16 %v575, %v574
      %v620 = vpack.c.b16 %v577, %v576
      %v621 = vpack.c.b16 %v579, %v578
      %v622 = vpack.c.b16 %v581, %v580
      %v623 = vpack.c.b16 %v583, %v582
      %v624 = vpack.c.b16 %v585, %v584
      %v625 = vpack.c.b16 %v587, %v586
      %v626 = vpack.c.b16 %v589, %v588
      %v627 = vpack.c.b16 %v591, %v590
      %v628 = vpack.c.b16 %v593, %v592
      %v629 = vpack.c.b16 %v595, %v594
      %v630 = vpack.c.b16 %v597, %v596
      %v631 = vpack.c.b16 %v599, %v598
      %664 = vmatpush.bf16.msra.mxu0 %v607
      %665 = vmatpush.bf16.msra.mxu0 %v606
      %666 = vmatpush.bf16.msra.mxu0 %v605
      %667 = vmatpush.bf16.msra.mxu0 %v604
      %668 = vmatpush.bf16.msra.mxu0 %v603
      %669 = vmatpush.bf16.msra.mxu0 %v602
      %670 = vmatpush.bf16.msra.mxu0 %v601
      %671 = vmatpush.bf16.msra.mxu0 %v600
      %672 = vmatmul.bf16.gmra.mxu0 %v408
      %v673 = vpop.f32.mrf.mxu0
      %v674 = vadd.f32 0.0, %v673
      %v675 = vpop.f32.mrf.mxu0
      %v676 = vadd.f32 0.0, %v675
      %677 = vmatmul.bf16.gmra.mxu0 %v412
      %v678 = vpop.f32.mrf.mxu0
      %v679 = vadd.f32 0.0, %v678
      %v680 = vpop.f32.mrf.mxu0
      %v681 = vadd.f32 0.0, %v680
      %682 = vmatmul.bf16.gmra.mxu0 %v416
      %v683 = vpop.f32.mrf.mxu0
      %v684 = vadd.f32 0.0, %v683
      %v685 = vpop.f32.mrf.mxu0
      %v686 = vadd.f32 0.0, %v685
      %687 = vmatmul.bf16.gmra.mxu0 %v420
      %v688 = vpop.f32.mrf.mxu0
      %v689 = vadd.f32 0.0, %v688
      %v690 = vpop.f32.mrf.mxu0
      %v691 = vadd.f32 0.0, %v690
      %692 = vmatmul.bf16.gmra.mxu0 %v424
      %v693 = vpop.f32.mrf.mxu0
      %v694 = vadd.f32 0.0, %v693
      %v695 = vpop.f32.mrf.mxu0
      %v696 = vadd.f32 0.0, %v695
      %697 = vmatmul.bf16.gmra.mxu0 %v428
      %v698 = vpop.f32.mrf.mxu0
      %v699 = vadd.f32 0.0, %v698
      %v700 = vpop.f32.mrf.mxu0
      %v701 = vadd.f32 0.0, %v700
      %702 = vmatmul.bf16.gmra.mxu0 %v432
      %v703 = vpop.f32.mrf.mxu0
      %v704 = vadd.f32 0.0, %v703
      %v705 = vpop.f32.mrf.mxu0
      %v706 = vadd.f32 0.0, %v705
      %707 = vmatmul.bf16.gmra.mxu0 %v436
      %v708 = vpop.f32.mrf.mxu0
      %v709 = vadd.f32 0.0, %v708
      %v710 = vpop.f32.mrf.mxu0
      %v711 = vadd.f32 0.0, %v710
      %712 = vdwg.mxu0
      %713 = vmatpush.bf16.msra.mxu0 %v615
      %714 = vmatpush.bf16.msra.mxu0 %v614
      %715 = vmatpush.bf16.msra.mxu0 %v613
      %716 = vmatpush.bf16.msra.mxu0 %v612
      %717 = vmatpush.bf16.msra.mxu0 %v611
      %718 = vmatpush.bf16.msra.mxu0 %v610
      %719 = vmatpush.bf16.msra.mxu0 %v609
      %720 = vmatpush.bf16.msra.mxu0 %v608
      %721 = vmatmul.bf16.gmra.mxu0 %v409
      %v722 = vpop.f32.mrf.mxu0
      %v723 = vadd.f32 %v674, %v722
      %v724 = vpop.f32.mrf.mxu0
      %v725 = vadd.f32 %v676, %v724
      %726 = vmatmul.bf16.gmra.mxu0 %v413
      %v727 = vpop.f32.mrf.mxu0
      %v728 = vadd.f32 %v679, %v727
      %v729 = vpop.f32.mrf.mxu0
      %v730 = vadd.f32 %v681, %v729
      %731 = vmatmul.bf16.gmra.mxu0 %v417
      %v732 = vpop.f32.mrf.mxu0
      %v733 = vadd.f32 %v684, %v732
      %v734 = vpop.f32.mrf.mxu0
      %v735 = vadd.f32 %v686, %v734
      %736 = vmatmul.bf16.gmra.mxu0 %v421
      %v737 = vpop.f32.mrf.mxu0
      %v738 = vadd.f32 %v689, %v737
      %v739 = vpop.f32.mrf.mxu0
      %v740 = vadd.f32 %v691, %v739
      %741 = vmatmul.bf16.gmra.mxu0 %v425
      %v742 = vpop.f32.mrf.mxu0
      %v743 = vadd.f32 %v694, %v742
      %v744 = vpop.f32.mrf.mxu0
      %v745 = vadd.f32 %v696, %v744
      %746 = vmatmul.bf16.gmra.mxu0 %v429
      %v747 = vpop.f32.mrf.mxu0
      %v748 = vadd.f32 %v699, %v747
      %v749 = vpop.f32.mrf.mxu0
      %v750 = vadd.f32 %v701, %v749
      %751 = vmatmul.bf16.gmra.mxu0 %v433
      %v752 = vpop.f32.mrf.mxu0
      %v753 = vadd.f32 %v704, %v752
      %v754 = vpop.f32.mrf.mxu0
      %v755 = vadd.f32 %v706, %v754
      %756 = vmatmul.bf16.gmra.mxu0 %v437
      %v757 = vpop.f32.mrf.mxu0
      %v758 = vadd.f32 %v709, %v757
      %v759 = vpop.f32.mrf.mxu0
      %v760 = vadd.f32 %v711, %v759
      %761 = vdwg.mxu0
      %762 = vmatpush.bf16.msra.mxu0 %v623
      %763 = vmatpush.bf16.msra.mxu0 %v622
      %764 = vmatpush.bf16.msra.mxu0 %v621
      %765 = vmatpush.bf16.msra.mxu0 %v620
      %766 = vmatpush.bf16.msra.mxu0 %v619
      %767 = vmatpush.bf16.msra.mxu0 %v618
      %768 = vmatpush.bf16.msra.mxu0 %v617
      %769 = vmatpush.bf16.msra.mxu0 %v616
      %770 = vmatmul.bf16.gmra.mxu0 %v410
      %v771 = vpop.f32.mrf.mxu0
      %v772 = vadd.f32 %v723, %v771
      %v773 = vpop.f32.mrf.mxu0
      %v774 = vadd.f32 %v725, %v773
      %775 = vmatmul.bf16.gmra.mxu0 %v414
      %v776 = vpop.f32.mrf.mxu0
      %v777 = vadd.f32 %v728, %v776
      %v778 = vpop.f32.mrf.mxu0
      %v779 = vadd.f32 %v730, %v778
      %780 = vmatmul.bf16.gmra.mxu0 %v418
      %v781 = vpop.f32.mrf.mxu0
      %v782 = vadd.f32 %v733, %v781
      %v783 = vpop.f32.mrf.mxu0
      %v784 = vadd.f32 %v735, %v783
      %785 = vmatmul.bf16.gmra.mxu0 %v422
      %v786 = vpop.f32.mrf.mxu0
      %v787 = vadd.f32 %v738, %v786
      %v788 = vpop.f32.mrf.mxu0
      %v789 = vadd.f32 %v740, %v788
      %790 = vmatmul.bf16.gmra.mxu0 %v426
      %v791 = vpop.f32.mrf.mxu0
      %v792 = vadd.f32 %v743, %v791
      %v793 = vpop.f32.mrf.mxu0
      %v794 = vadd.f32 %v745, %v793
      %795 = vmatmul.bf16.gmra.mxu0 %v430
      %v796 = vpop.f32.mrf.mxu0
      %v797 = vadd.f32 %v748, %v796
      %v798 = vpop.f32.mrf.mxu0
      %v799 = vadd.f32 %v750, %v798
      %800 = vmatmul.bf16.gmra.mxu0 %v434
      %v801 = vpop.f32.mrf.mxu0
      %v802 = vadd.f32 %v753, %v801
      %v803 = vpop.f32.mrf.mxu0
      %v804 = vadd.f32 %v755, %v803
      %805 = vmatmul.bf16.gmra.mxu0 %v438
      %v806 = vpop.f32.mrf.mxu0
      %v807 = vadd.f32 %v758, %v806
      %v808 = vpop.f32.mrf.mxu0
      %v809 = vadd.f32 %v760, %v808
      %810 = vdwg.mxu0
      %811 = vmatpush.bf16.msra.mxu0 %v631
      %812 = vmatpush.bf16.msra.mxu0 %v630
      %813 = vmatpush.bf16.msra.mxu0 %v629
      %814 = vmatpush.bf16.msra.mxu0 %v628
      %815 = vmatpush.bf16.msra.mxu0 %v627
      %816 = vmatpush.bf16.msra.mxu0 %v626
      %817 = vmatpush.bf16.msra.mxu0 %v625
      %818 = vmatpush.bf16.msra.mxu0 %v624
      %819 = vmatmul.bf16.gmra.mxu0 %v411
      %v820 = vpop.f32.mrf.mxu0
      %v821 = vadd.f32 %v772, %v820
      %v822 = vpop.f32.mrf.mxu0
      %v823 = vadd.f32 %v774, %v822
      %824 = vmatmul.bf16.gmra.mxu0 %v415
      %v825 = vpop.f32.mrf.mxu0
      %v826 = vadd.f32 %v777, %v825
      %v827 = vpop.f32.mrf.mxu0
      %v828 = vadd.f32 %v779, %v827
      %829 = vmatmul.bf16.gmra.mxu0 %v419
      %v830 = vpop.f32.mrf.mxu0
      %v831 = vadd.f32 %v782, %v830
      %v832 = vpop.f32.mrf.mxu0
      %v833 = vadd.f32 %v784, %v832
      %834 = vmatmul.bf16.gmra.mxu0 %v423
      %v835 = vpop.f32.mrf.mxu0
      %v836 = vadd.f32 %v787, %v835
      %v837 = vpop.f32.mrf.mxu0
      %v838 = vadd.f32 %v789, %v837
      %839 = vmatmul.bf16.gmra.mxu0 %v427
      %v840 = vpop.f32.mrf.mxu0
      %v841 = vadd.f32 %v792, %v840
      %v842 = vpop.f32.mrf.mxu0
      %v843 = vadd.f32 %v794, %v842
      %844 = vmatmul.bf16.gmra.mxu0 %v431
      %v845 = vpop.f32.mrf.mxu0
      %v846 = vadd.f32 %v797, %v845
      %v847 = vpop.f32.mrf.mxu0
      %v848 = vadd.f32 %v799, %v847
      %849 = vmatmul.bf16.gmra.mxu0 %v435
      %v850 = vpop.f32.mrf.mxu0
      %v851 = vadd.f32 %v802, %v850
      %v852 = vpop.f32.mrf.mxu0
      %v853 = vadd.f32 %v804, %v852
      %854 = vmatmul.bf16.gmra.mxu0 %v439
      %v855 = vpop.f32.mrf.mxu0
      %v856 = vadd.f32 %v807, %v855
      %v857 = vpop.f32.mrf.mxu0
      %v858 = vadd.f32 %v809, %v857
      %859 = vdwg.mxu0
      %p860 = scmp.eq.s32.totalorder %s19, 0
      %p861 = scmp.eq.s32.totalorder %s20, 0
      %p862 = pnand %p860, %p861
      %p863 = pneg %p862
      // Predicated region
      $region37: #{generator_forward.7} parent=35 // pred_check
        _
      $region38: #{generator_forward.7} parent=35 // pred_check_branch
        %865 = sbr.rel (%p862) target = $region40
      $region39: #{generator_forward.7} parent=35 // pred_region
        %866 = vst [vmem:[#allocation2] sm:$0x1] 0.0
        %867 = vst [vmem:[#allocation3] sm:$0x1] 0.0
      $region40: #{generator_forward.7} parent=35 // pred_fallthru
        _
      // Predicated region
      $region41: #{generator_forward.7} parent=35 // pred_check
        %p868 = pneg %p860
      $region42: #{generator_forward.7} parent=35 // pred_check_branch
        %870 = sbr.rel (%p868) target = $region44
      $region43: #{generator_forward.7} parent=35 // pred_region
        %v871 = vld [vmem:[#allocation2] sm:$0x1]
        %v872 = vadd.f32 %v821, %v823
        %v873 = vadd.f32 %v872, %v826
        %v874 = vadd.f32 %v873, %v828
        %v875 = vadd.f32 %v874, %v831
        %v876 = vadd.f32 %v875, %v833
        %v877 = vadd.f32 %v876, %v836
        %v878 = vadd.f32 %v877, %v838
        %v879 = vadd.f32 %v878, %v841
        %v880 = vadd.f32 %v879, %v843
        %v881 = vadd.f32 %v880, %v846
        %v882 = vadd.f32 %v881, %v848
        %v883 = vadd.f32 %v882, %v851
        %v884 = vadd.f32 %v883, %v853
        %v885 = vadd.f32 %v884, %v856
        %v886 = vadd.f32 %v885, %v858
        %v887 = vrot.slane %v886, 4
        %v888 = vadd.f32 %v886, %v887
        %v889 = vrot.slane %v888, 2
        %v890 = vadd.f32 %v888, %v889
        %v891 = vrot.slane %v890, 1
        %v892 = vadd.f32 %v890, %v891
        %v893 = vadd.f32 %v871, %v892
        %894 = vst [vmem:[#allocation2] sm:$0x1] %v893
        %v895 = vld [vmem:[#allocation3] sm:$0x1]
        %v896 = vmul.f32 %v821, %v821
        %v897 = vmul.f32 %v823, %v823
        %v898 = vmul.f32 %v826, %v826
        %v899 = vmul.f32 %v828, %v828
        %v900 = vmul.f32 %v831, %v831
        %v901 = vmul.f32 %v833, %v833
        %v902 = vmul.f32 %v836, %v836
        %v903 = vmul.f32 %v838, %v838
        %v904 = vmul.f32 %v841, %v841
        %v905 = vmul.f32 %v843, %v843
        %v906 = vmul.f32 %v846, %v846
        %v907 = vmul.f32 %v848, %v848
        %v908 = vmul.f32 %v851, %v851
        %v909 = vmul.f32 %v853, %v853
        %v910 = vmul.f32 %v856, %v856
        %v911 = vmul.f32 %v858, %v858
        %v912 = vadd.f32 %v896, %v897
        %v913 = vadd.f32 %v912, %v898
        %v914 = vadd.f32 %v913, %v899
        %v915 = vadd.f32 %v914, %v900
        %v916 = vadd.f32 %v915, %v901
        %v917 = vadd.f32 %v916, %v902
        %v918 = vadd.f32 %v917, %v903
        %v919 = vadd.f32 %v918, %v904
        %v920 = vadd.f32 %v919, %v905
        %v921 = vadd.f32 %v920, %v906
        %v922 = vadd.f32 %v921, %v907
        %v923 = vadd.f32 %v922, %v908
        %v924 = vadd.f32 %v923, %v909
        %v925 = vadd.f32 %v924, %v910
        %v926 = vadd.f32 %v925, %v911
        %v927 = vrot.slane %v926, 4
        %v928 = vadd.f32 %v926, %v927
        %v929 = vrot.slane %v928, 2
        %v930 = vadd.f32 %v928, %v929
        %v931 = vrot.slane %v930, 1
        %v932 = vadd.f32 %v930, %v931
        %v933 = vadd.f32 %v895, %v932
        %934 = vst [vmem:[#allocation3] sm:$0x1] %v933
      $region44: #{generator_forward.7} parent=35 // pred_fallthru
        _
      %p935 = scmp.eq.s32.totalorder %s19, 1
      // Predicated region
      $region45: #{generator_forward.7} parent=35 // pred_check
        %p936 = pneg %p935
      $region46: #{generator_forward.7} parent=35 // pred_check_branch
        %938 = sbr.rel (%p936) target = $region48
      $region47: #{generator_forward.7} parent=35 // pred_region
        %v939 = vld [vmem:[#allocation2] sm:$0x1]
        %v940 = vmul.f32 %v939, 0.0078125
        %v941 = vld [vmem:[#allocation3] sm:$0x1]
        %v942 = vmul.f32 %v941, 0.0078125
        %v943 = vmul.f32 %v940, %v940
        %v944 = vsub.f32 %v942, %v943
        %v945 = vmax.f32 %v944, 0.0
        %v946 = vadd.f32 %v945, 1e-05
        %v947 = vrsqrt.pop %v946
        %v948 = vmul.f32 %v947, %v946
        %v949 = vmul.f32 %v948, %v947
        %v950 = vmul.f32 0.5, %v949
        %v951 = vsub.f32 1.5, %v950
        %v952 = vmul.f32 %v947, %v951
        %vm953 = vweird.f32 %v946
        %vm954 = vweird.f32 %v947
        %vm955 = vmor %vm953, %vm954
        %v956 = vsel %vm955, %v947, %v952
        %v958 = vperm.slane %v940, 0
        %v960 = vsub.f32 %v821, %v958
        %v961 = vsub.f32 %v823, %v958
        %v962 = vsub.f32 %v826, %v958
        %v963 = vsub.f32 %v828, %v958
        %v964 = vsub.f32 %v831, %v958
        %v965 = vsub.f32 %v833, %v958
        %v966 = vsub.f32 %v836, %v958
        %v967 = vsub.f32 %v838, %v958
        %v968 = vsub.f32 %v841, %v958
        %v969 = vsub.f32 %v843, %v958
        %v970 = vsub.f32 %v846, %v958
        %v971 = vsub.f32 %v848, %v958
        %v972 = vsub.f32 %v851, %v958
        %v973 = vsub.f32 %v853, %v958
        %v974 = vsub.f32 %v856, %v958
        %v975 = vsub.f32 %v858, %v958
        %v977 = vperm.slane %v956, 0
        %v979 = vmul.f32 %v960, %v977
        %v980 = vmul.f32 %v961, %v977
        %v981 = vmul.f32 %v962, %v977
        %v982 = vmul.f32 %v963, %v977
        %v983 = vmul.f32 %v964, %v977
        %v984 = vmul.f32 %v965, %v977
        %v985 = vmul.f32 %v966, %v977
        %v986 = vmul.f32 %v967, %v977
        %v987 = vmul.f32 %v968, %v977
        %v988 = vmul.f32 %v969, %v977
        %v989 = vmul.f32 %v970, %v977
        %v990 = vmul.f32 %v971, %v977
        %v991 = vmul.f32 %v972, %v977
        %v992 = vmul.f32 %v973, %v977
        %v993 = vmul.f32 %v974, %v977
        %v994 = vmul.f32 %v975, %v977
        %v995 = vld [vmem:[%s2] sm:$0x1]
        %v997 = vperm.slane %v995, 0
        %v999 = vmul.f32 %v979, %v997
        %v1000 = vmul.f32 %v980, %v997
        %v1001 = vmul.f32 %v981, %v997
        %v1002 = vmul.f32 %v982, %v997
        %v1003 = vmul.f32 %v983, %v997
        %v1004 = vmul.f32 %v984, %v997
        %v1005 = vmul.f32 %v985, %v997
        %v1006 = vmul.f32 %v986, %v997
        %v1007 = vmul.f32 %v987, %v997
        %v1008 = vmul.f32 %v988, %v997
        %v1009 = vmul.f32 %v989, %v997
        %v1010 = vmul.f32 %v990, %v997
        %v1011 = vmul.f32 %v991, %v997
        %v1012 = vmul.f32 %v992, %v997
        %v1013 = vmul.f32 %v993, %v997
        %v1014 = vmul.f32 %v994, %v997
        %v1015 = vld [vmem:[%s3] sm:$0x1]
        %v1017 = vperm.slane %v1015, 0
        %v1019 = vadd.f32 %v999, %v1017
        %v1020 = vadd.f32 %v1000, %v1017
        %v1021 = vadd.f32 %v1001, %v1017
        %v1022 = vadd.f32 %v1002, %v1017
        %v1023 = vadd.f32 %v1003, %v1017
        %v1024 = vadd.f32 %v1004, %v1017
        %v1025 = vadd.f32 %v1005, %v1017
        %v1026 = vadd.f32 %v1006, %v1017
        %v1027 = vadd.f32 %v1007, %v1017
        %v1028 = vadd.f32 %v1008, %v1017
        %v1029 = vadd.f32 %v1009, %v1017
        %v1030 = vadd.f32 %v1010, %v1017
        %v1031 = vadd.f32 %v1011, %v1017
        %v1032 = vadd.f32 %v1012, %v1017
        %v1033 = vadd.f32 %v1013, %v1017
        %v1034 = vadd.f32 %v1014, %v1017
        %v1035 = vmax.f32 %v1019, 0.0
        %v1036 = vmax.f32 %v1020, 0.0
        %v1037 = vmax.f32 %v1021, 0.0
        %v1038 = vmax.f32 %v1022, 0.0
        %v1039 = vmax.f32 %v1023, 0.0
        %v1040 = vmax.f32 %v1024, 0.0
        %v1041 = vmax.f32 %v1025, 0.0
        %v1042 = vmax.f32 %v1026, 0.0
        %v1043 = vmax.f32 %v1027, 0.0
        %v1044 = vmax.f32 %v1028, 0.0
        %v1045 = vmax.f32 %v1029, 0.0
        %v1046 = vmax.f32 %v1030, 0.0
        %v1047 = vmax.f32 %v1031, 0.0
        %v1048 = vmax.f32 %v1032, 0.0
        %v1049 = vmax.f32 %v1033, 0.0
        %v1050 = vmax.f32 %v1034, 0.0
        %v1051 = vpack.c.bf16 %v1035, %v1035
        %v1052 = vpack.c.bf16 %v1036, %v1036
        %v1053 = vpack.c.bf16 %v1037, %v1037
        %v1054 = vpack.c.bf16 %v1038, %v1038
        %v1055 = vpack.c.bf16 %v1039, %v1039
        %v1056 = vpack.c.bf16 %v1040, %v1040
        %v1057 = vpack.c.bf16 %v1041, %v1041
        %v1058 = vpack.c.bf16 %v1042, %v1042
        %v1059 = vpack.c.bf16 %v1043, %v1043
        %v1060 = vpack.c.bf16 %v1044, %v1044
        %v1061 = vpack.c.bf16 %v1045, %v1045
        %v1062 = vpack.c.bf16 %v1046, %v1046
        %v1063 = vpack.c.bf16 %v1047, %v1047
        %v1064 = vpack.c.bf16 %v1048, %v1048
        %v1065 = vpack.c.bf16 %v1049, %v1049
        %v1066 = vpack.c.bf16 %v1050, %v1050
        %1067 = vst [vmem:[%s214] sm:$0xf] %v1051
        %1068 = vst [vmem:[%s214 + $0x4] sm:$0xf] %v1052
        %1069 = vst [vmem:[%s214 + $0x8] sm:$0xf] %v1053
        %1070 = vst [vmem:[%s214 + $0xc] sm:$0xf] %v1054
        %1071 = vst [vmem:[%s214 + $0x10] sm:$0xf] %v1055
        %1072 = vst [vmem:[%s214 + $0x14] sm:$0xf] %v1056
        %1073 = vst [vmem:[%s214 + $0x18] sm:$0xf] %v1057
        %1074 = vst [vmem:[%s214 + $0x1c] sm:$0xf] %v1058
        %1075 = vst [vmem:[%s214 + $0x20] sm:$0xf] %v1059
        %1076 = vst [vmem:[%s214 + $0x24] sm:$0xf] %v1060
        %1077 = vst [vmem:[%s214 + $0x28] sm:$0xf] %v1061
        %1078 = vst [vmem:[%s214 + $0x2c] sm:$0xf] %v1062
        %1079 = vst [vmem:[%s214 + $0x30] sm:$0xf] %v1063
        %1080 = vst [vmem:[%s214 + $0x34] sm:$0xf] %v1064
        %1081 = vst [vmem:[%s214 + $0x38] sm:$0xf] %v1065
        %1082 = vst [vmem:[%s214 + $0x3c] sm:$0xf] %v1066
      $region48: #{generator_forward.7} parent=35 // pred_fallthru
        _
      %s1083 = smul.u32 16, %s20
      %p1084 = scmp.lt.s32.totalorder %s1083, 15
      %s1085 = scalar_select %p1084, %s1083, 15
      %s1086 = smul.addr %s1085, 4
      %s1087 = scalar_lea.vmem %s4, %s1086
      // Predicated region
      $region49: #{generator_forward.7} parent=35 // pred_check
        %p1088 = pneg %p134
      $region50: #{generator_forward.7} parent=35 // pred_check_branch
        %1090 = sbr.rel (%p1088) target = $region52
      $region51: #{generator_forward.7} parent=35 // pred_region
        %s1091 = smul.u32 16, %s20
      $region52: #{generator_forward.7} parent=35 // pred_fallthru
        _
      // Predicated region
      $region53: #{generator_forward.7} parent=35 // pred_check
        %p1092 = pneg %p134
      $region54: #{generator_forward.7} parent=35 // pred_check_branch
        %1094 = sbr.rel (%p1092) target = $region56
      $region55: #{generator_forward.7} parent=35 // pred_region
        %s1095 = smul.u32 16, %s20
        %p1096 = scmp.lt.s32.totalorder %s1095, 15
        %s1097 = scalar_select %p1096, %s1095, 15
        %s1098 = smul.addr %s1097, 4
        %s1099 = scalar_lea.vmem %s4, %s1098
      $region56: #{generator_forward.7} parent=35 // pred_fallthru
        _
    $region36: #{generator_forward.7} parent=5 // pred_fallthru
      _
    %p1100 = scmp.le.s32.totalorder 2, %s10
    // Predicated region
    $region57: #{generator_forward.7} parent=5 // pred_check
      %p1101 = pneg %p1100
    $region58: #{generator_forward.7} parent=5 // pred_check_branch
      %1103 = sbr.rel (%p1101) target = $region60
    $region59: #{generator_forward.7} parent=5 // pred_region
      %s1104 = ssub.s32 %s10, 2
    $region60: #{generator_forward.7} parent=5 // pred_fallthru
      _
  $region6: #{generator_forward.7} parent=0 // loop_footer
    %s14 = sadd.s32 1, %s10
  $region7: #{generator_forward.7} parent=0 // loop_footer_branch
    %9 = sbr.rel target = $region3
  $region8: #{generator_forward.7} parent=0 // loop_exit
    _

// kernel: generator_forward.8
$region0: #{generator_forward.8}
  #allocation0 [shape = 'u32[]', space=smem, size = 0x4, offset = 0x4, fixed_abs, tag = 'smem constant byte address 0x4 - core index']
  #allocation1 [shape = 'u32[72,128]{1,0:T(1,128)}', space=vmem, size = 0x9000, scoped, tag = 'internal scratch']
  #allocation2 [shape = 'f32[1,128]{1,0:T(1,128)}', space=vmem, size = 0x200, scoped, tag = 'scratch operand']
  #allocation3 [shape = 'f32[1,128]{1,0:T(1,128)}', space=vmem, size = 0x200, scoped, tag = 'scratch operand']
  %s0 = inlined_call_operand.vmem [shape: bf16[512,256], index: 0, kind: input, shape index: {}]
  %s1 = inlined_call_operand.vmem [shape: bf16[256,128], index: 1, kind: input, shape index: {}]
  %s2 = inlined_call_operand.vmem [shape: f32[1,128], index: 2, kind: input, shape index: {}]
  %s3 = inlined_call_operand.vmem [shape: f32[1,128], index: 3, kind: input, shape index: {}]
  %s4 = inlined_call_operand.vmem [shape: bf16[512,128], index: 4, kind: output, shape index: {}]
  %s5 = sld [smem:[#allocation0]]
  $region61: #{generator_forward.8} parent=0
    _
  %s7 = ssub.s32 1, %s5
  %s8 = scalar_select 0, %s7, %s5
  loop: start=0, step=1, limit=6
  $region2: #{generator_forward.8} parent=0 // loop_pre_header
    _
  $region3: #{generator_forward.8} parent=0 // loop_header
    %s10 = sphi 0, %s14
    %p11 = scmp.ge.s32.totalorder %s10, 6
    %s17 = sphi 0, %s29
    %s18 = sphi 0, %s25
    %s19 = sphi 0, %s17
    %s20 = sphi 0, %s18
    %s21 = sphi 0, %s19
    %s22 = sphi 0, %s20
    %s32 = sphi 0, %s34
    %s35 = sphi 0, %s32
    %s36 = sphi 0, %s35
    %s52 = sphi 0, %s36
    %s56 = sphi 0, %s56
    %s58 = sphi 0, %s56
    %s59 = sphi 0, %s58
    %s73 = sphi 0, %s59
    %s77 = sphi 0, %s77
    %s79 = sphi 0, %s77
    %s80 = sphi 0, %s79
    %s94 = sphi 0, %s80
    %s98 = sphi 0, %s98
    %s100 = sphi 0, %s98
    %s101 = sphi 0, %s100
    %s115 = sphi 0, %s101
    %s121 = sphi 0, %s123
    %s124 = sphi 0, %s121
    %s125 = sphi 0, %s124
    %s141 = sphi 0, %s125
  $region4: #{generator_forward.8} parent=0 // loop_header_branch
    %13 = sbr.rel (%p11) target = $region8
  $region5: #{generator_forward.8} parent=0 // loop_body
    %s15 = ssub.s32 %s10, 1
    %s16 = ssub.s32 %s10, 2
    %s23 = sadd.s32 1, %s18
    %p24 = scmp.ge.s32.totalorder %s23, 2
    %s25 = scalar_select %p24, 0, %s23
    %s26 = sadd.s32 1, %s17
    %s27 = scalar_select %p24, %s26, %s17
    %p28 = scmp.ge.s32.totalorder %s27, 2
    %s29 = scalar_select %p28, 0, %s27
    %s30 = ssub.s32 %s18, %s25
    %p31 = scmp.eq.s32.totalorder %s30, 0
    %s33 = sadd.s32 %s32, 1
    %s34 = scalar_select %p31, %s32, %s33
    %p37 = pneg %p31
    %p38 = scmp.eq.s32.totalorder %s10, 3
    %p39 = por %p37, %p38
    %p40 = scmp.ne.s32.totalorder %s32, %s35
    %p41 = scmp.eq.s32.totalorder %s10, 0
    %p42 = por %p40, %p41
    %p43 = scmp.ne.s32.totalorder %s32, %s35
    %p44 = scmp.eq.s32.totalorder %s15, 3
    %p45 = por %p43, %p44
    %p46 = scmp.ne.s32.totalorder %s35, %s36
    %p47 = scmp.eq.s32.totalorder %s15, 0
    %p48 = por %p46, %p47
    %p49 = scmp.ne.s32.totalorder %s35, %s36
    %p50 = scmp.eq.s32.totalorder %s16, 3
    %p51 = por %p49, %p50
    %p53 = scmp.ne.s32.totalorder %s36, %s52
    %p54 = scmp.eq.s32.totalorder %s16, 0
    %p55 = por %p53, %p54
    %s57 = sadd.s32 %s56, 1
    %p60 = scmp.eq.s32.totalorder %s10, 3
    %p61 = scmp.ne.s32.totalorder %s56, %s58
    %p62 = scmp.eq.s32.totalorder %s10, 0
    %p63 = por %p61, %p62
    %p64 = scmp.ne.s32.totalorder %s56, %s58
    %p65 = scmp.eq.s32.totalorder %s15, 3
    %p66 = por %p64, %p65
    %p67 = scmp.ne.s32.totalorder %s58, %s59
    %p68 = scmp.eq.s32.totalorder %s15, 0
    %p69 = por %p67, %p68
    %p70 = scmp.ne.s32.totalorder %s58, %s59
    %p71 = scmp.eq.s32.totalorder %s16, 3
    %p72 = por %p70, %p71
    %p74 = scmp.ne.s32.totalorder %s59, %s73
    %p75 = scmp.eq.s32.totalorder %s16, 0
    %p76 = por %p74, %p75
    %s78 = sadd.s32 %s77, 1
    %p81 = scmp.eq.s32.totalorder %s10, 3
    %p82 = scmp.ne.s32.totalorder %s77, %s79
    %p83 = scmp.eq.s32.totalorder %s10, 0
    %p84 = por %p82, %p83
    %p85 = scmp.ne.s32.totalorder %s77, %s79
    %p86 = scmp.eq.s32.totalorder %s15, 3
    %p87 = por %p85, %p86
    %p88 = scmp.ne.s32.totalorder %s79, %s80
    %p89 = scmp.eq.s32.totalorder %s15, 0
    %p90 = por %p88, %p89
    %p91 = scmp.ne.s32.totalorder %s79, %s80
    %p92 = scmp.eq.s32.totalorder %s16, 3
    %p93 = por %p91, %p92
    %p95 = scmp.ne.s32.totalorder %s80, %s94
    %p96 = scmp.eq.s32.totalorder %s16, 0
    %p97 = por %p95, %p96
    %s99 = sadd.s32 %s98, 1
    %p102 = scmp.eq.s32.totalorder %s10, 3
    %p103 = scmp.ne.s32.totalorder %s98, %s100
    %p104 = scmp.eq.s32.totalorder %s10, 0
    %p105 = por %p103, %p104
    %p106 = scmp.ne.s32.totalorder %s98, %s100
    %p107 = scmp.eq.s32.totalorder %s15, 3
    %p108 = por %p106, %p107
    %p109 = scmp.ne.s32.totalorder %s100, %s101
    %p110 = scmp.eq.s32.totalorder %s15, 0
    %p111 = por %p109, %p110
    %p112 = scmp.ne.s32.totalorder %s100, %s101
    %p113 = scmp.eq.s32.totalorder %s16, 3
    %p114 = por %p112, %p113
    %p116 = scmp.ne.s32.totalorder %s101, %s115
    %p117 = scmp.eq.s32.totalorder %s16, 0
    %p118 = por %p116, %p117
    %s119 = ssub.s32 %s18, %s25
    %p120 = scmp.eq.s32.totalorder %s119, 0
    %s122 = sadd.s32 %s121, 1
    %s123 = scalar_select %p120, %s121, %s122
    %p126 = pneg %p120
    %p127 = scmp.eq.s32.totalorder %s10, 3
    %p128 = por %p126, %p127
    %p129 = scmp.ne.s32.totalorder %s121, %s124
    %p130 = scmp.eq.s32.totalorder %s10, 0
    %p131 = por %p129, %p130
    %p132 = scmp.ne.s32.totalorder %s121, %s124
    %p133 = scmp.eq.s32.totalorder %s15, 3
    %p134 = por %p132, %p133
    %p135 = scmp.ne.s32.totalorder %s124, %s125
    %p136 = scmp.eq.s32.totalorder %s15, 0
    %p137 = por %p135, %p136
    %p138 = scmp.ne.s32.totalorder %s124, %s125
    %p139 = scmp.eq.s32.totalorder %s16, 3
    %p140 = por %p138, %p139
    %p142 = scmp.ne.s32.totalorder %s125, %s141
    %p143 = scmp.eq.s32.totalorder %s16, 0
    %p144 = por %p142, %p143
    %p145 = scmp.le.s32.totalorder 1, %s10
    %p146 = scmp.lt.s32.totalorder %s10, 5
    %p147 = pnand %p145, %p146
    %p148 = pneg %p147
    // Predicated region
    $region9: #{generator_forward.8} parent=5 // pred_check
      _
    $region10: #{generator_forward.8} parent=5 // pred_check_branch
      %150 = sbr.rel (%p147) target = $region12
    $region11: #{generator_forward.8} parent=5 // pred_region
      %s151 = ssub.s32 %s10, 1
      // Predicated region
      $region13: #{generator_forward.8} parent=11 // pred_check
        %p152 = pneg %p69
      $region14: #{generator_forward.8} parent=11 // pred_check_branch
        %154 = sbr.rel (%p152) target = $region16
      $region15: #{generator_forward.8} parent=11 // pred_region
        _
      $region16: #{generator_forward.8} parent=11 // pred_fallthru
        _
      // Predicated region
      $region17: #{generator_forward.8} parent=11 // pred_check
        %p155 = pneg %p90
      $region18: #{generator_forward.8} parent=11 // pred_check_branch
        %157 = sbr.rel (%p155) target = $region20
      $region19: #{generator_forward.8} parent=11 // pred_region
        _
      $region20: #{generator_forward.8} parent=11 // pred_fallthru
        _
      // Predicated region
      $region21: #{generator_forward.8} parent=11 // pred_check
        %p158 = pneg %p111
      $region22: #{generator_forward.8} parent=11 // pred_check_branch
        %160 = sbr.rel (%p158) target = $region24
      $region23: #{generator_forward.8} parent=11 // pred_region
        _
      $region24: #{generator_forward.8} parent=11 // pred_fallthru
        _
    $region12: #{generator_forward.8} parent=5 // pred_fallthru
      _
    %p161 = scmp.lt.s32.totalorder %s10, 4
    // Predicated region
    $region25: #{generator_forward.8} parent=5 // pred_check
      %p162 = pneg %p161
    $region26: #{generator_forward.8} parent=5 // pred_check_branch
      %164 = sbr.rel (%p162) target = $region28
    $region27: #{generator_forward.8} parent=5 // pred_region
      // Predicated region
      $region29: #{generator_forward.8} parent=27 // pred_check
        %p165 = pneg %p42
      $region30: #{generator_forward.8} parent=27 // pred_check_branch
        %167 = sbr.rel (%p165) target = $region32
      $region31: #{generator_forward.8} parent=27 // pred_region
        %s168 = smul.u32 32, %s18
        %p169 = scmp.lt.s32.totalorder %s168, 63
        %s170 = scalar_select %p169, %s168, 63
        %s171 = smul.addr %s170, 2
        %s172 = smul.addr %s171, 4
        %s173 = scalar_lea.vmem %s0, %s172
        %s174 = smul.u32 32, %s18
      $region32: #{generator_forward.8} parent=27 // pred_fallthru
        _
    $region28: #{generator_forward.8} parent=5 // pred_fallthru
      _
    %p175 = scmp.le.s32.totalorder 1, %s10
    %p176 = scmp.lt.s32.totalorder %s10, 5
    %p177 = pnand %p175, %p176
    %p178 = pneg %p177
    // Predicated region
    $region33: #{generator_forward.8} parent=5 // pred_check
      _
    $region34: #{generator_forward.8} parent=5 // pred_check_branch
      %180 = sbr.rel (%p177) target = $region36
    $region35: #{generator_forward.8} parent=5 // pred_region
      %s181 = ssub.s32 %s10, 1
      %s182 = smul.u32 32, %s20
      %p183 = scmp.lt.s32.totalorder %s182, 63
      %s184 = scalar_select %p183, %s182, 63
      %s185 = smul.addr %s184, 2
      %s186 = smul.addr %s185, 4
      %s187 = scalar_lea.vmem %s0, %s186
      %p188 = pneg %p48
      %p189 = pneg %p45
      %p190 = pneg %p69
      %p191 = pneg %p66
      %p192 = pneg %p90
      %p193 = pneg %p87
      %p194 = pneg %p111
      %p195 = pneg %p108
      %p196 = pneg %p137
      %p197 = pneg %p134
      %s198 = smul.u32 32, %s20
      %p199 = scmp.lt.s32.totalorder %s198, 63
      %s200 = scalar_select %p199, %s198, 63
      %s201 = smul.addr %s200, 4
      %s202 = scalar_lea.vmem %s4, %s201
      %s203 = smul.u32 32, %s20
      %p204 = scmp.lt.s32.totalorder %s203, 63
      %s205 = scalar_select %p204, %s203, 63
      %s206 = smul.addr %s205, 2
      %s207 = smul.addr %s206, 4
      %s208 = scalar_lea.vmem %s0, %s207
      %s209 = smul.u32 32, %s20
      %s210 = smul.u32 32, %s20
      %p211 = scmp.lt.s32.totalorder %s210, 63
      %s212 = scalar_select %p211, %s210, 63
      %s213 = smul.addr %s212, 4
      %s214 = scalar_lea.vmem %s4, %s213
      %s215 = smul.u32 32, %s20
      %v216 = vld [vmem:[%s208] sm:$0xff]
      %v217 = vld [vmem:[%s208 + $0x8] sm:$0xff]
      %v218 = vld [vmem:[%s208 + $0x10] sm:$0xff]
      %v219 = vld [vmem:[%s208 + $0x18] sm:$0xff]
      %v220 = vld [vmem:[%s208 + $0x20] sm:$0xff]
      %v221 = vld [vmem:[%s208 + $0x28] sm:$0xff]
      %v222 = vld [vmem:[%s208 + $0x30] sm:$0xff]
      %v223 = vld [vmem:[%s208 + $0x38] sm:$0xff]
      %v224 = vld [vmem:[%s208 + $0x40] sm:$0xff]
      %v225 = vld [vmem:[%s208 + $0x48] sm:$0xff]
      %v226 = vld [vmem:[%s208 + $0x50] sm:$0xff]
      %v227 = vld [vmem:[%s208 + $0x58] sm:$0xff]
      %v228 = vld [vmem:[%s208 + $0x60] sm:$0xff]
      %v229 = vld [vmem:[%s208 + $0x68] sm:$0xff]
      %v230 = vld [vmem:[%s208 + $0x70] sm:$0xff]
      %v231 = vld [vmem:[%s208 + $0x78] sm:$0xff]
      %v232 = vld [vmem:[%s208 + $0x80] sm:$0xff]
      %v233 = vld [vmem:[%s208 + $0x88] sm:$0xff]
      %v234 = vld [vmem:[%s208 + $0x90] sm:$0xff]
      %v235 = vld [vmem:[%s208 + $0x98] sm:$0xff]
      %v236 = vld [vmem:[%s208 + $0xa0] sm:$0xff]
      %v237 = vld [vmem:[%s208 + $0xa8] sm:$0xff]
      %v238 = vld [vmem:[%s208 + $0xb0] sm:$0xff]
      %v239 = vld [vmem:[%s208 + $0xb8] sm:$0xff]
      %v240 = vld [vmem:[%s208 + $0xc0] sm:$0xff]
      %v241 = vld [vmem:[%s208 + $0xc8] sm:$0xff]
      %v242 = vld [vmem:[%s208 + $0xd0] sm:$0xff]
      %v243 = vld [vmem:[%s208 + $0xd8] sm:$0xff]
      %v244 = vld [vmem:[%s208 + $0xe0] sm:$0xff]
      %v245 = vld [vmem:[%s208 + $0xe8] sm:$0xff]
      %v246 = vld [vmem:[%s208 + $0xf0] sm:$0xff]
      %v247 = vld [vmem:[%s208 + $0xf8] sm:$0xff]
      %v248 = vld [vmem:[%s1] sm:$0xf]
      %v249 = vld [vmem:[%s1 + $0x4] sm:$0xf]
      %v250 = vld [vmem:[%s1 + $0x8] sm:$0xf]
      %v251 = vld [vmem:[%s1 + $0xc] sm:$0xf]
      %v252 = vld [vmem:[%s1 + $0x10] sm:$0xf]
      %v253 = vld [vmem:[%s1 + $0x14] sm:$0xf]
      %v254 = vld [vmem:[%s1 + $0x18] sm:$0xf]
      %v255 = vld [vmem:[%s1 + $0x1c] sm:$0xf]
      %v256 = vld [vmem:[%s1 + $0x20] sm:$0xf]
      %v257 = vld [vmem:[%s1 + $0x24] sm:$0xf]
      %v258 = vld [vmem:[%s1 + $0x28] sm:$0xf]
      %v259 = vld [vmem:[%s1 + $0x2c] sm:$0xf]
      %v260 = vld [vmem:[%s1 + $0x30] sm:$0xf]
      %v261 = vld [vmem:[%s1 + $0x34] sm:$0xf]
      %v262 = vld [vmem:[%s1 + $0x38] sm:$0xf]
      %v263 = vld [vmem:[%s1 + $0x3c] sm:$0xf]
      %v264 = vld [vmem:[%s1 + $0x40] sm:$0xf]
      %v265 = vld [vmem:[%s1 + $0x44] sm:$0xf]
      %v266 = vld [vmem:[%s1 + $0x48] sm:$0xf]
      %v267 = vld [vmem:[%s1 + $0x4c] sm:$0xf]
      %v268 = vld [vmem:[%s1 + $0x50] sm:$0xf]
      %v269 = vld [vmem:[%s1 + $0x54] sm:$0xf]
      %v270 = vld [vmem:[%s1 + $0x58] sm:$0xf]
      %v271 = vld [vmem:[%s1 + $0x5c] sm:$0xf]
      %v272 = vld [vmem:[%s1 + $0x60] sm:$0xf]
      %v273 = vld [vmem:[%s1 + $0x64] sm:$0xf]
      %v274 = vld [vmem:[%s1 + $0x68] sm:$0xf]
      %v275 = vld [vmem:[%s1 + $0x6c] sm:$0xf]
      %v276 = vld [vmem:[%s1 + $0x70] sm:$0xf]
      %v277 = vld [vmem:[%s1 + $0x74] sm:$0xf]
      %v278 = vld [vmem:[%s1 + $0x78] sm:$0xf]
      %v279 = vld [vmem:[%s1 + $0x7c] sm:$0xf]
      %v312 = vunpack.c.l.b16 %v216
      %v313 = vunpack.c.h.b16 %v216
      %v314 = vunpack.c.l.b16 %v217
      %v315 = vunpack.c.h.b16 %v217
      %v316 = vunpack.c.l.b16 %v218
      %v317 = vunpack.c.h.b16 %v218
      %v318 = vunpack.c.l.b16 %v219
      %v319 = vunpack.c.h.b16 %v219
      %v320 = vunpack.c.l.b16 %v220
      %v321 = vunpack.c.h.b16 %v220
      %v322 = vunpack.c.l.b16 %v221
      %v323 = vunpack.c.h.b16 %v221
      %v324 = vunpack.c.l.b16 %v222
      %v325 = vunpack.c.h.b16 %v222
      %v326 = vunpack.c.l.b16 %v223
      %v327 = vunpack.c.h.b16 %v223
      %v328 = vunpack.c.l.b16 %v224
      %v329 = vunpack.c.h.b16 %v224
      %v330 = vunpack.c.l.b16 %v225
      %v331 = vunpack.c.h.b16 %v225
      %v332 = vunpack.c.l.b16 %v226
      %v333 = vunpack.c.h.b16 %v226
      %v334 = vunpack.c.l.b16 %v227
      %v335 = vunpack.c.h.b16 %v227
      %v336 = vunpack.c.l.b16 %v228
      %v337 = vunpack.c.h.b16 %v228
      %v338 = vunpack.c.l.b16 %v229
      %v339 = vunpack.c.h.b16 %v229
      %v340 = vunpack.c.l.b16 %v230
      %v341 = vunpack.c.h.b16 %v230
      %v342 = vunpack.c.l.b16 %v231
      %v343 = vunpack.c.h.b16 %v231
      %v344 = vunpack.c.l.b16 %v232
      %v345 = vunpack.c.h.b16 %v232
      %v346 = vunpack.c.l.b16 %v233
      %v347 = vunpack.c.h.b16 %v233
      %v348 = vunpack.c.l.b16 %v234
      %v349 = vunpack.c.h.b16 %v234
      %v350 = vunpack.c.l.b16 %v235
      %v351 = vunpack.c.h.b16 %v235
      %v352 = vunpack.c.l.b16 %v236
      %v353 = vunpack.c.h.b16 %v236
      %v354 = vunpack.c.l.b16 %v237
      %v355 = vunpack.c.h.b16 %v237
      %v356 = vunpack.c.l.b16 %v238
      %v357 = vunpack.c.h.b16 %v238
      %v358 = vunpack.c.l.b16 %v239
      %v359 = vunpack.c.h.b16 %v239
      %v360 = vunpack.c.l.b16 %v240
      %v361 = vunpack.c.h.b16 %v240
      %v362 = vunpack.c.l.b16 %v241
      %v363 = vunpack.c.h.b16 %v241
      %v364 = vunpack.c.l.b16 %v242
      %v365 = vunpack.c.h.b16 %v242
      %v366 = vunpack.c.l.b16 %v243
      %v367 = vunpack.c.h.b16 %v243
      %v368 = vunpack.c.l.b16 %v244
      %v369 = vunpack.c.h.b16 %v244
      %v370 = vunpack.c.l.b16 %v245
      %v371 = vunpack.c.h.b16 %v245
      %v372 = vunpack.c.l.b16 %v246
      %v373 = vunpack.c.h.b16 %v246
      %v374 = vunpack.c.l.b16 %v247
      %v375 = vunpack.c.h.b16 %v247
      %v376 = vpack.c.b16 %v314, %v312
      %v377 = vpack.c.b16 %v315, %v313
      %v378 = vpack.c.b16 %v318, %v316
      %v379 = vpack.c.b16 %v319, %v317
      %v380 = vpack.c.b16 %v322, %v320
      %v381 = vpack.c.b16 %v323, %v321
      %v382 = vpack.c.b16 %v326, %v324
      %v383 = vpack.c.b16 %v327, %v325
      %v384 = vpack.c.b16 %v330, %v328
      %v385 = vpack.c.b16 %v331, %v329
      %v386 = vpack.c.b16 %v334, %v332
      %v387 = vpack.c.b16 %v335, %v333
      %v388 = vpack.c.b16 %v338, %v336
      %v389 = vpack.c.b16 %v339, %v337
      %v390 = vpack.c.b16 %v342, %v340
      %v391 = vpack.c.b16 %v343, %v341
      %v392 = vpack.c.b16 %v346, %v344
      %v393 = vpack.c.b16 %v347, %v345
      %v394 = vpack.c.b16 %v350, %v348
      %v395 = vpack.c.b16 %v351, %v349
      %v396 = vpack.c.b16 %v354, %v352
      %v397 = vpack.c.b16 %v355, %v353
      %v398 = vpack.c.b16 %v358, %v356
      %v399 = vpack.c.b16 %v359, %v357
      %v400 = vpack.c.b16 %v362, %v360
      %v401 = vpack.c.b16 %v363, %v361
      %v402 = vpack.c.b16 %v366, %v364
      %v403 = vpack.c.b16 %v367, %v365
      %v404 = vpack.c.b16 %v370, %v368
      %v405 = vpack.c.b16 %v371, %v369
      %v406 = vpack.c.b16 %v374, %v372
      %v407 = vpack.c.b16 %v375, %v373
      %v472 = vunpack.c.l.b16 %v248
      %v473 = vunpack.c.l.b16 %v249
      %v474 = vunpack.c.l.b16 %v250
      %v475 = vunpack.c.l.b16 %v251
      %v476 = vunpack.c.l.b16 %v252
      %v477 = vunpack.c.l.b16 %v253
      %v478 = vunpack.c.l.b16 %v254
      %v479 = vunpack.c.l.b16 %v255
      %v480 = vunpack.c.l.b16 %v256
      %v481 = vunpack.c.l.b16 %v257
      %v482 = vunpack.c.l.b16 %v258
      %v483 = vunpack.c.l.b16 %v259
      %v484 = vunpack.c.l.b16 %v260
      %v485 = vunpack.c.l.b16 %v261
      %v486 = vunpack.c.l.b16 %v262
      %v487 = vunpack.c.l.b16 %v263
      %v488 = vunpack.c.l.b16 %v264
      %v489 = vunpack.c.l.b16 %v265
      %v490 = vunpack.c.l.b16 %v266
      %v491 = vunpack.c.l.b16 %v267
      %v492 = vunpack.c.l.b16 %v268
      %v493 = vunpack.c.l.b16 %v269
      %v494 = vunpack.c.l.b16 %v270
      %v495 = vunpack.c.l.b16 %v271
      %v496 = vunpack.c.l.b16 %v272
      %v497 = vunpack.c.l.b16 %v273
      %v498 = vunpack.c.l.b16 %v274
      %v499 = vunpack.c.l.b16 %v275
      %v500 = vunpack.c.l.b16 %v276
      %v501 = vunpack.c.l.b16 %v277
      %v502 = vunpack.c.l.b16 %v278
      %v503 = vunpack.c.l.b16 %v279
      %v504 = vpack.c.b16 %v473, %v472
      %v505 = vpack.c.b16 %v475, %v474
      %v506 = vpack.c.b16 %v477, %v476
      %v507 = vpack.c.b16 %v479, %v478
      %v508 = vpack.c.b16 %v481, %v480
      %v509 = vpack.c.b16 %v483, %v482
      %v510 = vpack.c.b16 %v485, %v484
      %v511 = vpack.c.b16 %v487, %v486
      %v512 = vpack.c.b16 %v489, %v488
      %v513 = vpack.c.b16 %v491, %v490
      %v514 = vpack.c.b16 %v493, %v492
      %v515 = vpack.c.b16 %v495, %v494
      %v516 = vpack.c.b16 %v497, %v496
      %v517 = vpack.c.b16 %v499, %v498
      %v518 = vpack.c.b16 %v501, %v500
      %v519 = vpack.c.b16 %v503, %v502
      %536 = vmatpush.bf16.msra.mxu0 %v511
      %537 = vmatpush.bf16.msra.mxu0 %v510
      %538 = vmatpush.bf16.msra.mxu0 %v509
      %539 = vmatpush.bf16.msra.mxu0 %v508
      %540 = vmatpush.bf16.msra.mxu0 %v507
      %541 = vmatpush.bf16.msra.mxu0 %v506
      %542 = vmatpush.bf16.msra.mxu0 %v505
      %543 = vmatpush.bf16.msra.mxu0 %v504
      %544 = vmatmul.bf16.gmra.mxu0 %v376
      %v545 = vpop.f32.mrf.mxu0
      %v546 = vadd.f32 0.0, %v545
      %v547 = vpop.f32.mrf.mxu0
      %v548 = vadd.f32 0.0, %v547
      %549 = vmatmul.bf16.gmra.mxu0 %v378
      %v550 = vpop.f32.mrf.mxu0
      %v551 = vadd.f32 0.0, %v550
      %v552 = vpop.f32.mrf.mxu0
      %v553 = vadd.f32 0.0, %v552
      %554 = vmatmul.bf16.gmra.mxu0 %v380
      %v555 = vpop.f32.mrf.mxu0
      %v556 = vadd.f32 0.0, %v555
      %v557 = vpop.f32.mrf.mxu0
      %v558 = vadd.f32 0.0, %v557
      %559 = vmatmul.bf16.gmra.mxu0 %v382
      %v560 = vpop.f32.mrf.mxu0
      %v561 = vadd.f32 0.0, %v560
      %v562 = vpop.f32.mrf.mxu0
      %v563 = vadd.f32 0.0, %v562
      %564 = vmatmul.bf16.gmra.mxu0 %v384
      %v565 = vpop.f32.mrf.mxu0
      %v566 = vadd.f32 0.0, %v565
      %v567 = vpop.f32.mrf.mxu0
      %v568 = vadd.f32 0.0, %v567
      %569 = vmatmul.bf16.gmra.mxu0 %v386
      %v570 = vpop.f32.mrf.mxu0
      %v571 = vadd.f32 0.0, %v570
      %v572 = vpop.f32.mrf.mxu0
      %v573 = vadd.f32 0.0, %v572
      %574 = vmatmul.bf16.gmra.mxu0 %v388
      %v575 = vpop.f32.mrf.mxu0
      %v576 = vadd.f32 0.0, %v575
      %v577 = vpop.f32.mrf.mxu0
      %v578 = vadd.f32 0.0, %v577
      %579 = vmatmul.bf16.gmra.mxu0 %v390
      %v580 = vpop.f32.mrf.mxu0
      %v581 = vadd.f32 0.0, %v580
      %v582 = vpop.f32.mrf.mxu0
      %v583 = vadd.f32 0.0, %v582
      %584 = vmatmul.bf16.gmra.mxu0 %v392
      %v585 = vpop.f32.mrf.mxu0
      %v586 = vadd.f32 0.0, %v585
      %v587 = vpop.f32.mrf.mxu0
      %v588 = vadd.f32 0.0, %v587
      %589 = vmatmul.bf16.gmra.mxu0 %v394
      %v590 = vpop.f32.mrf.mxu0
      %v591 = vadd.f32 0.0, %v590
      %v592 = vpop.f32.mrf.mxu0
      %v593 = vadd.f32 0.0, %v592
      %594 = vmatmul.bf16.gmra.mxu0 %v396
      %v595 = vpop.f32.mrf.mxu0
      %v596 = vadd.f32 0.0, %v595
      %v597 = vpop.f32.mrf.mxu0
      %v598 = vadd.f32 0.0, %v597
      %599 = vmatmul.bf16.gmra.mxu0 %v398
      %v600 = vpop.f32.mrf.mxu0
      %v601 = vadd.f32 0.0, %v600
      %v602 = vpop.f32.mrf.mxu0
      %v603 = vadd.f32 0.0, %v602
      %604 = vmatmul.bf16.gmra.mxu0 %v400
      %v605 = vpop.f32.mrf.mxu0
      %v606 = vadd.f32 0.0, %v605
      %v607 = vpop.f32.mrf.mxu0
      %v608 = vadd.f32 0.0, %v607
      %609 = vmatmul.bf16.gmra.mxu0 %v402
      %v610 = vpop.f32.mrf.mxu0
      %v611 = vadd.f32 0.0, %v610
      %v612 = vpop.f32.mrf.mxu0
      %v613 = vadd.f32 0.0, %v612
      %614 = vmatmul.bf16.gmra.mxu0 %v404
      %v615 = vpop.f32.mrf.mxu0
      %v616 = vadd.f32 0.0, %v615
      %v617 = vpop.f32.mrf.mxu0
      %v618 = vadd.f32 0.0, %v617
      %619 = vmatmul.bf16.gmra.mxu0 %v406
      %v620 = vpop.f32.mrf.mxu0
      %v621 = vadd.f32 0.0, %v620
      %v622 = vpop.f32.mrf.mxu0
      %v623 = vadd.f32 0.0, %v622
      %624 = vdwg.mxu0
      %625 = vmatpush.bf16.msra.mxu0 %v519
      %626 = vmatpush.bf16.msra.mxu0 %v518
      %627 = vmatpush.bf16.msra.mxu0 %v517
      %628 = vmatpush.bf16.msra.mxu0 %v516
      %629 = vmatpush.bf16.msra.mxu0 %v515
      %630 = vmatpush.bf16.msra.mxu0 %v514
      %631 = vmatpush.bf16.msra.mxu0 %v513
      %632 = vmatpush.bf16.msra.mxu0 %v512
      %633 = vmatmul.bf16.gmra.mxu0 %v377
      %v634 = vpop.f32.mrf.mxu0
      %v635 = vadd.f32 %v546, %v634
      %v636 = vpop.f32.mrf.mxu0
      %v637 = vadd.f32 %v548, %v636
      %638 = vmatmul.bf16.gmra.mxu0 %v379
      %v639 = vpop.f32.mrf.mxu0
      %v640 = vadd.f32 %v551, %v639
      %v641 = vpop.f32.mrf.mxu0
      %v642 = vadd.f32 %v553, %v641
      %643 = vmatmul.bf16.gmra.mxu0 %v381
      %v644 = vpop.f32.mrf.mxu0
      %v645 = vadd.f32 %v556, %v644
      %v646 = vpop.f32.mrf.mxu0
      %v647 = vadd.f32 %v558, %v646
      %648 = vmatmul.bf16.gmra.mxu0 %v383
      %v649 = vpop.f32.mrf.mxu0
      %v650 = vadd.f32 %v561, %v649
      %v651 = vpop.f32.mrf.mxu0
      %v652 = vadd.f32 %v563, %v651
      %653 = vmatmul.bf16.gmra.mxu0 %v385
      %v654 = vpop.f32.mrf.mxu0
      %v655 = vadd.f32 %v566, %v654
      %v656 = vpop.f32.mrf.mxu0
      %v657 = vadd.f32 %v568, %v656
      %658 = vmatmul.bf16.gmra.mxu0 %v387
      %v659 = vpop.f32.mrf.mxu0
      %v660 = vadd.f32 %v571, %v659
      %v661 = vpop.f32.mrf.mxu0
      %v662 = vadd.f32 %v573, %v661
      %663 = vmatmul.bf16.gmra.mxu0 %v389
      %v664 = vpop.f32.mrf.mxu0
      %v665 = vadd.f32 %v576, %v664
      %v666 = vpop.f32.mrf.mxu0
      %v667 = vadd.f32 %v578, %v666
      %668 = vmatmul.bf16.gmra.mxu0 %v391
      %v669 = vpop.f32.mrf.mxu0
      %v670 = vadd.f32 %v581, %v669
      %v671 = vpop.f32.mrf.mxu0
      %v672 = vadd.f32 %v583, %v671
      %673 = vmatmul.bf16.gmra.mxu0 %v393
      %v674 = vpop.f32.mrf.mxu0
      %v675 = vadd.f32 %v586, %v674
      %v676 = vpop.f32.mrf.mxu0
      %v677 = vadd.f32 %v588, %v676
      %678 = vmatmul.bf16.gmra.mxu0 %v395
      %v679 = vpop.f32.mrf.mxu0
      %v680 = vadd.f32 %v591, %v679
      %v681 = vpop.f32.mrf.mxu0
      %v682 = vadd.f32 %v593, %v681
      %683 = vmatmul.bf16.gmra.mxu0 %v397
      %v684 = vpop.f32.mrf.mxu0
      %v685 = vadd.f32 %v596, %v684
      %v686 = vpop.f32.mrf.mxu0
      %v687 = vadd.f32 %v598, %v686
      %688 = vmatmul.bf16.gmra.mxu0 %v399
      %v689 = vpop.f32.mrf.mxu0
      %v690 = vadd.f32 %v601, %v689
      %v691 = vpop.f32.mrf.mxu0
      %v692 = vadd.f32 %v603, %v691
      %693 = vmatmul.bf16.gmra.mxu0 %v401
      %v694 = vpop.f32.mrf.mxu0
      %v695 = vadd.f32 %v606, %v694
      %v696 = vpop.f32.mrf.mxu0
      %v697 = vadd.f32 %v608, %v696
      %698 = vmatmul.bf16.gmra.mxu0 %v403
      %v699 = vpop.f32.mrf.mxu0
      %v700 = vadd.f32 %v611, %v699
      %v701 = vpop.f32.mrf.mxu0
      %v702 = vadd.f32 %v613, %v701
      %703 = vmatmul.bf16.gmra.mxu0 %v405
      %v704 = vpop.f32.mrf.mxu0
      %v705 = vadd.f32 %v616, %v704
      %v706 = vpop.f32.mrf.mxu0
      %v707 = vadd.f32 %v618, %v706
      %708 = vmatmul.bf16.gmra.mxu0 %v407
      %v709 = vpop.f32.mrf.mxu0
      %v710 = vadd.f32 %v621, %v709
      %v711 = vpop.f32.mrf.mxu0
      %v712 = vadd.f32 %v623, %v711
      %713 = vdwg.mxu0
      %p714 = scmp.eq.s32.totalorder %s19, 0
      %p715 = scmp.eq.s32.totalorder %s20, 0
      %p716 = pnand %p714, %p715
      %p717 = pneg %p716
      // Predicated region
      $region37: #{generator_forward.8} parent=35 // pred_check
        _
      $region38: #{generator_forward.8} parent=35 // pred_check_branch
        %719 = sbr.rel (%p716) target = $region40
      $region39: #{generator_forward.8} parent=35 // pred_region
        %720 = vst [vmem:[#allocation2] sm:$0x1] 0.0
        %721 = vst [vmem:[#allocation3] sm:$0x1] 0.0
      $region40: #{generator_forward.8} parent=35 // pred_fallthru
        _
      // Predicated region
      $region41: #{generator_forward.8} parent=35 // pred_check
        %p722 = pneg %p714
      $region42: #{generator_forward.8} parent=35 // pred_check_branch
        %724 = sbr.rel (%p722) target = $region44
      $region43: #{generator_forward.8} parent=35 // pred_region
        %v725 = vld [vmem:[#allocation2] sm:$0x1]
        %v726 = vadd.f32 %v635, %v637
        %v727 = vadd.f32 %v726, %v640
        %v728 = vadd.f32 %v727, %v642
        %v729 = vadd.f32 %v728, %v645
        %v730 = vadd.f32 %v729, %v647
        %v731 = vadd.f32 %v730, %v650
        %v732 = vadd.f32 %v731, %v652
        %v733 = vadd.f32 %v732, %v655
        %v734 = vadd.f32 %v733, %v657
        %v735 = vadd.f32 %v734, %v660
        %v736 = vadd.f32 %v735, %v662
        %v737 = vadd.f32 %v736, %v665
        %v738 = vadd.f32 %v737, %v667
        %v739 = vadd.f32 %v738, %v670
        %v740 = vadd.f32 %v739, %v672
        %v741 = vadd.f32 %v740, %v675
        %v742 = vadd.f32 %v741, %v677
        %v743 = vadd.f32 %v742, %v680
        %v744 = vadd.f32 %v743, %v682
        %v745 = vadd.f32 %v744, %v685
        %v746 = vadd.f32 %v745, %v687
        %v747 = vadd.f32 %v746, %v690
        %v748 = vadd.f32 %v747, %v692
        %v749 = vadd.f32 %v748, %v695
        %v750 = vadd.f32 %v749, %v697
        %v751 = vadd.f32 %v750, %v700
        %v752 = vadd.f32 %v751, %v702
        %v753 = vadd.f32 %v752, %v705
        %v754 = vadd.f32 %v753, %v707
        %v755 = vadd.f32 %v754, %v710
        %v756 = vadd.f32 %v755, %v712
        %v757 = vrot.slane %v756, 4
        %v758 = vadd.f32 %v756, %v757
        %v759 = vrot.slane %v758, 2
        %v760 = vadd.f32 %v758, %v759
        %v761 = vrot.slane %v760, 1
        %v762 = vadd.f32 %v760, %v761
        %v763 = vadd.f32 %v725, %v762
        %764 = vst [vmem:[#allocation2] sm:$0x1] %v763
        %v765 = vld [vmem:[#allocation3] sm:$0x1]
        %v766 = vmul.f32 %v635, %v635
        %v767 = vmul.f32 %v637, %v637
        %v768 = vmul.f32 %v640, %v640
        %v769 = vmul.f32 %v642, %v642
        %v770 = vmul.f32 %v645, %v645
        %v771 = vmul.f32 %v647, %v647
        %v772 = vmul.f32 %v650, %v650
        %v773 = vmul.f32 %v652, %v652
        %v774 = vmul.f32 %v655, %v655
        %v775 = vmul.f32 %v657, %v657
        %v776 = vmul.f32 %v660, %v660
        %v777 = vmul.f32 %v662, %v662
        %v778 = vmul.f32 %v665, %v665
        %v779 = vmul.f32 %v667, %v667
        %v780 = vmul.f32 %v670, %v670
        %v781 = vmul.f32 %v672, %v672
        %v782 = vmul.f32 %v675, %v675
        %v783 = vmul.f32 %v677, %v677
        %v784 = vmul.f32 %v680, %v680
        %v785 = vmul.f32 %v682, %v682
        %v786 = vmul.f32 %v685, %v685
        %v787 = vmul.f32 %v687, %v687
        %v788 = vmul.f32 %v690, %v690
        %v789 = vmul.f32 %v692, %v692
        %v790 = vmul.f32 %v695, %v695
        %v791 = vmul.f32 %v697, %v697
        %v792 = vmul.f32 %v700, %v700
        %v793 = vmul.f32 %v702, %v702
        %v794 = vmul.f32 %v705, %v705
        %v795 = vmul.f32 %v707, %v707
        %v796 = vmul.f32 %v710, %v710
        %v797 = vmul.f32 %v712, %v712
        %v798 = vadd.f32 %v766, %v767
        %v799 = vadd.f32 %v798, %v768
        %v800 = vadd.f32 %v799, %v769
        %v801 = vadd.f32 %v800, %v770
        %v802 = vadd.f32 %v801, %v771
        %v803 = vadd.f32 %v802, %v772
        %v804 = vadd.f32 %v803, %v773
        %v805 = vadd.f32 %v804, %v774
        %v806 = vadd.f32 %v805, %v775
        %v807 = vadd.f32 %v806, %v776
        %v808 = vadd.f32 %v807, %v777
        %v809 = vadd.f32 %v808, %v778
        %v810 = vadd.f32 %v809, %v779
        %v811 = vadd.f32 %v810, %v780
        %v812 = vadd.f32 %v811, %v781
        %v813 = vadd.f32 %v812, %v782
        %v814 = vadd.f32 %v813, %v783
        %v815 = vadd.f32 %v814, %v784
        %v816 = vadd.f32 %v815, %v785
        %v817 = vadd.f32 %v816, %v786
        %v818 = vadd.f32 %v817, %v787
        %v819 = vadd.f32 %v818, %v788
        %v820 = vadd.f32 %v819, %v789
        %v821 = vadd.f32 %v820, %v790
        %v822 = vadd.f32 %v821, %v791
        %v823 = vadd.f32 %v822, %v792
        %v824 = vadd.f32 %v823, %v793
        %v825 = vadd.f32 %v824, %v794
        %v826 = vadd.f32 %v825, %v795
        %v827 = vadd.f32 %v826, %v796
        %v828 = vadd.f32 %v827, %v797
        %v829 = vrot.slane %v828, 4
        %v830 = vadd.f32 %v828, %v829
        %v831 = vrot.slane %v830, 2
        %v832 = vadd.f32 %v830, %v831
        %v833 = vrot.slane %v832, 1
        %v834 = vadd.f32 %v832, %v833
        %v835 = vadd.f32 %v765, %v834
        %836 = vst [vmem:[#allocation3] sm:$0x1] %v835
      $region44: #{generator_forward.8} parent=35 // pred_fallthru
        _
      %p837 = scmp.eq.s32.totalorder %s19, 1
      // Predicated region
      $region45: #{generator_forward.8} parent=35 // pred_check
        %p838 = pneg %p837
      $region46: #{generator_forward.8} parent=35 // pred_check_branch
        %840 = sbr.rel (%p838) target = $region48
      $region47: #{generator_forward.8} parent=35 // pred_region
        %v841 = vld [vmem:[#allocation2] sm:$0x1]
        %v842 = vmul.f32 %v841, 0.001953125
        %v843 = vld [vmem:[#allocation3] sm:$0x1]
        %v844 = vmul.f32 %v843, 0.001953125
        %v845 = vmul.f32 %v842, %v842
        %v846 = vsub.f32 %v844, %v845
        %v847 = vmax.f32 %v846, 0.0
        %v848 = vadd.f32 %v847, 1e-05
        %v849 = vrsqrt.pop %v848
        %v850 = vmul.f32 %v849, %v848
        %v851 = vmul.f32 %v850, %v849
        %v852 = vmul.f32 0.5, %v851
        %v853 = vsub.f32 1.5, %v852
        %v854 = vmul.f32 %v849, %v853
        %vm855 = vweird.f32 %v848
        %vm856 = vweird.f32 %v849
        %vm857 = vmor %vm855, %vm856
        %v858 = vsel %vm857, %v849, %v854
        %v860 = vperm.slane %v842, 0
        %v862 = vsub.f32 %v635, %v860
        %v863 = vsub.f32 %v637, %v860
        %v864 = vsub.f32 %v640, %v860
        %v865 = vsub.f32 %v642, %v860
        %v866 = vsub.f32 %v645, %v860
        %v867 = vsub.f32 %v647, %v860
        %v868 = vsub.f32 %v650, %v860
        %v869 = vsub.f32 %v652, %v860
        %v870 = vsub.f32 %v655, %v860
        %v871 = vsub.f32 %v657, %v860
        %v872 = vsub.f32 %v660, %v860
        %v873 = vsub.f32 %v662, %v860
        %v874 = vsub.f32 %v665, %v860
        %v875 = vsub.f32 %v667, %v860
        %v876 = vsub.f32 %v670, %v860
        %v877 = vsub.f32 %v672, %v860
        %v878 = vsub.f32 %v675, %v860
        %v879 = vsub.f32 %v677, %v860
        %v880 = vsub.f32 %v680, %v860
        %v881 = vsub.f32 %v682, %v860
        %v882 = vsub.f32 %v685, %v860
        %v883 = vsub.f32 %v687, %v860
        %v884 = vsub.f32 %v690, %v860
        %v885 = vsub.f32 %v692, %v860
        %v886 = vsub.f32 %v695, %v860
        %v887 = vsub.f32 %v697, %v860
        %v888 = vsub.f32 %v700, %v860
        %v889 = vsub.f32 %v702, %v860
        %v890 = vsub.f32 %v705, %v860
        %v891 = vsub.f32 %v707, %v860
        %v892 = vsub.f32 %v710, %v860
        %v893 = vsub.f32 %v712, %v860
        %v895 = vperm.slane %v858, 0
        %v897 = vmul.f32 %v862, %v895
        %v898 = vmul.f32 %v863, %v895
        %v899 = vmul.f32 %v864, %v895
        %v900 = vmul.f32 %v865, %v895
        %v901 = vmul.f32 %v866, %v895
        %v902 = vmul.f32 %v867, %v895
        %v903 = vmul.f32 %v868, %v895
        %v904 = vmul.f32 %v869, %v895
        %v905 = vmul.f32 %v870, %v895
        %v906 = vmul.f32 %v871, %v895
        %v907 = vmul.f32 %v872, %v895
        %v908 = vmul.f32 %v873, %v895
        %v909 = vmul.f32 %v874, %v895
        %v910 = vmul.f32 %v875, %v895
        %v911 = vmul.f32 %v876, %v895
        %v912 = vmul.f32 %v877, %v895
        %v913 = vmul.f32 %v878, %v895
        %v914 = vmul.f32 %v879, %v895
        %v915 = vmul.f32 %v880, %v895
        %v916 = vmul.f32 %v881, %v895
        %v917 = vmul.f32 %v882, %v895
        %v918 = vmul.f32 %v883, %v895
        %v919 = vmul.f32 %v884, %v895
        %v920 = vmul.f32 %v885, %v895
        %v921 = vmul.f32 %v886, %v895
        %v922 = vmul.f32 %v887, %v895
        %v923 = vmul.f32 %v888, %v895
        %v924 = vmul.f32 %v889, %v895
        %v925 = vmul.f32 %v890, %v895
        %v926 = vmul.f32 %v891, %v895
        %v927 = vmul.f32 %v892, %v895
        %v928 = vmul.f32 %v893, %v895
        %v929 = vld [vmem:[%s2] sm:$0x1]
        %v931 = vperm.slane %v929, 0
        %v933 = vmul.f32 %v897, %v931
        %v934 = vmul.f32 %v898, %v931
        %v935 = vmul.f32 %v899, %v931
        %v936 = vmul.f32 %v900, %v931
        %v937 = vmul.f32 %v901, %v931
        %v938 = vmul.f32 %v902, %v931
        %v939 = vmul.f32 %v903, %v931
        %v940 = vmul.f32 %v904, %v931
        %v941 = vmul.f32 %v905, %v931
        %v942 = vmul.f32 %v906, %v931
        %v943 = vmul.f32 %v907, %v931
        %v944 = vmul.f32 %v908, %v931
        %v945 = vmul.f32 %v909, %v931
        %v946 = vmul.f32 %v910, %v931
        %v947 = vmul.f32 %v911, %v931
        %v948 = vmul.f32 %v912, %v931
        %v949 = vmul.f32 %v913, %v931
        %v950 = vmul.f32 %v914, %v931
        %v951 = vmul.f32 %v915, %v931
        %v952 = vmul.f32 %v916, %v931
        %v953 = vmul.f32 %v917, %v931
        %v954 = vmul.f32 %v918, %v931
        %v955 = vmul.f32 %v919, %v931
        %v956 = vmul.f32 %v920, %v931
        %v957 = vmul.f32 %v921, %v931
        %v958 = vmul.f32 %v922, %v931
        %v959 = vmul.f32 %v923, %v931
        %v960 = vmul.f32 %v924, %v931
        %v961 = vmul.f32 %v925, %v931
        %v962 = vmul.f32 %v926, %v931
        %v963 = vmul.f32 %v927, %v931
        %v964 = vmul.f32 %v928, %v931
        %v965 = vld [vmem:[%s3] sm:$0x1]
        %v967 = vperm.slane %v965, 0
        %v969 = vadd.f32 %v933, %v967
        %v970 = vadd.f32 %v934, %v967
        %v971 = vadd.f32 %v935, %v967
        %v972 = vadd.f32 %v936, %v967
        %v973 = vadd.f32 %v937, %v967
        %v974 = vadd.f32 %v938, %v967
        %v975 = vadd.f32 %v939, %v967
        %v976 = vadd.f32 %v940, %v967
        %v977 = vadd.f32 %v941, %v967
        %v978 = vadd.f32 %v942, %v967
        %v979 = vadd.f32 %v943, %v967
        %v980 = vadd.f32 %v944, %v967
        %v981 = vadd.f32 %v945, %v967
        %v982 = vadd.f32 %v946, %v967
        %v983 = vadd.f32 %v947, %v967
        %v984 = vadd.f32 %v948, %v967
        %v985 = vadd.f32 %v949, %v967
        %v986 = vadd.f32 %v950, %v967
        %v987 = vadd.f32 %v951, %v967
        %v988 = vadd.f32 %v952, %v967
        %v989 = vadd.f32 %v953, %v967
        %v990 = vadd.f32 %v954, %v967
        %v991 = vadd.f32 %v955, %v967
        %v992 = vadd.f32 %v956, %v967
        %v993 = vadd.f32 %v957, %v967
        %v994 = vadd.f32 %v958, %v967
        %v995 = vadd.f32 %v959, %v967
        %v996 = vadd.f32 %v960, %v967
        %v997 = vadd.f32 %v961, %v967
        %v998 = vadd.f32 %v962, %v967
        %v999 = vadd.f32 %v963, %v967
        %v1000 = vadd.f32 %v964, %v967
        %v1001 = vmax.f32 %v969, 0.0
        %v1002 = vmax.f32 %v970, 0.0
        %v1003 = vmax.f32 %v971, 0.0
        %v1004 = vmax.f32 %v972, 0.0
        %v1005 = vmax.f32 %v973, 0.0
        %v1006 = vmax.f32 %v974, 0.0
        %v1007 = vmax.f32 %v975, 0.0
        %v1008 = vmax.f32 %v976, 0.0
        %v1009 = vmax.f32 %v977, 0.0
        %v1010 = vmax.f32 %v978, 0.0
        %v1011 = vmax.f32 %v979, 0.0
        %v1012 = vmax.f32 %v980, 0.0
        %v1013 = vmax.f32 %v981, 0.0
        %v1014 = vmax.f32 %v982, 0.0
        %v1015 = vmax.f32 %v983, 0.0
        %v1016 = vmax.f32 %v984, 0.0
        %v1017 = vmax.f32 %v985, 0.0
        %v1018 = vmax.f32 %v986, 0.0
        %v1019 = vmax.f32 %v987, 0.0
        %v1020 = vmax.f32 %v988, 0.0
        %v1021 = vmax.f32 %v989, 0.0
        %v1022 = vmax.f32 %v990, 0.0
        %v1023 = vmax.f32 %v991, 0.0
        %v1024 = vmax.f32 %v992, 0.0
        %v1025 = vmax.f32 %v993, 0.0
        %v1026 = vmax.f32 %v994, 0.0
        %v1027 = vmax.f32 %v995, 0.0
        %v1028 = vmax.f32 %v996, 0.0
        %v1029 = vmax.f32 %v997, 0.0
        %v1030 = vmax.f32 %v998, 0.0
        %v1031 = vmax.f32 %v999, 0.0
        %v1032 = vmax.f32 %v1000, 0.0
        %v1033 = vpack.c.bf16 %v1001, %v1001
        %v1034 = vpack.c.bf16 %v1002, %v1002
        %v1035 = vpack.c.bf16 %v1003, %v1003
        %v1036 = vpack.c.bf16 %v1004, %v1004
        %v1037 = vpack.c.bf16 %v1005, %v1005
        %v1038 = vpack.c.bf16 %v1006, %v1006
        %v1039 = vpack.c.bf16 %v1007, %v1007
        %v1040 = vpack.c.bf16 %v1008, %v1008
        %v1041 = vpack.c.bf16 %v1009, %v1009
        %v1042 = vpack.c.bf16 %v1010, %v1010
        %v1043 = vpack.c.bf16 %v1011, %v1011
        %v1044 = vpack.c.bf16 %v1012, %v1012
        %v1045 = vpack.c.bf16 %v1013, %v1013
        %v1046 = vpack.c.bf16 %v1014, %v1014
        %v1047 = vpack.c.bf16 %v1015, %v1015
        %v1048 = vpack.c.bf16 %v1016, %v1016
        %v1049 = vpack.c.bf16 %v1017, %v1017
        %v1050 = vpack.c.bf16 %v1018, %v1018
        %v1051 = vpack.c.bf16 %v1019, %v1019
        %v1052 = vpack.c.bf16 %v1020, %v1020
        %v1053 = vpack.c.bf16 %v1021, %v1021
        %v1054 = vpack.c.bf16 %v1022, %v1022
        %v1055 = vpack.c.bf16 %v1023, %v1023
        %v1056 = vpack.c.bf16 %v1024, %v1024
        %v1057 = vpack.c.bf16 %v1025, %v1025
        %v1058 = vpack.c.bf16 %v1026, %v1026
        %v1059 = vpack.c.bf16 %v1027, %v1027
        %v1060 = vpack.c.bf16 %v1028, %v1028
        %v1061 = vpack.c.bf16 %v1029, %v1029
        %v1062 = vpack.c.bf16 %v1030, %v1030
        %v1063 = vpack.c.bf16 %v1031, %v1031
        %v1064 = vpack.c.bf16 %v1032, %v1032
        %1065 = vst [vmem:[%s214] sm:$0xf] %v1033
        %1066 = vst [vmem:[%s214 + $0x4] sm:$0xf] %v1034
        %1067 = vst [vmem:[%s214 + $0x8] sm:$0xf] %v1035
        %1068 = vst [vmem:[%s214 + $0xc] sm:$0xf] %v1036
        %1069 = vst [vmem:[%s214 + $0x10] sm:$0xf] %v1037
        %1070 = vst [vmem:[%s214 + $0x14] sm:$0xf] %v1038
        %1071 = vst [vmem:[%s214 + $0x18] sm:$0xf] %v1039
        %1072 = vst [vmem:[%s214 + $0x1c] sm:$0xf] %v1040
        %1073 = vst [vmem:[%s214 + $0x20] sm:$0xf] %v1041
        %1074 = vst [vmem:[%s214 + $0x24] sm:$0xf] %v1042
        %1075 = vst [vmem:[%s214 + $0x28] sm:$0xf] %v1043
        %1076 = vst [vmem:[%s214 + $0x2c] sm:$0xf] %v1044
        %1077 = vst [vmem:[%s214 + $0x30] sm:$0xf] %v1045
        %1078 = vst [vmem:[%s214 + $0x34] sm:$0xf] %v1046
        %1079 = vst [vmem:[%s214 + $0x38] sm:$0xf] %v1047
        %1080 = vst [vmem:[%s214 + $0x3c] sm:$0xf] %v1048
        %1081 = vst [vmem:[%s214 + $0x40] sm:$0xf] %v1049
        %1082 = vst [vmem:[%s214 + $0x44] sm:$0xf] %v1050
        %1083 = vst [vmem:[%s214 + $0x48] sm:$0xf] %v1051
        %1084 = vst [vmem:[%s214 + $0x4c] sm:$0xf] %v1052
        %1085 = vst [vmem:[%s214 + $0x50] sm:$0xf] %v1053
        %1086 = vst [vmem:[%s214 + $0x54] sm:$0xf] %v1054
        %1087 = vst [vmem:[%s214 + $0x58] sm:$0xf] %v1055
        %1088 = vst [vmem:[%s214 + $0x5c] sm:$0xf] %v1056
        %1089 = vst [vmem:[%s214 + $0x60] sm:$0xf] %v1057
        %1090 = vst [vmem:[%s214 + $0x64] sm:$0xf] %v1058
        %1091 = vst [vmem:[%s214 + $0x68] sm:$0xf] %v1059
        %1092 = vst [vmem:[%s214 + $0x6c] sm:$0xf] %v1060
        %1093 = vst [vmem:[%s214 + $0x70] sm:$0xf] %v1061
        %1094 = vst [vmem:[%s214 + $0x74] sm:$0xf] %v1062
        %1095 = vst [vmem:[%s214 + $0x78] sm:$0xf] %v1063
        %1096 = vst [vmem:[%s214 + $0x7c] sm:$0xf] %v1064
      $region48: #{generator_forward.8} parent=35 // pred_fallthru
        _
      %s1097 = smul.u32 32, %s20
      %p1098 = scmp.lt.s32.totalorder %s1097, 63
      %s1099 = scalar_select %p1098, %s1097, 63
      %s1100 = smul.addr %s1099, 4
      %s1101 = scalar_lea.vmem %s4, %s1100
      // Predicated region
      $region49: #{generator_forward.8} parent=35 // pred_check
        %p1102 = pneg %p134
      $region50: #{generator_forward.8} parent=35 // pred_check_branch
        %1104 = sbr.rel (%p1102) target = $region52
      $region51: #{generator_forward.8} parent=35 // pred_region
        %s1105 = smul.u32 32, %s20
      $region52: #{generator_forward.8} parent=35 // pred_fallthru
        _
    $region36: #{generator_forward.8} parent=5 // pred_fallthru
      _
    %p1106 = scmp.le.s32.totalorder 2, %s10
    // Predicated region
    $region53: #{generator_forward.8} parent=5 // pred_check
      %p1107 = pneg %p1106
    $region54: #{generator_forward.8} parent=5 // pred_check_branch
      %1109 = sbr.rel (%p1107) target = $region56
    $region55: #{generator_forward.8} parent=5 // pred_region
      %s1110 = ssub.s32 %s10, 2
      // Predicated region
      $region57: #{generator_forward.8} parent=55 // pred_check
        %p1111 = pneg %p140
      $region58: #{generator_forward.8} parent=55 // pred_check_branch
        %1113 = sbr.rel (%p1111) target = $region60
      $region59: #{generator_forward.8} parent=55 // pred_region
        %s1114 = smul.u32 32, %s22
        %p1115 = scmp.lt.s32.totalorder %s1114, 63
        %s1116 = scalar_select %p1115, %s1114, 63
        %s1117 = smul.addr %s1116, 4
        %s1118 = scalar_lea.vmem %s4, %s1117
      $region60: #{generator_forward.8} parent=55 // pred_fallthru
        _
    $region56: #{generator_forward.8} parent=5 // pred_fallthru
      _
  $region6: #{generator_forward.8} parent=0 // loop_footer
    %s14 = sadd.s32 1, %s10
  $region7: #{generator_forward.8} parent=0 // loop_footer_branch
    %9 = sbr.rel target = $region3
  $region8: #{generator_forward.8} parent=0 // loop_exit
    _

// kernel: generator_forward.9
$region0: #{generator_forward.9}
  #allocation0 [shape = 'u32[]', space=smem, size = 0x4, offset = 0x4, fixed_abs, tag = 'smem constant byte address 0x4 - core index']
  #allocation1 [shape = 'u32[72,128]{1,0:T(1,128)}', space=vmem, size = 0x9000, scoped, tag = 'internal scratch']
  %s0 = inlined_call_operand.vmem [shape: bf16[2048,128], index: 0, kind: input, shape index: {}]
  %s1 = inlined_call_operand.vmem [shape: bf16[128,128], index: 1, kind: input, shape index: {}]
  %s2 = inlined_call_operand.vmem [shape: f32[2048,128], index: 2, kind: output, shape index: {}]
  %s3 = sld [smem:[#allocation0]]
  $region41: #{generator_forward.9} parent=0
    _
  %s5 = ssub.s32 1, %s3
  %s6 = scalar_select 0, %s5, %s3
  loop: start=0, step=1, limit=10
  $region2: #{generator_forward.9} parent=0 // loop_pre_header
    _
  $region3: #{generator_forward.9} parent=0 // loop_header
    %s8 = sphi 0, %s12
    %p9 = scmp.ge.s32.totalorder %s8, 10
    %s18 = sphi 0, %s20
    %s21 = sphi 0, %s18
    %s22 = sphi 0, %s21
    %s38 = sphi 0, %s22
    %s42 = sphi 0, %s42
    %s44 = sphi 0, %s42
    %s45 = sphi 0, %s44
    %s59 = sphi 0, %s45
    %s65 = sphi 0, %s67
    %s68 = sphi 0, %s65
    %s69 = sphi 0, %s68
    %s85 = sphi 0, %s69
  $region4: #{generator_forward.9} parent=0 // loop_header_branch
    %11 = sbr.rel (%p9) target = $region8
  $region5: #{generator_forward.9} parent=0 // loop_body
    %s13 = ssub.s32 %s8, 1
    %s14 = ssub.s32 %s8, 2
    %s15 = sadd.s32 %s8, 1
    %s16 = ssub.s32 %s8, %s15
    %p17 = scmp.eq.s32.totalorder %s16, 0
    %s19 = sadd.s32 %s18, 1
    %s20 = scalar_select %p17, %s18, %s19
    %p23 = pneg %p17
    %p24 = scmp.eq.s32.totalorder %s8, 7
    %p25 = por %p23, %p24
    %p26 = scmp.ne.s32.totalorder %s18, %s21
    %p27 = scmp.eq.s32.totalorder %s8, 0
    %p28 = por %p26, %p27
    %p29 = scmp.ne.s32.totalorder %s18, %s21
    %p30 = scmp.eq.s32.totalorder %s13, 7
    %p31 = por %p29, %p30
    %p32 = scmp.ne.s32.totalorder %s21, %s22
    %p33 = scmp.eq.s32.totalorder %s13, 0
    %p34 = por %p32, %p33
    %p35 = scmp.ne.s32.totalorder %s21, %s22
    %p36 = scmp.eq.s32.totalorder %s14, 7
    %p37 = por %p35, %p36
    %p39 = scmp.ne.s32.totalorder %s22, %s38
    %p40 = scmp.eq.s32.totalorder %s14, 0
    %p41 = por %p39, %p40
    %s43 = sadd.s32 %s42, 1
    %p46 = scmp.eq.s32.totalorder %s8, 7
    %p47 = scmp.ne.s32.totalorder %s42, %s44
    %p48 = scmp.eq.s32.totalorder %s8, 0
    %p49 = por %p47, %p48
    %p50 = scmp.ne.s32.totalorder %s42, %s44
    %p51 = scmp.eq.s32.totalorder %s13, 7
    %p52 = por %p50, %p51
    %p53 = scmp.ne.s32.totalorder %s44, %s45
    %p54 = scmp.eq.s32.totalorder %s13, 0
    %p55 = por %p53, %p54
    %p56 = scmp.ne.s32.totalorder %s44, %s45
    %p57 = scmp.eq.s32.totalorder %s14, 7
    %p58 = por %p56, %p57
    %p60 = scmp.ne.s32.totalorder %s45, %s59
    %p61 = scmp.eq.s32.totalorder %s14, 0
    %p62 = por %p60, %p61
    %s63 = ssub.s32 %s8, %s15
    %p64 = scmp.eq.s32.totalorder %s63, 0
    %s66 = sadd.s32 %s65, 1
    %s67 = scalar_select %p64, %s65, %s66
    %p70 = pneg %p64
    %p71 = scmp.eq.s32.totalorder %s8, 7
    %p72 = por %p70, %p71
    %p73 = scmp.ne.s32.totalorder %s65, %s68
    %p74 = scmp.eq.s32.totalorder %s8, 0
    %p75 = por %p73, %p74
    %p76 = scmp.ne.s32.totalorder %s65, %s68
    %p77 = scmp.eq.s32.totalorder %s13, 7
    %p78 = por %p76, %p77
    %p79 = scmp.ne.s32.totalorder %s68, %s69
    %p80 = scmp.eq.s32.totalorder %s13, 0
    %p81 = por %p79, %p80
    %p82 = scmp.ne.s32.totalorder %s68, %s69
    %p83 = scmp.eq.s32.totalorder %s14, 7
    %p84 = por %p82, %p83
    %p86 = scmp.ne.s32.totalorder %s69, %s85
    %p87 = scmp.eq.s32.totalorder %s14, 0
    %p88 = por %p86, %p87
    %p89 = scmp.le.s32.totalorder 1, %s8
    %p90 = scmp.lt.s32.totalorder %s8, 9
    %p91 = pnand %p89, %p90
    %p92 = pneg %p91
    // Predicated region
    $region9: #{generator_forward.9} parent=5 // pred_check
      _
    $region10: #{generator_forward.9} parent=5 // pred_check_branch
      %94 = sbr.rel (%p91) target = $region12
    $region11: #{generator_forward.9} parent=5 // pred_region
      %s95 = ssub.s32 %s8, 1
      // Predicated region
      $region13: #{generator_forward.9} parent=11 // pred_check
        %p96 = pneg %p55
      $region14: #{generator_forward.9} parent=11 // pred_check_branch
        %98 = sbr.rel (%p96) target = $region16
      $region15: #{generator_forward.9} parent=11 // pred_region
        _
      $region16: #{generator_forward.9} parent=11 // pred_fallthru
        _
    $region12: #{generator_forward.9} parent=5 // pred_fallthru
      _
    %p99 = scmp.lt.s32.totalorder %s8, 8
    // Predicated region
    $region17: #{generator_forward.9} parent=5 // pred_check
      %p100 = pneg %p99
    $region18: #{generator_forward.9} parent=5 // pred_check_branch
      %102 = sbr.rel (%p100) target = $region20
    $region19: #{generator_forward.9} parent=5 // pred_region
      // Predicated region
      $region21: #{generator_forward.9} parent=19 // pred_check
        %p103 = pneg %p28
      $region22: #{generator_forward.9} parent=19 // pred_check_branch
        %105 = sbr.rel (%p103) target = $region24
      $region23: #{generator_forward.9} parent=19 // pred_region
        %s106 = smul.u32 32, %s8
        %p107 = scmp.lt.s32.totalorder %s106, 255
        %s108 = scalar_select %p107, %s106, 255
        %s109 = smul.addr %s108, 4
        %s110 = scalar_lea.vmem %s0, %s109
        %s111 = smul.u32 32, %s8
      $region24: #{generator_forward.9} parent=19 // pred_fallthru
        _
    $region20: #{generator_forward.9} parent=5 // pred_fallthru
      _
    %p112 = scmp.le.s32.totalorder 1, %s8
    %p113 = scmp.lt.s32.totalorder %s8, 9
    %p114 = pnand %p112, %p113
    %p115 = pneg %p114
    // Predicated region
    $region25: #{generator_forward.9} parent=5 // pred_check
      _
    $region26: #{generator_forward.9} parent=5 // pred_check_branch
      %117 = sbr.rel (%p114) target = $region28
    $region27: #{generator_forward.9} parent=5 // pred_region
      %s118 = ssub.s32 %s8, 1
      %s119 = smul.u32 32, %s13
      %p120 = scmp.lt.s32.totalorder %s119, 255
      %s121 = scalar_select %p120, %s119, 255
      %s122 = smul.addr %s121, 4
      %s123 = scalar_lea.vmem %s0, %s122
      %p124 = pneg %p34
      %p125 = pneg %p31
      %p126 = pneg %p55
      %p127 = pneg %p52
      %p128 = pneg %p81
      %p129 = pneg %p78
      %s130 = smul.u32 32, %s13
      %p131 = scmp.lt.s32.totalorder %s130, 255
      %s132 = scalar_select %p131, %s130, 255
      %s133 = smul.addr %s132, 8
      %s134 = scalar_lea.vmem %s2, %s133
      %s135 = smul.u32 32, %s13
      %p136 = scmp.lt.s32.totalorder %s135, 255
      %s137 = scalar_select %p136, %s135, 255
      %s138 = smul.addr %s137, 4
      %s139 = scalar_lea.vmem %s0, %s138
      %s140 = smul.u32 32, %s13
      %s141 = smul.u32 32, %s13
      %p142 = scmp.lt.s32.totalorder %s141, 255
      %s143 = scalar_select %p142, %s141, 255
      %s144 = smul.addr %s143, 8
      %s145 = scalar_lea.vmem %s2, %s144
      %s146 = smul.u32 32, %s13
      %v147 = vld [vmem:[%s139] sm:$0xf]
      %v148 = vld [vmem:[%s139 + $0x4] sm:$0xf]
      %v149 = vld [vmem:[%s139 + $0x8] sm:$0xf]
      %v150 = vld [vmem:[%s139 + $0xc] sm:$0xf]
      %v151 = vld [vmem:[%s139 + $0x10] sm:$0xf]
      %v152 = vld [vmem:[%s139 + $0x14] sm:$0xf]
      %v153 = vld [vmem:[%s139 + $0x18] sm:$0xf]
      %v154 = vld [vmem:[%s139 + $0x1c] sm:$0xf]
      %v155 = vld [vmem:[%s139 + $0x20] sm:$0xf]
      %v156 = vld [vmem:[%s139 + $0x24] sm:$0xf]
      %v157 = vld [vmem:[%s139 + $0x28] sm:$0xf]
      %v158 = vld [vmem:[%s139 + $0x2c] sm:$0xf]
      %v159 = vld [vmem:[%s139 + $0x30] sm:$0xf]
      %v160 = vld [vmem:[%s139 + $0x34] sm:$0xf]
      %v161 = vld [vmem:[%s139 + $0x38] sm:$0xf]
      %v162 = vld [vmem:[%s139 + $0x3c] sm:$0xf]
      %v163 = vld [vmem:[%s139 + $0x40] sm:$0xf]
      %v164 = vld [vmem:[%s139 + $0x44] sm:$0xf]
      %v165 = vld [vmem:[%s139 + $0x48] sm:$0xf]
      %v166 = vld [vmem:[%s139 + $0x4c] sm:$0xf]
      %v167 = vld [vmem:[%s139 + $0x50] sm:$0xf]
      %v168 = vld [vmem:[%s139 + $0x54] sm:$0xf]
      %v169 = vld [vmem:[%s139 + $0x58] sm:$0xf]
      %v170 = vld [vmem:[%s139 + $0x5c] sm:$0xf]
      %v171 = vld [vmem:[%s139 + $0x60] sm:$0xf]
      %v172 = vld [vmem:[%s139 + $0x64] sm:$0xf]
      %v173 = vld [vmem:[%s139 + $0x68] sm:$0xf]
      %v174 = vld [vmem:[%s139 + $0x6c] sm:$0xf]
      %v175 = vld [vmem:[%s139 + $0x70] sm:$0xf]
      %v176 = vld [vmem:[%s139 + $0x74] sm:$0xf]
      %v177 = vld [vmem:[%s139 + $0x78] sm:$0xf]
      %v178 = vld [vmem:[%s139 + $0x7c] sm:$0xf]
      %v179 = vld [vmem:[%s1] sm:$0xf]
      %v180 = vld [vmem:[%s1 + $0x4] sm:$0xf]
      %v181 = vld [vmem:[%s1 + $0x8] sm:$0xf]
      %v182 = vld [vmem:[%s1 + $0xc] sm:$0xf]
      %v183 = vld [vmem:[%s1 + $0x10] sm:$0xf]
      %v184 = vld [vmem:[%s1 + $0x14] sm:$0xf]
      %v185 = vld [vmem:[%s1 + $0x18] sm:$0xf]
      %v186 = vld [vmem:[%s1 + $0x1c] sm:$0xf]
      %v187 = vld [vmem:[%s1 + $0x20] sm:$0xf]
      %v188 = vld [vmem:[%s1 + $0x24] sm:$0xf]
      %v189 = vld [vmem:[%s1 + $0x28] sm:$0xf]
      %v190 = vld [vmem:[%s1 + $0x2c] sm:$0xf]
      %v191 = vld [vmem:[%s1 + $0x30] sm:$0xf]
      %v192 = vld [vmem:[%s1 + $0x34] sm:$0xf]
      %v193 = vld [vmem:[%s1 + $0x38] sm:$0xf]
      %v194 = vld [vmem:[%s1 + $0x3c] sm:$0xf]
      %v227 = vunpack.c.l.b16 %v147
      %v228 = vunpack.c.l.b16 %v148
      %v229 = vunpack.c.l.b16 %v149
      %v230 = vunpack.c.l.b16 %v150
      %v231 = vunpack.c.l.b16 %v151
      %v232 = vunpack.c.l.b16 %v152
      %v233 = vunpack.c.l.b16 %v153
      %v234 = vunpack.c.l.b16 %v154
      %v235 = vunpack.c.l.b16 %v155
      %v236 = vunpack.c.l.b16 %v156
      %v237 = vunpack.c.l.b16 %v157
      %v238 = vunpack.c.l.b16 %v158
      %v239 = vunpack.c.l.b16 %v159
      %v240 = vunpack.c.l.b16 %v160
      %v241 = vunpack.c.l.b16 %v161
      %v242 = vunpack.c.l.b16 %v162
      %v243 = vunpack.c.l.b16 %v163
      %v244 = vunpack.c.l.b16 %v164
      %v245 = vunpack.c.l.b16 %v165
      %v246 = vunpack.c.l.b16 %v166
      %v247 = vunpack.c.l.b16 %v167
      %v248 = vunpack.c.l.b16 %v168
      %v249 = vunpack.c.l.b16 %v169
      %v250 = vunpack.c.l.b16 %v170
      %v251 = vunpack.c.l.b16 %v171
      %v252 = vunpack.c.l.b16 %v172
      %v253 = vunpack.c.l.b16 %v173
      %v254 = vunpack.c.l.b16 %v174
      %v255 = vunpack.c.l.b16 %v175
      %v256 = vunpack.c.l.b16 %v176
      %v257 = vunpack.c.l.b16 %v177
      %v258 = vunpack.c.l.b16 %v178
      %v259 = vpack.c.b16 %v228, %v227
      %v260 = vpack.c.b16 %v230, %v229
      %v261 = vpack.c.b16 %v232, %v231
      %v262 = vpack.c.b16 %v234, %v233
      %v263 = vpack.c.b16 %v236, %v235
      %v264 = vpack.c.b16 %v238, %v237
      %v265 = vpack.c.b16 %v240, %v239
      %v266 = vpack.c.b16 %v242, %v241
      %v267 = vpack.c.b16 %v244, %v243
      %v268 = vpack.c.b16 %v246, %v245
      %v269 = vpack.c.b16 %v248, %v247
      %v270 = vpack.c.b16 %v250, %v249
      %v271 = vpack.c.b16 %v252, %v251
      %v272 = vpack.c.b16 %v254, %v253
      %v273 = vpack.c.b16 %v256, %v255
      %v274 = vpack.c.b16 %v258, %v257
      %v307 = vunpack.c.l.b16 %v179
      %v308 = vunpack.c.l.b16 %v180
      %v309 = vunpack.c.l.b16 %v181
      %v310 = vunpack.c.l.b16 %v182
      %v311 = vunpack.c.l.b16 %v183
      %v312 = vunpack.c.l.b16 %v184
      %v313 = vunpack.c.l.b16 %v185
      %v314 = vunpack.c.l.b16 %v186
      %v315 = vunpack.c.l.b16 %v187
      %v316 = vunpack.c.l.b16 %v188
      %v317 = vunpack.c.l.b16 %v189
      %v318 = vunpack.c.l.b16 %v190
      %v319 = vunpack.c.l.b16 %v191
      %v320 = vunpack.c.l.b16 %v192
      %v321 = vunpack.c.l.b16 %v193
      %v322 = vunpack.c.l.b16 %v194
      %v323 = vpack.c.b16 %v308, %v307
      %v324 = vpack.c.b16 %v310, %v309
      %v325 = vpack.c.b16 %v312, %v311
      %v326 = vpack.c.b16 %v314, %v313
      %v327 = vpack.c.b16 %v316, %v315
      %v328 = vpack.c.b16 %v318, %v317
      %v329 = vpack.c.b16 %v320, %v319
      %v330 = vpack.c.b16 %v322, %v321
      %339 = vmatpush.bf16.msra.mxu0 %v330
      %340 = vmatpush.bf16.msra.mxu0 %v329
      %341 = vmatpush.bf16.msra.mxu0 %v328
      %342 = vmatpush.bf16.msra.mxu0 %v327
      %343 = vmatpush.bf16.msra.mxu0 %v326
      %344 = vmatpush.bf16.msra.mxu0 %v325
      %345 = vmatpush.bf16.msra.mxu0 %v324
      %346 = vmatpush.bf16.msra.mxu0 %v323
      %347 = vmatmul.bf16.gmra.mxu0 %v259
      %v348 = vpop.f32.mrf.mxu0
      %v349 = vadd.f32 0.0, %v348
      %v350 = vpop.f32.mrf.mxu0
      %v351 = vadd.f32 0.0, %v350
      %352 = vmatmul.bf16.gmra.mxu0 %v260
      %v353 = vpop.f32.mrf.mxu0
      %v354 = vadd.f32 0.0, %v353
      %v355 = vpop.f32.mrf.mxu0
      %v356 = vadd.f32 0.0, %v355
      %357 = vmatmul.bf16.gmra.mxu0 %v261
      %v358 = vpop.f32.mrf.mxu0
      %v359 = vadd.f32 0.0, %v358
      %v360 = vpop.f32.mrf.mxu0
      %v361 = vadd.f32 0.0, %v360
      %362 = vmatmul.bf16.gmra.mxu0 %v262
      %v363 = vpop.f32.mrf.mxu0
      %v364 = vadd.f32 0.0, %v363
      %v365 = vpop.f32.mrf.mxu0
      %v366 = vadd.f32 0.0, %v365
      %367 = vmatmul.bf16.gmra.mxu0 %v263
      %v368 = vpop.f32.mrf.mxu0
      %v369 = vadd.f32 0.0, %v368
      %v370 = vpop.f32.mrf.mxu0
      %v371 = vadd.f32 0.0, %v370
      %372 = vmatmul.bf16.gmra.mxu0 %v264
      %v373 = vpop.f32.mrf.mxu0
      %v374 = vadd.f32 0.0, %v373
      %v375 = vpop.f32.mrf.mxu0
      %v376 = vadd.f32 0.0, %v375
      %377 = vmatmul.bf16.gmra.mxu0 %v265
      %v378 = vpop.f32.mrf.mxu0
      %v379 = vadd.f32 0.0, %v378
      %v380 = vpop.f32.mrf.mxu0
      %v381 = vadd.f32 0.0, %v380
      %382 = vmatmul.bf16.gmra.mxu0 %v266
      %v383 = vpop.f32.mrf.mxu0
      %v384 = vadd.f32 0.0, %v383
      %v385 = vpop.f32.mrf.mxu0
      %v386 = vadd.f32 0.0, %v385
      %387 = vmatmul.bf16.gmra.mxu0 %v267
      %v388 = vpop.f32.mrf.mxu0
      %v389 = vadd.f32 0.0, %v388
      %v390 = vpop.f32.mrf.mxu0
      %v391 = vadd.f32 0.0, %v390
      %392 = vmatmul.bf16.gmra.mxu0 %v268
      %v393 = vpop.f32.mrf.mxu0
      %v394 = vadd.f32 0.0, %v393
      %v395 = vpop.f32.mrf.mxu0
      %v396 = vadd.f32 0.0, %v395
      %397 = vmatmul.bf16.gmra.mxu0 %v269
      %v398 = vpop.f32.mrf.mxu0
      %v399 = vadd.f32 0.0, %v398
      %v400 = vpop.f32.mrf.mxu0
      %v401 = vadd.f32 0.0, %v400
      %402 = vmatmul.bf16.gmra.mxu0 %v270
      %v403 = vpop.f32.mrf.mxu0
      %v404 = vadd.f32 0.0, %v403
      %v405 = vpop.f32.mrf.mxu0
      %v406 = vadd.f32 0.0, %v405
      %407 = vmatmul.bf16.gmra.mxu0 %v271
      %v408 = vpop.f32.mrf.mxu0
      %v409 = vadd.f32 0.0, %v408
      %v410 = vpop.f32.mrf.mxu0
      %v411 = vadd.f32 0.0, %v410
      %412 = vmatmul.bf16.gmra.mxu0 %v272
      %v413 = vpop.f32.mrf.mxu0
      %v414 = vadd.f32 0.0, %v413
      %v415 = vpop.f32.mrf.mxu0
      %v416 = vadd.f32 0.0, %v415
      %417 = vmatmul.bf16.gmra.mxu0 %v273
      %v418 = vpop.f32.mrf.mxu0
      %v419 = vadd.f32 0.0, %v418
      %v420 = vpop.f32.mrf.mxu0
      %v421 = vadd.f32 0.0, %v420
      %422 = vmatmul.bf16.gmra.mxu0 %v274
      %v423 = vpop.f32.mrf.mxu0
      %v424 = vadd.f32 0.0, %v423
      %v425 = vpop.f32.mrf.mxu0
      %v426 = vadd.f32 0.0, %v425
      %427 = vdwg.mxu0
      %v428 = vtanh.pop %v349
      %v429 = vtanh.pop %v351
      %v430 = vtanh.pop %v354
      %v431 = vtanh.pop %v356
      %v432 = vtanh.pop %v359
      %v433 = vtanh.pop %v361
      %v434 = vtanh.pop %v364
      %v435 = vtanh.pop %v366
      %v436 = vtanh.pop %v369
      %v437 = vtanh.pop %v371
      %v438 = vtanh.pop %v374
      %v439 = vtanh.pop %v376
      %v440 = vtanh.pop %v379
      %v441 = vtanh.pop %v381
      %v442 = vtanh.pop %v384
      %v443 = vtanh.pop %v386
      %v444 = vtanh.pop %v389
      %v445 = vtanh.pop %v391
      %v446 = vtanh.pop %v394
      %v447 = vtanh.pop %v396
      %v448 = vtanh.pop %v399
      %v449 = vtanh.pop %v401
      %v450 = vtanh.pop %v404
      %v451 = vtanh.pop %v406
      %v452 = vtanh.pop %v409
      %v453 = vtanh.pop %v411
      %v454 = vtanh.pop %v414
      %v455 = vtanh.pop %v416
      %v456 = vtanh.pop %v419
      %v457 = vtanh.pop %v421
      %v458 = vtanh.pop %v424
      %v459 = vtanh.pop %v426
      %460 = vst [vmem:[%s145] sm:$0xff] %v428
      %461 = vst [vmem:[%s145 + $0x8] sm:$0xff] %v429
      %462 = vst [vmem:[%s145 + $0x10] sm:$0xff] %v430
      %463 = vst [vmem:[%s145 + $0x18] sm:$0xff] %v431
      %464 = vst [vmem:[%s145 + $0x20] sm:$0xff] %v432
      %465 = vst [vmem:[%s145 + $0x28] sm:$0xff] %v433
      %466 = vst [vmem:[%s145 + $0x30] sm:$0xff] %v434
      %467 = vst [vmem:[%s145 + $0x38] sm:$0xff] %v435
      %468 = vst [vmem:[%s145 + $0x40] sm:$0xff] %v436
      %469 = vst [vmem:[%s145 + $0x48] sm:$0xff] %v437
      %470 = vst [vmem:[%s145 + $0x50] sm:$0xff] %v438
      %471 = vst [vmem:[%s145 + $0x58] sm:$0xff] %v439
      %472 = vst [vmem:[%s145 + $0x60] sm:$0xff] %v440
      %473 = vst [vmem:[%s145 + $0x68] sm:$0xff] %v441
      %474 = vst [vmem:[%s145 + $0x70] sm:$0xff] %v442
      %475 = vst [vmem:[%s145 + $0x78] sm:$0xff] %v443
      %476 = vst [vmem:[%s145 + $0x80] sm:$0xff] %v444
      %477 = vst [vmem:[%s145 + $0x88] sm:$0xff] %v445
      %478 = vst [vmem:[%s145 + $0x90] sm:$0xff] %v446
      %479 = vst [vmem:[%s145 + $0x98] sm:$0xff] %v447
      %480 = vst [vmem:[%s145 + $0xa0] sm:$0xff] %v448
      %481 = vst [vmem:[%s145 + $0xa8] sm:$0xff] %v449
      %482 = vst [vmem:[%s145 + $0xb0] sm:$0xff] %v450
      %483 = vst [vmem:[%s145 + $0xb8] sm:$0xff] %v451
      %484 = vst [vmem:[%s145 + $0xc0] sm:$0xff] %v452
      %485 = vst [vmem:[%s145 + $0xc8] sm:$0xff] %v453
      %486 = vst [vmem:[%s145 + $0xd0] sm:$0xff] %v454
      %487 = vst [vmem:[%s145 + $0xd8] sm:$0xff] %v455
      %488 = vst [vmem:[%s145 + $0xe0] sm:$0xff] %v456
      %489 = vst [vmem:[%s145 + $0xe8] sm:$0xff] %v457
      %490 = vst [vmem:[%s145 + $0xf0] sm:$0xff] %v458
      %491 = vst [vmem:[%s145 + $0xf8] sm:$0xff] %v459
      %s492 = smul.u32 32, %s13
      %p493 = scmp.lt.s32.totalorder %s492, 255
      %s494 = scalar_select %p493, %s492, 255
      %s495 = smul.addr %s494, 8
      %s496 = scalar_lea.vmem %s2, %s495
      // Predicated region
      $region29: #{generator_forward.9} parent=27 // pred_check
        %p497 = pneg %p78
      $region30: #{generator_forward.9} parent=27 // pred_check_branch
        %499 = sbr.rel (%p497) target = $region32
      $region31: #{generator_forward.9} parent=27 // pred_region
        %s500 = smul.u32 32, %s13
      $region32: #{generator_forward.9} parent=27 // pred_fallthru
        _
    $region28: #{generator_forward.9} parent=5 // pred_fallthru
      _
    %p501 = scmp.le.s32.totalorder 2, %s8
    // Predicated region
    $region33: #{generator_forward.9} parent=5 // pred_check
      %p502 = pneg %p501
    $region34: #{generator_forward.9} parent=5 // pred_check_branch
      %504 = sbr.rel (%p502) target = $region36
    $region35: #{generator_forward.9} parent=5 // pred_region
      %s505 = ssub.s32 %s8, 2
      // Predicated region
      $region37: #{generator_forward.9} parent=35 // pred_check
        %p506 = pneg %p84
      $region38: #{generator_forward.9} parent=35 // pred_check_branch
        %508 = sbr.rel (%p506) target = $region40
      $region39: #{generator_forward.9} parent=35 // pred_region
        %s509 = smul.u32 32, %s14
        %p510 = scmp.lt.s32.totalorder %s509, 255
        %s511 = scalar_select %p510, %s509, 255
        %s512 = smul.addr %s511, 8
        %s513 = scalar_lea.vmem %s2, %s512
      $region40: #{generator_forward.9} parent=35 // pred_fallthru
        _
    $region36: #{generator_forward.9} parent=5 // pred_fallthru
      _
  $region6: #{generator_forward.9} parent=0 // loop_footer
    %s12 = sadd.s32 1, %s8
  $region7: #{generator_forward.9} parent=0 // loop_footer_branch
    %7 = sbr.rel target = $region3
  $region8: #{generator_forward.9} parent=0 // loop_exit
    _

</llo_original>
